<compile_context>
chip_gen: v6e
topology: v6e:2x2x1
jax: 0.10.0
libtpu: 0.0.40
codegen_flags: <defaults>
</compile_context>

<pallas_src>
import jax
import jax.numpy as jnp
from jax.experimental import pallas as pl
from jax.experimental.pallas import tpu as pltpu

EPS = 1e-5
VMEM_LIMIT_BYTES = 48 * 1024 * 1024  # fits v7x (64 MiB) and raises v5e's 16 MiB default


def _round_up(x, m):
    return (x + m - 1) // m * m


# ----------------------------- Pallas kernels ------------------------------ #

def _make_stride1_kernel(wp, lout, mid, has_proj, cdt, out_dtype):
    """Fused bottleneck, conv2 stride 1.  All refs are 2-D (rows, channels)."""
    offs = [dy * wp + dx for dy in range(3) for dx in range(3)]

    def kernel(*refs):
        if has_proj:
            (x_ref, m_ref, w1_ref, b1_ref, w2_ref, b2_ref, w3_ref, b3_ref,
             ws_ref, bs_ref, o_ref, h1_ref) = refs
        else:
            (x_ref, m_ref, w1_ref, b1_ref, w2_ref, b2_ref, w3_ref, b3_ref,
             o_ref, h1_ref) = refs

        # conv1 (1x1) + folded BN bias + relu; mask zeroes the spatial pad ring.
        a1 = jnp.dot(x_ref[...], w1_ref[...], preferred_element_type=jnp.float32)
        h1 = jnp.maximum(a1 + b1_ref[...], 0.0) * m_ref[...]
        h1_ref[...] = h1.astype(cdt)                     # h1 stays in VMEM

        # conv2 (3x3, pad 1) as 9 shifted row-slices of h1, accumulated in f32.
        acc = jnp.zeros((lout, mid), jnp.float32)
        for t, off in enumerate(offs):
            acc = acc + jnp.dot(h1_ref[off:off + lout, :],
                                w2_ref[t * mid:(t + 1) * mid, :],
                                preferred_element_type=jnp.float32)
        h2 = jnp.maximum(acc + b2_ref[...], 0.0).astype(cdt)

        # conv3 (1x1) + bn3 + relu
        y = jnp.maximum(
            jnp.dot(h2, w3_ref[...], preferred_element_type=jnp.float32) + b3_ref[...],
            0.0)

        # shortcut (identity or 1x1 projection) for the same rows
        sc_rows = x_ref[wp + 1:wp + 1 + lout, :]
        if has_proj:
            sc = jnp.dot(sc_rows, ws_ref[...],
                         preferred_element_type=jnp.float32) + bs_ref[...]
        else:
            sc = sc_rows.astype(jnp.float32)

        o_ref[...] = jnp.maximum(y + sc, 0.0).astype(out_dtype)

    return kernel


def _make_stride2_kernel(wp2, phi, lout, mid, cdt, out_dtype):
    """Fused bottleneck, conv2 stride 2 (downsample) via even/odd phase inputs."""
    # tap t = 3*dy + dx  ->  (phase index, phase row offset, phase col offset)
    # phases: 0=EE, 1=EO, 2=OE, 3=OO (even/odd rows x even/odd cols of padded x)
    taps = [(0, 0, 0), (1, 0, 0), (0, 0, 1),
            (2, 0, 0), (3, 0, 0), (2, 0, 1),
            (0, 1, 0), (1, 1, 0), (0, 1, 1)]
    offs = [p * phi + a * wp2 + b for (p, a, b) in taps]

    def kernel(xee_ref, xeo_ref, xoe_ref, xoo_ref, m_ref,
               w1_ref, b1_ref, w2_ref, b2_ref, w3_ref, b3_ref,
               ws_ref, bs_ref, o_ref, h1_ref):
        phase_refs = (xee_ref, xeo_ref, xoe_ref, xoo_ref)
        w1 = w1_ref[...]
        b1 = b1_ref[...]

        # conv1 (1x1) + bn1 + relu per phase, masked at padded positions.
        for p in range(4):
            a1 = jnp.dot(phase_refs[p][...], w1, preferred_element_type=jnp.float32)
            h1 = jnp.maximum(a1 + b1, 0.0) * m_ref[p * phi:(p + 1) * phi, :]
            h1_ref[p * phi:(p + 1) * phi, :] = h1.astype(cdt)

        # conv2 (3x3, stride 2, pad 1): each tap is a contiguous slice of one phase.
        acc = jnp.zeros((lout, mid), jnp.float32)
        for t, off in enumerate(offs):
            acc = acc + jnp.dot(h1_ref[off:off + lout, :],
                                w2_ref[t * mid:(t + 1) * mid, :],
                                preferred_element_type=jnp.float32)
        h2 = jnp.maximum(acc + b2_ref[...], 0.0).astype(cdt)

        # conv3 (1x1) + bn3 + relu
        y = jnp.maximum(
            jnp.dot(h2, w3_ref[...], preferred_element_type=jnp.float32) + b3_ref[...],
            0.0)

        # projection shortcut: x[::2, ::2] == OO phase of padded x.
        sc = jnp.dot(xoo_ref[0:lout, :], ws_ref[...],
                     preferred_element_type=jnp.float32) + bs_ref[...]

        o_ref[...] = jnp.maximum(y + sc, 0.0).astype(out_dtype)

    return kernel


# ------------------------------ JAX glue ----------------------------------- #

def fold_bn(conv_bias, bn_params):
    gamma, beta, mean, var = bn_params
    scale = gamma / jnp.sqrt(var + EPS)
    bias = scale * (conv_bias - mean) + beta
    return scale, bias


def _fold_w_1x1(w, scale, cdt):
    # torch OIHW (cout, cin, 1, 1) -> (cin, cout), BN scale folded into columns.
    return (jnp.transpose(w[:, :, 0, 0], (1, 0)) * scale[None, :]).astype(cdt)


def _fold_w_3x3(w, scale, cdt):
    # torch (mid, mid, 3, 3) -> (9*mid, mid), taps in row-major (dy, dx) order.
    mats = []
    for dy in range(3):
        for dx in range(3):
            mats.append(jnp.transpose(w[:, :, dy, dx], (1, 0)) * scale[None, :])
    return jnp.concatenate(mats, axis=0).astype(cdt)


def _prep_stride1(x_nhwc, cdt):
    n, h, w, c = x_nhwc.shape
    hp, wp = h + 2, w + 2
    lout = _round_up(h * wp, 8)
    lx = _round_up(max(hp * wp, lout + 2 * wp + 2), 8)
    xp = jnp.pad(x_nhwc, ((0, 0), (1, 1), (1, 1), (0, 0))).reshape(n, hp * wp, c)
    xp = jnp.pad(xp, ((0, 0), (0, lx - hp * wp), (0, 0))).astype(cdt)
    xp = xp.reshape(n * lx, c)
    r = jnp.arange(hp)[:, None]
    col = jnp.arange(wp)[None, :]
    m = ((r >= 1) & (r <= h) & (col >= 1) & (col <= w)).astype(jnp.float32)
    mask = jnp.pad(m.reshape(hp * wp, 1), ((0, lx - hp * wp), (0, 0)))
    return xp, mask, lx, lout, wp


def _prep_stride2(x_nhwc, cdt):
    n, h, w, c = x_nhwc.shape
    assert h % 2 == 0 and w % 2 == 0, "downsample path expects even spatial dims"
    ho, wo = h // 2, w // 2
    hp2, wp2 = ho + 1, wo + 1
    lphi = hp2 * wp2
    lout = _round_up(ho * wp2, 8)
    phi = _round_up(max(lphi, lout + wp2 + 1), 8)

    xp = jnp.pad(x_nhwc, ((0, 0), (1, 1), (1, 1), (0, 0))).astype(cdt)
    phases = []
    for (r0, c0) in ((0, 0), (0, 1), (1, 0), (1, 1)):       # EE, EO, OE, OO
        ph = xp[:, r0::2, c0::2, :].reshape(n, lphi, c)
        ph = jnp.pad(ph, ((0, 0), (0, phi - lphi), (0, 0))).reshape(n * phi, c)
        phases.append(ph)

    def pmask(bad_r, bad_c):
        r = jnp.arange(hp2)[:, None]
        cc = jnp.arange(wp2)[None, :]
        m = ((r != bad_r) & (cc != bad_c)).astype(jnp.float32).reshape(lphi, 1)
        return jnp.pad(m, ((0, phi - lphi), (0, 0)))

    masks = jnp.concatenate(
        [pmask(0, 0), pmask(0, wp2 - 1), pmask(hp2 - 1, 0), pmask(hp2 - 1, wp2 - 1)],
        axis=0)
    return phases, masks, phi, lout, wp2


def res_bottleneck_block(x_nchw, p, in_channels, out_channels, downsample,
                         compute_dtype=jnp.bfloat16):
    mid = out_channels // 4
    x = jnp.transpose(x_nchw, (0, 2, 3, 1)).astype(jnp.float32)     # NCHW -> NHWC
    n, h, w, cin = x.shape
    has_proj = downsample or (in_channels != out_channels)

    # fold conv bias + BN (inference) -> per-channel bias; BN scale -> weight cols.
    sc1, bi1 = fold_bn(p['b1'], p['bn1'])
    sc2, bi2 = fold_bn(p['b2'], p['bn2'])
    sc3, bi3 = fold_bn(p['b3'], p['bn3'])
    w1 = _fold_w_1x1(p['w1'], sc1, compute_dtype)
    w2 = _fold_w_3x3(p['w2'], sc2, compute_dtype)
    w3 = _fold_w_1x1(p['w3'], sc3, compute_dtype)
    b1 = bi1.reshape(1, mid).astype(jnp.float32)
    b2 = bi2.reshape(1, mid).astype(jnp.float32)
    b3 = bi3.reshape(1, out_channels).astype(jnp.float32)
    if has_proj:
        scs, bis = fold_bn(p['bs'], p['bns'])
        ws = _fold_w_1x1(p['ws'], scs, compute_dtype)
        bs = bis.reshape(1, out_channels).astype(jnp.float32)

    cp = pltpu.CompilerParams(dimension_semantics=("parallel",),
                              vmem_limit_bytes=VMEM_LIMIT_BYTES)

    def _full_spec(a):
        return pl.BlockSpec(a.shape, lambda i: (0, 0))

    if downsample:
        phases, masks, phi, lout, wp2 = _prep_stride2(x, compute_dtype)
        kern = _make_stride2_kernel(wp2, phi, lout, mid, compute_dtype, jnp.float32)
        operands = [*phases, masks, w1, b1, w2, b2, w3, b3, ws, bs]
        flops = int(n * (2 * 4 * phi * cin * mid + 9 * 2 * lout * mid * mid
                         + 2 * lout * mid * out_channels
                         + 2 * lout * cin * out_channels))
        bytes_accessed = int(sum(int(a.size) * a.dtype.itemsize for a in operands)
                             + n * lout * out_channels * 4)
        in_specs = ([pl.BlockSpec((phi, cin), lambda i: (i, 0)) for _ in range(4)]
                    + [_full_spec(a) for a in operands[4:]])
        out = pl.pallas_call(
            kern,
            out_shape=jax.ShapeDtypeStruct((n * lout, out_channels), jnp.float32),
            grid=(n,),
            in_specs=in_specs,
            out_specs=pl.BlockSpec((lout, out_channels), lambda i: (i, 0)),
            scratch_shapes=[pltpu.VMEM((4 * phi, mid), compute_dtype)],
            compiler_params=cp,
            cost_estimate=pl.CostEstimate(flops=flops, transcendentals=0,
                                          bytes_accessed=bytes_accessed),
        )(*operands)
        ho, wo = h // 2, w // 2
        out = out.reshape(n, lout, out_channels)[:, :ho * wp2, :]
        out = out.reshape(n, ho, wp2, out_channels)[:, :, :wo, :]
    else:
        xflat, mask, lx, lout, wp = _prep_stride1(x, compute_dtype)
        kern = _make_stride1_kernel(wp, lout, mid, has_proj, compute_dtype,
                                    jnp.float32)
        operands = [xflat, mask, w1, b1, w2, b2, w3, b3]
        if has_proj:
            operands += [ws, bs]
        flops = int(n * (2 * lx * cin * mid + 9 * 2 * lout * mid * mid
                         + 2 * lout * mid * out_channels
                         + (2 * lout * cin * out_channels if has_proj else 0)))
        bytes_accessed = int(sum(int(a.size) * a.dtype.itemsize for a in operands)
                             + n * lout * out_channels * 4)
        in_specs = ([pl.BlockSpec((lx, cin), lambda i: (i, 0))]
                    + [_full_spec(a) for a in operands[1:]])
        out = pl.pallas_call(
            kern,
            out_shape=jax.ShapeDtypeStruct((n * lout, out_channels), jnp.float32),
            grid=(n,),
            in_specs=in_specs,
            out_specs=pl.BlockSpec((lout, out_channels), lambda i: (i, 0)),
            scratch_shapes=[pltpu.VMEM((lx, mid), compute_dtype)],
            compiler_params=cp,
            cost_estimate=pl.CostEstimate(flops=flops, transcendentals=0,
                                          bytes_accessed=bytes_accessed),
        )(*operands)
        out = out.reshape(n, lout, out_channels)[:, :h * wp, :]
        out = out.reshape(n, h, wp, out_channels)[:, :, :w, :]

    return jnp.transpose(out, (0, 3, 1, 2))                         # back to NCHW


# ------------------------- pure-JAX reference check ------------------------ #

def reference_block(x, p, in_channels, out_channels, downsample):
    s = 2 if downsample else 1

    def conv(inp, w, b, stride, pad):
        y = jax.lax.conv_general_dilated(
            inp, w, window_strides=(stride, stride),
            padding=[(pad, pad), (pad, pad)],
            dimension_numbers=('NCHW', 'OIHW', 'NCHW'))
        return y + b.reshape(1, -1, 1, 1)

    def bn(inp, bn_p):
        g, be, m, v = bn_p
        r = lambda a: a.reshape(1, -1, 1, 1)
        return r(g) * (inp - r(m)) / jnp.sqrt(r(v) + EPS) + r(be)

    relu = lambda a: jnp.maximum(a, 0.0)
    h = relu(bn(conv(x, p['w1'], p['b1'], 1, 0), p['bn1']))
    h = relu(bn(conv(h, p['w2'], p['b2'], s, 1), p['bn2']))
    h = relu(bn(conv(h, p['w3'], p['b3'], 1, 0), p['bn3']))
    if downsample or in_channels != out_channels:
        sc = bn(conv(x, p['ws'], p['bs'], s, 0), p['bns'])
    else:
        sc = x
    return relu(h + sc)


# ------------------------------ parameters --------------------------------- #

def make_params(key, cin, cout, downsample):
    mid = cout // 4
    ks = iter(jax.random.split(key, 24))

    def w(shape, scale=0.2):
        return jax.random.normal(next(ks), shape, jnp.float32) * scale

    def bn(c):
        gamma = 1.0 + 0.1 * jax.random.normal(next(ks), (c,), jnp.float32)
        beta = 0.1 * jax.random.normal(next(ks), (c,), jnp.float32)
        mean = 0.1 * jax.random.normal(next(ks), (c,), jnp.float32)
        var = jnp.abs(jax.random.normal(next(ks), (c,), jnp.float32)) + 0.5
        return (gamma, beta, mean, var)

    p = {
        'w1': w((mid, cin, 1, 1)), 'b1': w((mid,)),
        'w2': w((mid, mid, 3, 3)), 'b2': w((mid,)),
        'w3': w((cout, mid, 1, 1)), 'b3': w((cout,)),
        'bn1': bn(mid), 'bn2': bn(mid), 'bn3': bn(cout),
    }
    if downsample or cin != cout:
        p['ws'] = w((cout, cin, 1, 1))
        p['bs'] = w((cout,))
        p['bns'] = bn(cout)
    return p


if __name__ == "__main__":
    key = jax.random.PRNGKey(0)
    kx, kpa, kpb = jax.random.split(key, 3)

    # Block A: in=4 -> out=8, downsample=True (projection shortcut, stride 2).
    xA = jax.random.normal(kx, (2, 4, 16, 16), jnp.float32)
    pA = make_params(kpa, 4, 8, True)
    refA = reference_block(xA, pA, 4, 8, True)

    outA = jax.block_until_ready(
        res_bottleneck_block(xA, pA, 4, 8, True, compute_dtype=jnp.float32))
    assert outA.shape == (2, 8, 8, 8), outA.shape
    assert jnp.allclose(outA, refA, atol=1e-4, rtol=1e-4), "block A (f32) mismatch"

    # bf16 fast path (halved HBM traffic, bf16-fed MXU) -- looser tolerance.
    outA16 = jax.block_until_ready(
        res_bottleneck_block(xA, pA, 4, 8, True, compute_dtype=jnp.bfloat16))
    assert outA16.shape == (2, 8, 8, 8), outA16.shape
    assert jnp.allclose(outA16, refA, atol=0.25, rtol=0.1), "block A (bf16) mismatch"

    # Block B: in=8 -> out=8, downsample=False (identity shortcut, stride 1).
    xB = jax.random.normal(jax.random.fold_in(kx, 1), (2, 8, 16, 16), jnp.float32)
    pB = make_params(kpb, 8, 8, False)
    refB = reference_block(xB, pB, 8, 8, False)
    outB = jax.block_until_ready(
        res_bottleneck_block(xB, pB, 8, 8, False, compute_dtype=jnp.float32))
    assert outB.shape == (2, 8, 16, 16), outB.shape
    assert jnp.allclose(outB, refB, atol=1e-4, rtol=1e-4), "block B (f32) mismatch"

    print("KERNEL_OK")
</pallas_src>

<mosaic_0001>
module attributes {stable_mosaic.version = 11 : i64} {
  func.func @kernel(%arg0: i32, %arg1: memref<88x4xf32, #tpu.memory_space<vmem>>, %arg2: memref<88x4xf32, #tpu.memory_space<vmem>>, %arg3: memref<88x4xf32, #tpu.memory_space<vmem>>, %arg4: memref<88x4xf32, #tpu.memory_space<vmem>>, %arg5: memref<352x1xf32, #tpu.memory_space<vmem>>, %arg6: memref<4x2xf32, #tpu.memory_space<vmem>>, %arg7: memref<1x2xf32, #tpu.memory_space<vmem>>, %arg8: memref<18x2xf32, #tpu.memory_space<vmem>>, %arg9: memref<1x2xf32, #tpu.memory_space<vmem>>, %arg10: memref<2x8xf32, #tpu.memory_space<vmem>>, %arg11: memref<1x8xf32, #tpu.memory_space<vmem>>, %arg12: memref<4x8xf32, #tpu.memory_space<vmem>>, %arg13: memref<1x8xf32, #tpu.memory_space<vmem>>, %arg14: memref<72x8xf32, #tpu.memory_space<vmem>>, %arg15: memref<352x2xf32, #tpu.memory_space<vmem>>) attributes {dimension_semantics = [#tpu.dimension_semantics<parallel>], iteration_bounds = array<i64: 2>, scalar_prefetch = 0 : i64, scratch_operands = 1 : i64, tpu.core_type = #tpu.core_type<tc>, window_params = [{transform_indices = @transform_0, window_bounds = array<i64: 88, 4>}, {transform_indices = @transform_1, window_bounds = array<i64: 88, 4>}, {transform_indices = @transform_2, window_bounds = array<i64: 88, 4>}, {transform_indices = @transform_3, window_bounds = array<i64: 88, 4>}, {pipeline_mode = #tpu.pipeline_mode<synchronous>, transform_indices = @transform_4, window_bounds = array<i64: 352, 1>}, {pipeline_mode = #tpu.pipeline_mode<synchronous>, transform_indices = @transform_5, window_bounds = array<i64: 4, 2>}, {pipeline_mode = #tpu.pipeline_mode<synchronous>, transform_indices = @transform_6, window_bounds = array<i64: 1, 2>}, {pipeline_mode = #tpu.pipeline_mode<synchronous>, transform_indices = @transform_7, window_bounds = array<i64: 18, 2>}, {pipeline_mode = #tpu.pipeline_mode<synchronous>, transform_indices = @transform_8, window_bounds = array<i64: 1, 2>}, {pipeline_mode = #tpu.pipeline_mode<synchronous>, transform_indices = @transform_9, window_bounds = array<i64: 2, 8>}, {pipeline_mode = #tpu.pipeline_mode<synchronous>, transform_indices = @transform_10, window_bounds = array<i64: 1, 8>}, {pipeline_mode = #tpu.pipeline_mode<synchronous>, transform_indices = @transform_11, window_bounds = array<i64: 4, 8>}, {pipeline_mode = #tpu.pipeline_mode<synchronous>, transform_indices = @transform_12, window_bounds = array<i64: 1, 8>}, {transform_indices = @transform_13, window_bounds = array<i64: 72, 8>}]} {
    %c0 = arith.constant 0 : index
    %c0_0 = arith.constant 0 : index
    %0 = vector.load %arg6[%c0, %c0_0] : memref<4x2xf32, #tpu.memory_space<vmem>>, vector<4x2xf32>
    %c0_1 = arith.constant 0 : index
    %c0_2 = arith.constant 0 : index
    %1 = vector.load %arg7[%c0_1, %c0_2] : memref<1x2xf32, #tpu.memory_space<vmem>>, vector<1x2xf32>
    %c0_3 = arith.constant 0 : index
    %c0_4 = arith.constant 0 : index
    %2 = vector.load %arg1[%c0_3, %c0_4] : memref<88x4xf32, #tpu.memory_space<vmem>>, vector<88x4xf32>
    %cst = arith.constant dense<0.000000e+00> : vector<88x2xf32>
    %3 = tpu.matmul %2, %0, %cst {dimension_numbers = #tpu.dot_dimension_numbers<[1], [0], [0], [1], [0, 0, 1, 1], [], []>} : vector<88x4xf32>, vector<4x2xf32>, vector<88x2xf32> -> vector<88x2xf32>
    %4 = vector.broadcast %1 : vector<1x2xf32> to vector<88x2xf32>
    %5 = arith.addf %3, %4 : vector<88x2xf32>
    %cst_5 = arith.constant 0.000000e+00 : f32
    %6 = vector.broadcast %cst_5 : f32 to vector<88x2xf32>
    %7 = arith.maximumf %5, %6 : vector<88x2xf32>
    %c0_6 = arith.constant 0 : index
    %c0_7 = arith.constant 0 : index
    %8 = vector.load %arg5[%c0_6, %c0_7] : memref<352x1xf32, #tpu.memory_space<vmem>>, vector<88x1xf32>
    %9 = vector.broadcast %8 : vector<88x1xf32> to vector<88x2xf32>
    %10 = arith.mulf %7, %9 : vector<88x2xf32>
    %c0_8 = arith.constant 0 : index
    %c0_9 = arith.constant 0 : index
    %11 = vector.load %arg15[%c0_8, %c0_9] : memref<352x2xf32, #tpu.memory_space<vmem>>, vector<88x2xf32>
    tpu.vector_store %arg15[%c0_8, %c0_9], %10 {strides = array<i32>} : memref<352x2xf32, #tpu.memory_space<vmem>>, vector<88x2xf32>,
    %c0_10 = arith.constant 0 : index
    %c0_11 = arith.constant 0 : index
    %12 = vector.load %arg2[%c0_10, %c0_11] : memref<88x4xf32, #tpu.memory_space<vmem>>, vector<88x4xf32>
    %cst_12 = arith.constant dense<0.000000e+00> : vector<88x2xf32>
    %13 = tpu.matmul %12, %0, %cst_12 {dimension_numbers = #tpu.dot_dimension_numbers<[1], [0], [0], [1], [0, 0, 1, 1], [], []>} : vector<88x4xf32>, vector<4x2xf32>, vector<88x2xf32> -> vector<88x2xf32>
    %14 = vector.broadcast %1 : vector<1x2xf32> to vector<88x2xf32>
    %15 = arith.addf %13, %14 : vector<88x2xf32>
    %cst_13 = arith.constant 0.000000e+00 : f32
    %16 = vector.broadcast %cst_13 : f32 to vector<88x2xf32>
    %17 = arith.maximumf %15, %16 : vector<88x2xf32>
    %c88 = arith.constant 88 : index
    %c0_14 = arith.constant 0 : index
    %18 = vector.load %arg5[%c88, %c0_14] : memref<352x1xf32, #tpu.memory_space<vmem>>, vector<88x1xf32>
    %19 = vector.broadcast %18 : vector<88x1xf32> to vector<88x2xf32>
    %20 = arith.mulf %17, %19 : vector<88x2xf32>
    %c88_15 = arith.constant 88 : index
    %c0_16 = arith.constant 0 : index
    %21 = vector.load %arg15[%c88_15, %c0_16] : memref<352x2xf32, #tpu.memory_space<vmem>>, vector<88x2xf32>
    tpu.vector_store %arg15[%c88_15, %c0_16], %20 {strides = array<i32>} : memref<352x2xf32, #tpu.memory_space<vmem>>, vector<88x2xf32>,
    %c0_17 = arith.constant 0 : index
    %c0_18 = arith.constant 0 : index
    %22 = vector.load %arg3[%c0_17, %c0_18] : memref<88x4xf32, #tpu.memory_space<vmem>>, vector<88x4xf32>
    %cst_19 = arith.constant dense<0.000000e+00> : vector<88x2xf32>
    %23 = tpu.matmul %22, %0, %cst_19 {dimension_numbers = #tpu.dot_dimension_numbers<[1], [0], [0], [1], [0, 0, 1, 1], [], []>} : vector<88x4xf32>, vector<4x2xf32>, vector<88x2xf32> -> vector<88x2xf32>
    %24 = vector.broadcast %1 : vector<1x2xf32> to vector<88x2xf32>
    %25 = arith.addf %23, %24 : vector<88x2xf32>
    %cst_20 = arith.constant 0.000000e+00 : f32
    %26 = vector.broadcast %cst_20 : f32 to vector<88x2xf32>
    %27 = arith.maximumf %25, %26 : vector<88x2xf32>
    %c176 = arith.constant 176 : index
    %c0_21 = arith.constant 0 : index
    %28 = vector.load %arg5[%c176, %c0_21] : memref<352x1xf32, #tpu.memory_space<vmem>>, vector<88x1xf32>
    %29 = vector.broadcast %28 : vector<88x1xf32> to vector<88x2xf32>
    %30 = arith.mulf %27, %29 : vector<88x2xf32>
    %c176_22 = arith.constant 176 : index
    %c0_23 = arith.constant 0 : index
    %31 = vector.load %arg15[%c176_22, %c0_23] : memref<352x2xf32, #tpu.memory_space<vmem>>, vector<88x2xf32>
    tpu.vector_store %arg15[%c176_22, %c0_23], %30 {strides = array<i32>} : memref<352x2xf32, #tpu.memory_space<vmem>>, vector<88x2xf32>,
    %c0_24 = arith.constant 0 : index
    %c0_25 = arith.constant 0 : index
    %32 = vector.load %arg4[%c0_24, %c0_25] : memref<88x4xf32, #tpu.memory_space<vmem>>, vector<88x4xf32>
    %cst_26 = arith.constant dense<0.000000e+00> : vector<88x2xf32>
    %33 = tpu.matmul %32, %0, %cst_26 {dimension_numbers = #tpu.dot_dimension_numbers<[1], [0], [0], [1], [0, 0, 1, 1], [], []>} : vector<88x4xf32>, vector<4x2xf32>, vector<88x2xf32> -> vector<88x2xf32>
    %34 = vector.broadcast %1 : vector<1x2xf32> to vector<88x2xf32>
    %35 = arith.addf %33, %34 : vector<88x2xf32>
    %cst_27 = arith.constant 0.000000e+00 : f32
    %36 = vector.broadcast %cst_27 : f32 to vector<88x2xf32>
    %37 = arith.maximumf %35, %36 : vector<88x2xf32>
    %c264 = arith.constant 264 : index
    %c0_28 = arith.constant 0 : index
    %38 = vector.load %arg5[%c264, %c0_28] : memref<352x1xf32, #tpu.memory_space<vmem>>, vector<88x1xf32>
    %39 = vector.broadcast %38 : vector<88x1xf32> to vector<88x2xf32>
    %40 = arith.mulf %37, %39 : vector<88x2xf32>
    %c264_29 = arith.constant 264 : index
    %c0_30 = arith.constant 0 : index
    %41 = vector.load %arg15[%c264_29, %c0_30] : memref<352x2xf32, #tpu.memory_space<vmem>>, vector<88x2xf32>
    tpu.vector_store %arg15[%c264_29, %c0_30], %40 {strides = array<i32>} : memref<352x2xf32, #tpu.memory_space<vmem>>, vector<88x2xf32>,
    %cst_31 = arith.constant 0.000000e+00 : f32
    %42 = vector.broadcast %cst_31 : f32 to vector<72x2xf32>
    %c0_32 = arith.constant 0 : index
    %c0_33 = arith.constant 0 : index
    %43 = vector.load %arg15[%c0_32, %c0_33] : memref<352x2xf32, #tpu.memory_space<vmem>>, vector<72x2xf32>
    %c0_34 = arith.constant 0 : index
    %c0_35 = arith.constant 0 : index
    %44 = vector.load %arg8[%c0_34, %c0_35] : memref<18x2xf32, #tpu.memory_space<vmem>>, vector<2x2xf32>
    %cst_36 = arith.constant dense<0.000000e+00> : vector<72x2xf32>
    %45 = tpu.matmul %43, %44, %cst_36 {dimension_numbers = #tpu.dot_dimension_numbers<[1], [0], [0], [1], [0, 0, 1, 1], [], []>} : vector<72x2xf32>, vector<2x2xf32>, vector<72x2xf32> -> vector<72x2xf32>
    %46 = arith.addf %42, %45 : vector<72x2xf32>
    %c88_37 = arith.constant 88 : index
    %c0_38 = arith.constant 0 : index
    %47 = vector.load %arg15[%c88_37, %c0_38] : memref<352x2xf32, #tpu.memory_space<vmem>>, vector<72x2xf32>
    %c2 = arith.constant 2 : index
    %c0_39 = arith.constant 0 : index
    %48 = vector.load %arg8[%c2, %c0_39] : memref<18x2xf32, #tpu.memory_space<vmem>>, vector<2x2xf32>
    %cst_40 = arith.constant dense<0.000000e+00> : vector<72x2xf32>
    %49 = tpu.matmul %47, %48, %cst_40 {dimension_numbers = #tpu.dot_dimension_numbers<[1], [0], [0], [1], [0, 0, 1, 1], [], []>} : vector<72x2xf32>, vector<2x2xf32>, vector<72x2xf32> -> vector<72x2xf32>
    %50 = arith.addf %46, %49 : vector<72x2xf32>
    %c1 = arith.constant 1 : index
    %c0_41 = arith.constant 0 : index
    %51 = vector.load %arg15[%c1, %c0_41] : memref<352x2xf32, #tpu.memory_space<vmem>>, vector<72x2xf32>
    %c4 = arith.constant 4 : index
    %c0_42 = arith.constant 0 : index
    %52 = vector.load %arg8[%c4, %c0_42] : memref<18x2xf32, #tpu.memory_space<vmem>>, vector<2x2xf32>
    %cst_43 = arith.constant dense<0.000000e+00> : vector<72x2xf32>
    %53 = tpu.matmul %51, %52, %cst_43 {dimension_numbers = #tpu.dot_dimension_numbers<[1], [0], [0], [1], [0, 0, 1, 1], [], []>} : vector<72x2xf32>, vector<2x2xf32>, vector<72x2xf32> -> vector<72x2xf32>
    %54 = arith.addf %50, %53 : vector<72x2xf32>
    %c176_44 = arith.constant 176 : index
    %c0_45 = arith.constant 0 : index
    %55 = vector.load %arg15[%c176_44, %c0_45] : memref<352x2xf32, #tpu.memory_space<vmem>>, vector<72x2xf32>
    %c6 = arith.constant 6 : index
    %c0_46 = arith.constant 0 : index
    %56 = vector.load %arg8[%c6, %c0_46] : memref<18x2xf32, #tpu.memory_space<vmem>>, vector<2x2xf32>
    %cst_47 = arith.constant dense<0.000000e+00> : vector<72x2xf32>
    %57 = tpu.matmul %55, %56, %cst_47 {dimension_numbers = #tpu.dot_dimension_numbers<[1], [0], [0], [1], [0, 0, 1, 1], [], []>} : vector<72x2xf32>, vector<2x2xf32>, vector<72x2xf32> -> vector<72x2xf32>
    %58 = arith.addf %54, %57 : vector<72x2xf32>
    %c264_48 = arith.constant 264 : index
    %c0_49 = arith.constant 0 : index
    %59 = vector.load %arg15[%c264_48, %c0_49] : memref<352x2xf32, #tpu.memory_space<vmem>>, vector<72x2xf32>
    %c8 = arith.constant 8 : index
    %c0_50 = arith.constant 0 : index
    %60 = vector.load %arg8[%c8, %c0_50] : memref<18x2xf32, #tpu.memory_space<vmem>>, vector<2x2xf32>
    %cst_51 = arith.constant dense<0.000000e+00> : vector<72x2xf32>
    %61 = tpu.matmul %59, %60, %cst_51 {dimension_numbers = #tpu.dot_dimension_numbers<[1], [0], [0], [1], [0, 0, 1, 1], [], []>} : vector<72x2xf32>, vector<2x2xf32>, vector<72x2xf32> -> vector<72x2xf32>
    %62 = arith.addf %58, %61 : vector<72x2xf32>
    %c177 = arith.constant 177 : index
    %c0_52 = arith.constant 0 : index
    %63 = vector.load %arg15[%c177, %c0_52] : memref<352x2xf32, #tpu.memory_space<vmem>>, vector<72x2xf32>
    %c10 = arith.constant 10 : index
    %c0_53 = arith.constant 0 : index
    %64 = vector.load %arg8[%c10, %c0_53] : memref<18x2xf32, #tpu.memory_space<vmem>>, vector<2x2xf32>
    %cst_54 = arith.constant dense<0.000000e+00> : vector<72x2xf32>
    %65 = tpu.matmul %63, %64, %cst_54 {dimension_numbers = #tpu.dot_dimension_numbers<[1], [0], [0], [1], [0, 0, 1, 1], [], []>} : vector<72x2xf32>, vector<2x2xf32>, vector<72x2xf32> -> vector<72x2xf32>
    %66 = arith.addf %62, %65 : vector<72x2xf32>
    %c9 = arith.constant 9 : index
    %c0_55 = arith.constant 0 : index
    %67 = vector.load %arg15[%c9, %c0_55] : memref<352x2xf32, #tpu.memory_space<vmem>>, vector<72x2xf32>
    %c12 = arith.constant 12 : index
    %c0_56 = arith.constant 0 : index
    %68 = vector.load %arg8[%c12, %c0_56] : memref<18x2xf32, #tpu.memory_space<vmem>>, vector<2x2xf32>
    %cst_57 = arith.constant dense<0.000000e+00> : vector<72x2xf32>
    %69 = tpu.matmul %67, %68, %cst_57 {dimension_numbers = #tpu.dot_dimension_numbers<[1], [0], [0], [1], [0, 0, 1, 1], [], []>} : vector<72x2xf32>, vector<2x2xf32>, vector<72x2xf32> -> vector<72x2xf32>
    %70 = arith.addf %66, %69 : vector<72x2xf32>
    %c97 = arith.constant 97 : index
    %c0_58 = arith.constant 0 : index
    %71 = vector.load %arg15[%c97, %c0_58] : memref<352x2xf32, #tpu.memory_space<vmem>>, vector<72x2xf32>
    %c14 = arith.constant 14 : index
    %c0_59 = arith.constant 0 : index
    %72 = vector.load %arg8[%c14, %c0_59] : memref<18x2xf32, #tpu.memory_space<vmem>>, vector<2x2xf32>
    %cst_60 = arith.constant dense<0.000000e+00> : vector<72x2xf32>
    %73 = tpu.matmul %71, %72, %cst_60 {dimension_numbers = #tpu.dot_dimension_numbers<[1], [0], [0], [1], [0, 0, 1, 1], [], []>} : vector<72x2xf32>, vector<2x2xf32>, vector<72x2xf32> -> vector<72x2xf32>
    %74 = arith.addf %70, %73 : vector<72x2xf32>
    %c10_61 = arith.constant 10 : index
    %c0_62 = arith.constant 0 : index
    %75 = vector.load %arg15[%c10_61, %c0_62] : memref<352x2xf32, #tpu.memory_space<vmem>>, vector<72x2xf32>
    %c16 = arith.constant 16 : index
    %c0_63 = arith.constant 0 : index
    %76 = vector.load %arg8[%c16, %c0_63] : memref<18x2xf32, #tpu.memory_space<vmem>>, vector<2x2xf32>
    %cst_64 = arith.constant dense<0.000000e+00> : vector<72x2xf32>
    %77 = tpu.matmul %75, %76, %cst_64 {dimension_numbers = #tpu.dot_dimension_numbers<[1], [0], [0], [1], [0, 0, 1, 1], [], []>} : vector<72x2xf32>, vector<2x2xf32>, vector<72x2xf32> -> vector<72x2xf32>
    %78 = arith.addf %74, %77 : vector<72x2xf32>
    %c0_65 = arith.constant 0 : index
    %c0_66 = arith.constant 0 : index
    %79 = vector.load %arg9[%c0_65, %c0_66] : memref<1x2xf32, #tpu.memory_space<vmem>>, vector<1x2xf32>
    %80 = vector.broadcast %79 : vector<1x2xf32> to vector<72x2xf32>
    %81 = arith.addf %78, %80 : vector<72x2xf32>
    %cst_67 = arith.constant 0.000000e+00 : f32
    %82 = vector.broadcast %cst_67 : f32 to vector<72x2xf32>
    %83 = arith.maximumf %81, %82 : vector<72x2xf32>
    %c0_68 = arith.constant 0 : index
    %c0_69 = arith.constant 0 : index
    %84 = vector.load %arg10[%c0_68, %c0_69] : memref<2x8xf32, #tpu.memory_space<vmem>>, vector<2x8xf32>
    %cst_70 = arith.constant dense<0.000000e+00> : vector<72x8xf32>
    %85 = tpu.matmul %83, %84, %cst_70 {dimension_numbers = #tpu.dot_dimension_numbers<[1], [0], [0], [1], [0, 0, 1, 1], [], []>} : vector<72x2xf32>, vector<2x8xf32>, vector<72x8xf32> -> vector<72x8xf32>
    %c0_71 = arith.constant 0 : index
    %c0_72 = arith.constant 0 : index
    %86 = vector.load %arg11[%c0_71, %c0_72] : memref<1x8xf32, #tpu.memory_space<vmem>>, vector<1x8xf32>
    %87 = vector.broadcast %86 : vector<1x8xf32> to vector<72x8xf32>
    %88 = arith.addf %85, %87 : vector<72x8xf32>
    %cst_73 = arith.constant 0.000000e+00 : f32
    %89 = vector.broadcast %cst_73 : f32 to vector<72x8xf32>
    %90 = arith.maximumf %88, %89 : vector<72x8xf32>
    %c0_74 = arith.constant 0 : index
    %c0_75 = arith.constant 0 : index
    %91 = vector.load %arg4[%c0_74, %c0_75] : memref<88x4xf32, #tpu.memory_space<vmem>>, vector<72x4xf32>
    %c0_76 = arith.constant 0 : index
    %c0_77 = arith.constant 0 : index
    %92 = vector.load %arg12[%c0_76, %c0_77] : memref<4x8xf32, #tpu.memory_space<vmem>>, vector<4x8xf32>
    %cst_78 = arith.constant dense<0.000000e+00> : vector<72x8xf32>
    %93 = tpu.matmul %91, %92, %cst_78 {dimension_numbers = #tpu.dot_dimension_numbers<[1], [0], [0], [1], [0, 0, 1, 1], [], []>} : vector<72x4xf32>, vector<4x8xf32>, vector<72x8xf32> -> vector<72x8xf32>
    %c0_79 = arith.constant 0 : index
    %c0_80 = arith.constant 0 : index
    %94 = vector.load %arg13[%c0_79, %c0_80] : memref<1x8xf32, #tpu.memory_space<vmem>>, vector<1x8xf32>
    %95 = vector.broadcast %94 : vector<1x8xf32> to vector<72x8xf32>
    %96 = arith.addf %93, %95 : vector<72x8xf32>
    %97 = arith.addf %90, %96 : vector<72x8xf32>
    %cst_81 = arith.constant 0.000000e+00 : f32
    %98 = vector.broadcast %cst_81 : f32 to vector<72x8xf32>
    %99 = arith.maximumf %97, %98 : vector<72x8xf32>
    %c0_82 = arith.constant 0 : index
    %c0_83 = arith.constant 0 : index
    %100 = vector.load %arg14[%c0_82, %c0_83] : memref<72x8xf32, #tpu.memory_space<vmem>>, vector<72x8xf32>
    tpu.vector_store %arg14[%c0_82, %c0_83], %99 {strides = array<i32>} : memref<72x8xf32, #tpu.memory_space<vmem>>, vector<72x8xf32>,
    return
  }
  func.func @transform_0(%arg0: i32) -> (i32, i32) {
    %c0_i32 = arith.constant 0 : i32
    %c0_i32_0 = arith.constant 0 : i32
    return %arg0, %c0_i32 : i32, i32
  }
  func.func @transform_1(%arg0: i32) -> (i32, i32) {
    %c0_i32 = arith.constant 0 : i32
    %c0_i32_0 = arith.constant 0 : i32
    return %arg0, %c0_i32 : i32, i32
  }
  func.func @transform_2(%arg0: i32) -> (i32, i32) {
    %c0_i32 = arith.constant 0 : i32
    %c0_i32_0 = arith.constant 0 : i32
    return %arg0, %c0_i32 : i32, i32
  }
  func.func @transform_3(%arg0: i32) -> (i32, i32) {
    %c0_i32 = arith.constant 0 : i32
    %c0_i32_0 = arith.constant 0 : i32
    return %arg0, %c0_i32 : i32, i32
  }
  func.func @transform_4(%arg0: i32) -> (i32, i32) {
    %c0_i32 = arith.constant 0 : i32
    %c0_i32_0 = arith.constant 0 : i32
    %c0_i32_1 = arith.constant 0 : i32
    return %c0_i32, %c0_i32_0 : i32, i32
  }
  func.func @transform_5(%arg0: i32) -> (i32, i32) {
    %c0_i32 = arith.constant 0 : i32
    %c0_i32_0 = arith.constant 0 : i32
    %c0_i32_1 = arith.constant 0 : i32
    return %c0_i32, %c0_i32_0 : i32, i32
  }
  func.func @transform_6(%arg0: i32) -> (i32, i32) {
    %c0_i32 = arith.constant 0 : i32
    %c0_i32_0 = arith.constant 0 : i32
    %c0_i32_1 = arith.constant 0 : i32
    return %c0_i32, %c0_i32_0 : i32, i32
  }
  func.func @transform_7(%arg0: i32) -> (i32, i32) {
    %c0_i32 = arith.constant 0 : i32
    %c0_i32_0 = arith.constant 0 : i32
    %c0_i32_1 = arith.constant 0 : i32
    return %c0_i32, %c0_i32_0 : i32, i32
  }
  func.func @transform_8(%arg0: i32) -> (i32, i32) {
    %c0_i32 = arith.constant 0 : i32
    %c0_i32_0 = arith.constant 0 : i32
    %c0_i32_1 = arith.constant 0 : i32
    return %c0_i32, %c0_i32_0 : i32, i32
  }
  func.func @transform_9(%arg0: i32) -> (i32, i32) {
    %c0_i32 = arith.constant 0 : i32
    %c0_i32_0 = arith.constant 0 : i32
    %c0_i32_1 = arith.constant 0 : i32
    return %c0_i32, %c0_i32_0 : i32, i32
  }
  func.func @transform_10(%arg0: i32) -> (i32, i32) {
    %c0_i32 = arith.constant 0 : i32
    %c0_i32_0 = arith.constant 0 : i32
    %c0_i32_1 = arith.constant 0 : i32
    return %c0_i32, %c0_i32_0 : i32, i32
  }
  func.func @transform_11(%arg0: i32) -> (i32, i32) {
    %c0_i32 = arith.constant 0 : i32
    %c0_i32_0 = arith.constant 0 : i32
    %c0_i32_1 = arith.constant 0 : i32
    return %c0_i32, %c0_i32_0 : i32, i32
  }
  func.func @transform_12(%arg0: i32) -> (i32, i32) {
    %c0_i32 = arith.constant 0 : i32
    %c0_i32_0 = arith.constant 0 : i32
    %c0_i32_1 = arith.constant 0 : i32
    return %c0_i32, %c0_i32_0 : i32, i32
  }
  func.func @transform_13(%arg0: i32) -> (i32, i32) {
    %c0_i32 = arith.constant 0 : i32
    %c0_i32_0 = arith.constant 0 : i32
    return %arg0, %c0_i32 : i32, i32
  }
}

</mosaic_0001>

<llo_original>
// kernel: tpu_custom_call.1
$region0: #{tpu_custom_call.1}
  #allocation0 [shape = 'u32[]', space=smem, size = 0x4, offset = 0x4, fixed_abs, tag = 'smem constant byte address 0x4 - core index']
  #allocation1 [shape = 'u32[144,128]{1,0:T(1,128)}', space=vmem, size = 0x12000, scoped, tag = 'internal scratch']
  #allocation2 [shape = 'f32[352,2]{1,0:T(8,128)}', space=vmem, size = 0x2c000, scoped, tag = 'scratch operand']
  %s0 = inlined_call_operand.vmem [shape: f32[176,4], index: 0, kind: input, shape index: {}]
  %s1 = inlined_call_operand.vmem [shape: f32[176,4], index: 1, kind: input, shape index: {}]
  %s2 = inlined_call_operand.vmem [shape: f32[176,4], index: 2, kind: input, shape index: {}]
  %s3 = inlined_call_operand.vmem [shape: f32[176,4], index: 3, kind: input, shape index: {}]
  %s4 = inlined_call_operand.vmem [shape: f32[352,1], index: 4, kind: input, shape index: {}]
  %s5 = inlined_call_operand.vmem [shape: f32[4,2], index: 5, kind: input, shape index: {}]
  %s6 = inlined_call_operand.vmem [shape: f32[1,2], index: 6, kind: input, shape index: {}]
  %s7 = inlined_call_operand.vmem [shape: f32[18,2], index: 7, kind: input, shape index: {}]
  %s8 = inlined_call_operand.vmem [shape: f32[1,2], index: 8, kind: input, shape index: {}]
  %s9 = inlined_call_operand.vmem [shape: f32[2,8], index: 9, kind: input, shape index: {}]
  %s10 = inlined_call_operand.vmem [shape: f32[1,8], index: 10, kind: input, shape index: {}]
  %s11 = inlined_call_operand.vmem [shape: f32[4,8], index: 11, kind: input, shape index: {}]
  %s12 = inlined_call_operand.vmem [shape: f32[1,8], index: 12, kind: input, shape index: {}]
  %s13 = inlined_call_operand.vmem [shape: f32[144,8], index: 13, kind: output, shape index: {}]
  %s14 = sld [smem:[#allocation0]]
  $region85: #{tpu_custom_call.1} parent=0
    _
  %s16 = ssub.s32 1, %s14
  %s17 = scalar_select 0, %s16, %s14
  loop: start=0, step=1, limit=4
  $region2: #{tpu_custom_call.1} parent=0 // loop_pre_header
    _
  $region3: #{tpu_custom_call.1} parent=0 // loop_header
    %s19 = sphi 0, %s23
    %p20 = scmp.ge.s32.totalorder %s19, 4
    %s29 = sphi 0, %s31
    %s32 = sphi 0, %s29
    %s33 = sphi 0, %s32
    %s49 = sphi 0, %s33
    %s55 = sphi 0, %s57
    %s58 = sphi 0, %s55
    %s59 = sphi 0, %s58
    %s75 = sphi 0, %s59
    %s81 = sphi 0, %s83
    %s84 = sphi 0, %s81
    %s85 = sphi 0, %s84
    %s101 = sphi 0, %s85
    %s107 = sphi 0, %s109
    %s110 = sphi 0, %s107
    %s111 = sphi 0, %s110
    %s127 = sphi 0, %s111
    %s131 = sphi 0, %s131
    %s133 = sphi 0, %s131
    %s134 = sphi 0, %s133
    %s148 = sphi 0, %s134
    %s152 = sphi 0, %s152
    %s154 = sphi 0, %s152
    %s155 = sphi 0, %s154
    %s169 = sphi 0, %s155
    %s173 = sphi 0, %s173
    %s175 = sphi 0, %s173
    %s176 = sphi 0, %s175
    %s190 = sphi 0, %s176
    %s194 = sphi 0, %s194
    %s196 = sphi 0, %s194
    %s197 = sphi 0, %s196
    %s211 = sphi 0, %s197
    %s215 = sphi 0, %s215
    %s217 = sphi 0, %s215
    %s218 = sphi 0, %s217
    %s232 = sphi 0, %s218
    %s236 = sphi 0, %s236
    %s238 = sphi 0, %s236
    %s239 = sphi 0, %s238
    %s253 = sphi 0, %s239
    %s257 = sphi 0, %s257
    %s259 = sphi 0, %s257
    %s260 = sphi 0, %s259
    %s274 = sphi 0, %s260
    %s278 = sphi 0, %s278
    %s280 = sphi 0, %s278
    %s281 = sphi 0, %s280
    %s295 = sphi 0, %s281
    %s299 = sphi 0, %s299
    %s301 = sphi 0, %s299
    %s302 = sphi 0, %s301
    %s316 = sphi 0, %s302
    %s322 = sphi 0, %s324
    %s325 = sphi 0, %s322
    %s326 = sphi 0, %s325
    %s342 = sphi 0, %s326
  $region4: #{tpu_custom_call.1} parent=0 // loop_header_branch
    %22 = sbr.rel (%p20) target = $region8
  $region5: #{tpu_custom_call.1} parent=0 // loop_body
    %s24 = ssub.s32 %s19, 1
    %s25 = ssub.s32 %s19, 2
    %s26 = sadd.s32 %s19, 1
    %s27 = ssub.s32 %s19, %s26
    %p28 = scmp.eq.s32.totalorder %s27, 0
    %s30 = sadd.s32 %s29, 1
    %s31 = scalar_select %p28, %s29, %s30
    %p34 = pneg %p28
    %p35 = scmp.eq.s32.totalorder %s19, 1
    %p36 = por %p34, %p35
    %p37 = scmp.ne.s32.totalorder %s29, %s32
    %p38 = scmp.eq.s32.totalorder %s19, 0
    %p39 = por %p37, %p38
    %p40 = scmp.ne.s32.totalorder %s29, %s32
    %p41 = scmp.eq.s32.totalorder %s24, 1
    %p42 = por %p40, %p41
    %p43 = scmp.ne.s32.totalorder %s32, %s33
    %p44 = scmp.eq.s32.totalorder %s24, 0
    %p45 = por %p43, %p44
    %p46 = scmp.ne.s32.totalorder %s32, %s33
    %p47 = scmp.eq.s32.totalorder %s25, 1
    %p48 = por %p46, %p47
    %p50 = scmp.ne.s32.totalorder %s33, %s49
    %p51 = scmp.eq.s32.totalorder %s25, 0
    %p52 = por %p50, %p51
    %s53 = ssub.s32 %s19, %s26
    %p54 = scmp.eq.s32.totalorder %s53, 0
    %s56 = sadd.s32 %s55, 1
    %s57 = scalar_select %p54, %s55, %s56
    %p60 = pneg %p54
    %p61 = scmp.eq.s32.totalorder %s19, 1
    %p62 = por %p60, %p61
    %p63 = scmp.ne.s32.totalorder %s55, %s58
    %p64 = scmp.eq.s32.totalorder %s19, 0
    %p65 = por %p63, %p64
    %p66 = scmp.ne.s32.totalorder %s55, %s58
    %p67 = scmp.eq.s32.totalorder %s24, 1
    %p68 = por %p66, %p67
    %p69 = scmp.ne.s32.totalorder %s58, %s59
    %p70 = scmp.eq.s32.totalorder %s24, 0
    %p71 = por %p69, %p70
    %p72 = scmp.ne.s32.totalorder %s58, %s59
    %p73 = scmp.eq.s32.totalorder %s25, 1
    %p74 = por %p72, %p73
    %p76 = scmp.ne.s32.totalorder %s59, %s75
    %p77 = scmp.eq.s32.totalorder %s25, 0
    %p78 = por %p76, %p77
    %s79 = ssub.s32 %s19, %s26
    %p80 = scmp.eq.s32.totalorder %s79, 0
    %s82 = sadd.s32 %s81, 1
    %s83 = scalar_select %p80, %s81, %s82
    %p86 = pneg %p80
    %p87 = scmp.eq.s32.totalorder %s19, 1
    %p88 = por %p86, %p87
    %p89 = scmp.ne.s32.totalorder %s81, %s84
    %p90 = scmp.eq.s32.totalorder %s19, 0
    %p91 = por %p89, %p90
    %p92 = scmp.ne.s32.totalorder %s81, %s84
    %p93 = scmp.eq.s32.totalorder %s24, 1
    %p94 = por %p92, %p93
    %p95 = scmp.ne.s32.totalorder %s84, %s85
    %p96 = scmp.eq.s32.totalorder %s24, 0
    %p97 = por %p95, %p96
    %p98 = scmp.ne.s32.totalorder %s84, %s85
    %p99 = scmp.eq.s32.totalorder %s25, 1
    %p100 = por %p98, %p99
    %p102 = scmp.ne.s32.totalorder %s85, %s101
    %p103 = scmp.eq.s32.totalorder %s25, 0
    %p104 = por %p102, %p103
    %s105 = ssub.s32 %s19, %s26
    %p106 = scmp.eq.s32.totalorder %s105, 0
    %s108 = sadd.s32 %s107, 1
    %s109 = scalar_select %p106, %s107, %s108
    %p112 = pneg %p106
    %p113 = scmp.eq.s32.totalorder %s19, 1
    %p114 = por %p112, %p113
    %p115 = scmp.ne.s32.totalorder %s107, %s110
    %p116 = scmp.eq.s32.totalorder %s19, 0
    %p117 = por %p115, %p116
    %p118 = scmp.ne.s32.totalorder %s107, %s110
    %p119 = scmp.eq.s32.totalorder %s24, 1
    %p120 = por %p118, %p119
    %p121 = scmp.ne.s32.totalorder %s110, %s111
    %p122 = scmp.eq.s32.totalorder %s24, 0
    %p123 = por %p121, %p122
    %p124 = scmp.ne.s32.totalorder %s110, %s111
    %p125 = scmp.eq.s32.totalorder %s25, 1
    %p126 = por %p124, %p125
    %p128 = scmp.ne.s32.totalorder %s111, %s127
    %p129 = scmp.eq.s32.totalorder %s25, 0
    %p130 = por %p128, %p129
    %s132 = sadd.s32 %s131, 1
    %p135 = scmp.eq.s32.totalorder %s19, 1
    %p136 = scmp.ne.s32.totalorder %s131, %s133
    %p137 = scmp.eq.s32.totalorder %s19, 0
    %p138 = por %p136, %p137
    %p139 = scmp.ne.s32.totalorder %s131, %s133
    %p140 = scmp.eq.s32.totalorder %s24, 1
    %p141 = por %p139, %p140
    %p142 = scmp.ne.s32.totalorder %s133, %s134
    %p143 = scmp.eq.s32.totalorder %s24, 0
    %p144 = por %p142, %p143
    %p145 = scmp.ne.s32.totalorder %s133, %s134
    %p146 = scmp.eq.s32.totalorder %s25, 1
    %p147 = por %p145, %p146
    %p149 = scmp.ne.s32.totalorder %s134, %s148
    %p150 = scmp.eq.s32.totalorder %s25, 0
    %p151 = por %p149, %p150
    %s153 = sadd.s32 %s152, 1
    %p156 = scmp.eq.s32.totalorder %s19, 1
    %p157 = scmp.ne.s32.totalorder %s152, %s154
    %p158 = scmp.eq.s32.totalorder %s19, 0
    %p159 = por %p157, %p158
    %p160 = scmp.ne.s32.totalorder %s152, %s154
    %p161 = scmp.eq.s32.totalorder %s24, 1
    %p162 = por %p160, %p161
    %p163 = scmp.ne.s32.totalorder %s154, %s155
    %p164 = scmp.eq.s32.totalorder %s24, 0
    %p165 = por %p163, %p164
    %p166 = scmp.ne.s32.totalorder %s154, %s155
    %p167 = scmp.eq.s32.totalorder %s25, 1
    %p168 = por %p166, %p167
    %p170 = scmp.ne.s32.totalorder %s155, %s169
    %p171 = scmp.eq.s32.totalorder %s25, 0
    %p172 = por %p170, %p171
    %s174 = sadd.s32 %s173, 1
    %p177 = scmp.eq.s32.totalorder %s19, 1
    %p178 = scmp.ne.s32.totalorder %s173, %s175
    %p179 = scmp.eq.s32.totalorder %s19, 0
    %p180 = por %p178, %p179
    %p181 = scmp.ne.s32.totalorder %s173, %s175
    %p182 = scmp.eq.s32.totalorder %s24, 1
    %p183 = por %p181, %p182
    %p184 = scmp.ne.s32.totalorder %s175, %s176
    %p185 = scmp.eq.s32.totalorder %s24, 0
    %p186 = por %p184, %p185
    %p187 = scmp.ne.s32.totalorder %s175, %s176
    %p188 = scmp.eq.s32.totalorder %s25, 1
    %p189 = por %p187, %p188
    %p191 = scmp.ne.s32.totalorder %s176, %s190
    %p192 = scmp.eq.s32.totalorder %s25, 0
    %p193 = por %p191, %p192
    %s195 = sadd.s32 %s194, 1
    %p198 = scmp.eq.s32.totalorder %s19, 1
    %p199 = scmp.ne.s32.totalorder %s194, %s196
    %p200 = scmp.eq.s32.totalorder %s19, 0
    %p201 = por %p199, %p200
    %p202 = scmp.ne.s32.totalorder %s194, %s196
    %p203 = scmp.eq.s32.totalorder %s24, 1
    %p204 = por %p202, %p203
    %p205 = scmp.ne.s32.totalorder %s196, %s197
    %p206 = scmp.eq.s32.totalorder %s24, 0
    %p207 = por %p205, %p206
    %p208 = scmp.ne.s32.totalorder %s196, %s197
    %p209 = scmp.eq.s32.totalorder %s25, 1
    %p210 = por %p208, %p209
    %p212 = scmp.ne.s32.totalorder %s197, %s211
    %p213 = scmp.eq.s32.totalorder %s25, 0
    %p214 = por %p212, %p213
    %s216 = sadd.s32 %s215, 1
    %p219 = scmp.eq.s32.totalorder %s19, 1
    %p220 = scmp.ne.s32.totalorder %s215, %s217
    %p221 = scmp.eq.s32.totalorder %s19, 0
    %p222 = por %p220, %p221
    %p223 = scmp.ne.s32.totalorder %s215, %s217
    %p224 = scmp.eq.s32.totalorder %s24, 1
    %p225 = por %p223, %p224
    %p226 = scmp.ne.s32.totalorder %s217, %s218
    %p227 = scmp.eq.s32.totalorder %s24, 0
    %p228 = por %p226, %p227
    %p229 = scmp.ne.s32.totalorder %s217, %s218
    %p230 = scmp.eq.s32.totalorder %s25, 1
    %p231 = por %p229, %p230
    %p233 = scmp.ne.s32.totalorder %s218, %s232
    %p234 = scmp.eq.s32.totalorder %s25, 0
    %p235 = por %p233, %p234
    %s237 = sadd.s32 %s236, 1
    %p240 = scmp.eq.s32.totalorder %s19, 1
    %p241 = scmp.ne.s32.totalorder %s236, %s238
    %p242 = scmp.eq.s32.totalorder %s19, 0
    %p243 = por %p241, %p242
    %p244 = scmp.ne.s32.totalorder %s236, %s238
    %p245 = scmp.eq.s32.totalorder %s24, 1
    %p246 = por %p244, %p245
    %p247 = scmp.ne.s32.totalorder %s238, %s239
    %p248 = scmp.eq.s32.totalorder %s24, 0
    %p249 = por %p247, %p248
    %p250 = scmp.ne.s32.totalorder %s238, %s239
    %p251 = scmp.eq.s32.totalorder %s25, 1
    %p252 = por %p250, %p251
    %p254 = scmp.ne.s32.totalorder %s239, %s253
    %p255 = scmp.eq.s32.totalorder %s25, 0
    %p256 = por %p254, %p255
    %s258 = sadd.s32 %s257, 1
    %p261 = scmp.eq.s32.totalorder %s19, 1
    %p262 = scmp.ne.s32.totalorder %s257, %s259
    %p263 = scmp.eq.s32.totalorder %s19, 0
    %p264 = por %p262, %p263
    %p265 = scmp.ne.s32.totalorder %s257, %s259
    %p266 = scmp.eq.s32.totalorder %s24, 1
    %p267 = por %p265, %p266
    %p268 = scmp.ne.s32.totalorder %s259, %s260
    %p269 = scmp.eq.s32.totalorder %s24, 0
    %p270 = por %p268, %p269
    %p271 = scmp.ne.s32.totalorder %s259, %s260
    %p272 = scmp.eq.s32.totalorder %s25, 1
    %p273 = por %p271, %p272
    %p275 = scmp.ne.s32.totalorder %s260, %s274
    %p276 = scmp.eq.s32.totalorder %s25, 0
    %p277 = por %p275, %p276
    %s279 = sadd.s32 %s278, 1
    %p282 = scmp.eq.s32.totalorder %s19, 1
    %p283 = scmp.ne.s32.totalorder %s278, %s280
    %p284 = scmp.eq.s32.totalorder %s19, 0
    %p285 = por %p283, %p284
    %p286 = scmp.ne.s32.totalorder %s278, %s280
    %p287 = scmp.eq.s32.totalorder %s24, 1
    %p288 = por %p286, %p287
    %p289 = scmp.ne.s32.totalorder %s280, %s281
    %p290 = scmp.eq.s32.totalorder %s24, 0
    %p291 = por %p289, %p290
    %p292 = scmp.ne.s32.totalorder %s280, %s281
    %p293 = scmp.eq.s32.totalorder %s25, 1
    %p294 = por %p292, %p293
    %p296 = scmp.ne.s32.totalorder %s281, %s295
    %p297 = scmp.eq.s32.totalorder %s25, 0
    %p298 = por %p296, %p297
    %s300 = sadd.s32 %s299, 1
    %p303 = scmp.eq.s32.totalorder %s19, 1
    %p304 = scmp.ne.s32.totalorder %s299, %s301
    %p305 = scmp.eq.s32.totalorder %s19, 0
    %p306 = por %p304, %p305
    %p307 = scmp.ne.s32.totalorder %s299, %s301
    %p308 = scmp.eq.s32.totalorder %s24, 1
    %p309 = por %p307, %p308
    %p310 = scmp.ne.s32.totalorder %s301, %s302
    %p311 = scmp.eq.s32.totalorder %s24, 0
    %p312 = por %p310, %p311
    %p313 = scmp.ne.s32.totalorder %s301, %s302
    %p314 = scmp.eq.s32.totalorder %s25, 1
    %p315 = por %p313, %p314
    %p317 = scmp.ne.s32.totalorder %s302, %s316
    %p318 = scmp.eq.s32.totalorder %s25, 0
    %p319 = por %p317, %p318
    %s320 = ssub.s32 %s19, %s26
    %p321 = scmp.eq.s32.totalorder %s320, 0
    %s323 = sadd.s32 %s322, 1
    %s324 = scalar_select %p321, %s322, %s323
    %p327 = pneg %p321
    %p328 = scmp.eq.s32.totalorder %s19, 1
    %p329 = por %p327, %p328
    %p330 = scmp.ne.s32.totalorder %s322, %s325
    %p331 = scmp.eq.s32.totalorder %s19, 0
    %p332 = por %p330, %p331
    %p333 = scmp.ne.s32.totalorder %s322, %s325
    %p334 = scmp.eq.s32.totalorder %s24, 1
    %p335 = por %p333, %p334
    %p336 = scmp.ne.s32.totalorder %s325, %s326
    %p337 = scmp.eq.s32.totalorder %s24, 0
    %p338 = por %p336, %p337
    %p339 = scmp.ne.s32.totalorder %s325, %s326
    %p340 = scmp.eq.s32.totalorder %s25, 1
    %p341 = por %p339, %p340
    %p343 = scmp.ne.s32.totalorder %s326, %s342
    %p344 = scmp.eq.s32.totalorder %s25, 0
    %p345 = por %p343, %p344
    %p346 = scmp.le.s32.totalorder 1, %s19
    %p347 = scmp.lt.s32.totalorder %s19, 3
    %p348 = pnand %p346, %p347
    %p349 = pneg %p348
    // Predicated region
    $region9: #{tpu_custom_call.1} parent=5 // pred_check
      _
    $region10: #{tpu_custom_call.1} parent=5 // pred_check_branch
      %351 = sbr.rel (%p348) target = $region12
    $region11: #{tpu_custom_call.1} parent=5 // pred_region
      %s352 = ssub.s32 %s19, 1
      // Predicated region
      $region13: #{tpu_custom_call.1} parent=11 // pred_check
        %p353 = pneg %p144
      $region14: #{tpu_custom_call.1} parent=11 // pred_check_branch
        %355 = sbr.rel (%p353) target = $region16
      $region15: #{tpu_custom_call.1} parent=11 // pred_region
        _
      $region16: #{tpu_custom_call.1} parent=11 // pred_fallthru
        _
      // Predicated region
      $region17: #{tpu_custom_call.1} parent=11 // pred_check
        %p356 = pneg %p165
      $region18: #{tpu_custom_call.1} parent=11 // pred_check_branch
        %358 = sbr.rel (%p356) target = $region20
      $region19: #{tpu_custom_call.1} parent=11 // pred_region
        _
      $region20: #{tpu_custom_call.1} parent=11 // pred_fallthru
        _
      // Predicated region
      $region21: #{tpu_custom_call.1} parent=11 // pred_check
        %p359 = pneg %p186
      $region22: #{tpu_custom_call.1} parent=11 // pred_check_branch
        %361 = sbr.rel (%p359) target = $region24
      $region23: #{tpu_custom_call.1} parent=11 // pred_region
        _
      $region24: #{tpu_custom_call.1} parent=11 // pred_fallthru
        _
      // Predicated region
      $region25: #{tpu_custom_call.1} parent=11 // pred_check
        %p362 = pneg %p207
      $region26: #{tpu_custom_call.1} parent=11 // pred_check_branch
        %364 = sbr.rel (%p362) target = $region28
      $region27: #{tpu_custom_call.1} parent=11 // pred_region
        _
      $region28: #{tpu_custom_call.1} parent=11 // pred_fallthru
        _
      // Predicated region
      $region29: #{tpu_custom_call.1} parent=11 // pred_check
        %p365 = pneg %p228
      $region30: #{tpu_custom_call.1} parent=11 // pred_check_branch
        %367 = sbr.rel (%p365) target = $region32
      $region31: #{tpu_custom_call.1} parent=11 // pred_region
        _
      $region32: #{tpu_custom_call.1} parent=11 // pred_fallthru
        _
      // Predicated region
      $region33: #{tpu_custom_call.1} parent=11 // pred_check
        %p368 = pneg %p249
      $region34: #{tpu_custom_call.1} parent=11 // pred_check_branch
        %370 = sbr.rel (%p368) target = $region36
      $region35: #{tpu_custom_call.1} parent=11 // pred_region
        _
      $region36: #{tpu_custom_call.1} parent=11 // pred_fallthru
        _
      // Predicated region
      $region37: #{tpu_custom_call.1} parent=11 // pred_check
        %p371 = pneg %p270
      $region38: #{tpu_custom_call.1} parent=11 // pred_check_branch
        %373 = sbr.rel (%p371) target = $region40
      $region39: #{tpu_custom_call.1} parent=11 // pred_region
        _
      $region40: #{tpu_custom_call.1} parent=11 // pred_fallthru
        _
      // Predicated region
      $region41: #{tpu_custom_call.1} parent=11 // pred_check
        %p374 = pneg %p291
      $region42: #{tpu_custom_call.1} parent=11 // pred_check_branch
        %376 = sbr.rel (%p374) target = $region44
      $region43: #{tpu_custom_call.1} parent=11 // pred_region
        _
      $region44: #{tpu_custom_call.1} parent=11 // pred_fallthru
        _
      // Predicated region
      $region45: #{tpu_custom_call.1} parent=11 // pred_check
        %p377 = pneg %p312
      $region46: #{tpu_custom_call.1} parent=11 // pred_check_branch
        %379 = sbr.rel (%p377) target = $region48
      $region47: #{tpu_custom_call.1} parent=11 // pred_region
        _
      $region48: #{tpu_custom_call.1} parent=11 // pred_fallthru
        _
    $region12: #{tpu_custom_call.1} parent=5 // pred_fallthru
      _
    %p380 = scmp.lt.s32.totalorder %s19, 2
    // Predicated region
    $region49: #{tpu_custom_call.1} parent=5 // pred_check
      %p381 = pneg %p380
    $region50: #{tpu_custom_call.1} parent=5 // pred_check_branch
      %383 = sbr.rel (%p381) target = $region52
    $region51: #{tpu_custom_call.1} parent=5 // pred_region
      // Predicated region
      $region53: #{tpu_custom_call.1} parent=51 // pred_check
        %p384 = pneg %p39
      $region54: #{tpu_custom_call.1} parent=51 // pred_check_branch
        %386 = sbr.rel (%p384) target = $region56
      $region55: #{tpu_custom_call.1} parent=51 // pred_region
        %s387 = smul.u32 11, %s19
        %p388 = scmp.lt.s32.totalorder %s387, 21
        %s389 = scalar_select %p388, %s387, 21
        %s390 = smul.addr %s389, 8
        %s391 = scalar_lea.vmem %s0, %s390
        %s392 = smul.u32 11, %s19
      $region56: #{tpu_custom_call.1} parent=51 // pred_fallthru
        _
      // Predicated region
      $region57: #{tpu_custom_call.1} parent=51 // pred_check
        %p393 = pneg %p65
      $region58: #{tpu_custom_call.1} parent=51 // pred_check_branch
        %395 = sbr.rel (%p393) target = $region60
      $region59: #{tpu_custom_call.1} parent=51 // pred_region
        %s396 = smul.u32 11, %s19
        %p397 = scmp.lt.s32.totalorder %s396, 21
        %s398 = scalar_select %p397, %s396, 21
        %s399 = smul.addr %s398, 8
        %s400 = scalar_lea.vmem %s1, %s399
        %s401 = smul.u32 11, %s19
      $region60: #{tpu_custom_call.1} parent=51 // pred_fallthru
        _
      // Predicated region
      $region61: #{tpu_custom_call.1} parent=51 // pred_check
        %p402 = pneg %p91
      $region62: #{tpu_custom_call.1} parent=51 // pred_check_branch
        %404 = sbr.rel (%p402) target = $region64
      $region63: #{tpu_custom_call.1} parent=51 // pred_region
        %s405 = smul.u32 11, %s19
        %p406 = scmp.lt.s32.totalorder %s405, 21
        %s407 = scalar_select %p406, %s405, 21
        %s408 = smul.addr %s407, 8
        %s409 = scalar_lea.vmem %s2, %s408
        %s410 = smul.u32 11, %s19
      $region64: #{tpu_custom_call.1} parent=51 // pred_fallthru
        _
      // Predicated region
      $region65: #{tpu_custom_call.1} parent=51 // pred_check
        %p411 = pneg %p117
      $region66: #{tpu_custom_call.1} parent=51 // pred_check_branch
        %413 = sbr.rel (%p411) target = $region68
      $region67: #{tpu_custom_call.1} parent=51 // pred_region
        %s414 = smul.u32 11, %s19
        %p415 = scmp.lt.s32.totalorder %s414, 21
        %s416 = scalar_select %p415, %s414, 21
        %s417 = smul.addr %s416, 8
        %s418 = scalar_lea.vmem %s3, %s417
        %s419 = smul.u32 11, %s19
      $region68: #{tpu_custom_call.1} parent=51 // pred_fallthru
        _
    $region52: #{tpu_custom_call.1} parent=5 // pred_fallthru
      _
    %p420 = scmp.le.s32.totalorder 1, %s19
    %p421 = scmp.lt.s32.totalorder %s19, 3
    %p422 = pnand %p420, %p421
    %p423 = pneg %p422
    // Predicated region
    $region69: #{tpu_custom_call.1} parent=5 // pred_check
      _
    $region70: #{tpu_custom_call.1} parent=5 // pred_check_branch
      %425 = sbr.rel (%p422) target = $region72
    $region71: #{tpu_custom_call.1} parent=5 // pred_region
      %s426 = ssub.s32 %s19, 1
      %s427 = smul.u32 11, %s24
      %p428 = scmp.lt.s32.totalorder %s427, 21
      %s429 = scalar_select %p428, %s427, 21
      %s430 = smul.addr %s429, 8
      %s431 = scalar_lea.vmem %s0, %s430
      %p432 = pneg %p45
      %p433 = pneg %p42
      %s434 = smul.u32 11, %s24
      %p435 = scmp.lt.s32.totalorder %s434, 21
      %s436 = scalar_select %p435, %s434, 21
      %s437 = smul.addr %s436, 8
      %s438 = scalar_lea.vmem %s1, %s437
      %p439 = pneg %p71
      %p440 = pneg %p68
      %s441 = smul.u32 11, %s24
      %p442 = scmp.lt.s32.totalorder %s441, 21
      %s443 = scalar_select %p442, %s441, 21
      %s444 = smul.addr %s443, 8
      %s445 = scalar_lea.vmem %s2, %s444
      %p446 = pneg %p97
      %p447 = pneg %p94
      %s448 = smul.u32 11, %s24
      %p449 = scmp.lt.s32.totalorder %s448, 21
      %s450 = scalar_select %p449, %s448, 21
      %s451 = smul.addr %s450, 8
      %s452 = scalar_lea.vmem %s3, %s451
      %p453 = pneg %p123
      %p454 = pneg %p120
      %p455 = pneg %p144
      %p456 = pneg %p141
      %p457 = pneg %p165
      %p458 = pneg %p162
      %p459 = pneg %p186
      %p460 = pneg %p183
      %p461 = pneg %p207
      %p462 = pneg %p204
      %p463 = pneg %p228
      %p464 = pneg %p225
      %p465 = pneg %p249
      %p466 = pneg %p246
      %p467 = pneg %p270
      %p468 = pneg %p267
      %p469 = pneg %p291
      %p470 = pneg %p288
      %p471 = pneg %p312
      %p472 = pneg %p309
      %p473 = pneg %p338
      %p474 = pneg %p335
      %s475 = smul.u32 9, %s24
      %p476 = scmp.lt.s32.totalorder %s475, 17
      %s477 = scalar_select %p476, %s475, 17
      %s478 = smul.addr %s477, 8
      %s479 = scalar_lea.vmem %s13, %s478
      %s480 = smul.u32 11, %s24
      %p481 = scmp.lt.s32.totalorder %s480, 21
      %s482 = scalar_select %p481, %s480, 21
      %s483 = smul.addr %s482, 8
      %s484 = scalar_lea.vmem %s0, %s483
      %s485 = smul.u32 11, %s24
      %s486 = smul.u32 11, %s24
      %p487 = scmp.lt.s32.totalorder %s486, 21
      %s488 = scalar_select %p487, %s486, 21
      %s489 = smul.addr %s488, 8
      %s490 = scalar_lea.vmem %s1, %s489
      %s491 = smul.u32 11, %s24
      %s492 = smul.u32 11, %s24
      %p493 = scmp.lt.s32.totalorder %s492, 21
      %s494 = scalar_select %p493, %s492, 21
      %s495 = smul.addr %s494, 8
      %s496 = scalar_lea.vmem %s2, %s495
      %s497 = smul.u32 11, %s24
      %s498 = smul.u32 11, %s24
      %p499 = scmp.lt.s32.totalorder %s498, 21
      %s500 = scalar_select %p499, %s498, 21
      %s501 = smul.addr %s500, 8
      %s502 = scalar_lea.vmem %s3, %s501
      %s503 = smul.u32 11, %s24
      %s504 = smul.u32 9, %s24
      %p505 = scmp.lt.s32.totalorder %s504, 17
      %s506 = scalar_select %p505, %s504, 17
      %s507 = smul.addr %s506, 8
      %s508 = scalar_lea.vmem %s13, %s507
      %s509 = smul.u32 9, %s24
      %v510 = vld [vmem:[%s5] sm:$0xf]
      %v511 = vld [vmem:[%s6] sm:$0x1]
      %v512 = vld [vmem:[%s484] sm:$0xff]
      %v513 = vld [vmem:[%s484 + $0x8] sm:$0xff]
      %v514 = vld [vmem:[%s484 + $0x10] sm:$0xff]
      %v515 = vld [vmem:[%s484 + $0x18] sm:$0xff]
      %v516 = vld [vmem:[%s484 + $0x20] sm:$0xff]
      %v517 = vld [vmem:[%s484 + $0x28] sm:$0xff]
      %v518 = vld [vmem:[%s484 + $0x30] sm:$0xff]
      %v519 = vld [vmem:[%s484 + $0x38] sm:$0xff]
      %v520 = vld [vmem:[%s484 + $0x40] sm:$0xff]
      %v521 = vld [vmem:[%s484 + $0x48] sm:$0xff]
      %v522 = vld [vmem:[%s484 + $0x50] sm:$0xff]
      %v524 = vlaneseq
      %v525 = vshrl.u32 %v524, 7
      %v526 = vsub.s32 0, %v525
      %v527 = vrot.slane %v511, %v526
      %vm529 = vcmask 31744
      %v531 = vsel %vm529, %v512, 0
      %v534 = vsel %vm529, %v513, 0
      %v537 = vsel %vm529, %v514, 0
      %v540 = vsel %vm529, %v515, 0
      %v543 = vsel %vm529, %v516, 0
      %v546 = vsel %vm529, %v517, 0
      %v549 = vsel %vm529, %v518, 0
      %v552 = vsel %vm529, %v519, 0
      %v555 = vsel %vm529, %v520, 0
      %v558 = vsel %vm529, %v521, 0
      %v561 = vsel %vm529, %v522, 0
      %vm563 = vcmask 1043456
      %v565 = vsel %vm563, %v510, 0
      %567 = vmatprep.subr.mxu0 0.0
      %568 = vmatpush1.msra.mxu0 0.0
      %569 = vmatprep.subr.mxu0 0.0
      %570 = vmatpush1.msra.mxu0 0.0
      %571 = vmatprep.subr.mxu0 0.0
      %572 = vmatpush1.msra.mxu0 0.0
      %573 = vmatprep.subr.mxu0 0.0
      %574 = vmatpush1.msra.mxu0 0.0
      %575 = vmatprep.subr.mxu0 0.0
      %576 = vmatpush1.msra.mxu0 0.0
      %577 = vmatprep.subr.mxu0 0.0
      %578 = vmatpush1.msra.mxu0 0.0
      %579 = vmatprep.subr.mxu0 0.0
      %580 = vmatpush1.msra.mxu0 0.0
      %581 = vmatprep.subr.mxu0 0.0
      %582 = vmatpush1.msra.mxu0 0.0
      %583 = vmatprep.subr.mxu0 0.0
      %584 = vmatpush1.msra.mxu0 0.0
      %585 = vmatprep.subr.mxu0 0.0
      %586 = vmatpush1.msra.mxu0 0.0
      %587 = vmatprep.subr.mxu0 0.0
      %588 = vmatpush1.msra.mxu0 0.0
      %589 = vmatprep.subr.mxu0 0.0
      %590 = vmatpush1.msra.mxu0 0.0
      %591 = vmatprep.subr.mxu0 0.0
      %592 = vmatpush1.msra.mxu0 0.0
      %593 = vmatprep.subr.mxu0 0.0
      %594 = vmatpush1.msra.mxu0 0.0
      %595 = vmatprep.subr.mxu0 0.0
      %596 = vmatpush1.msra.mxu0 0.0
      %597 = vmatprep.subr.mxu0 0.0
      %598 = vmatpush1.msra.mxu0 %v565
      %599 = vmatprep.subr.mxu0 0.0
      %600 = vmatpush2.msra.mxu0 0.0
      %601 = vmatprep.subr.mxu0 0.0
      %602 = vmatpush2.msra.mxu0 0.0
      %603 = vmatprep.subr.mxu0 0.0
      %604 = vmatpush2.msra.mxu0 0.0
      %605 = vmatprep.subr.mxu0 0.0
      %606 = vmatpush2.msra.mxu0 0.0
      %607 = vmatprep.subr.mxu0 0.0
      %608 = vmatpush2.msra.mxu0 0.0
      %609 = vmatprep.subr.mxu0 0.0
      %610 = vmatpush2.msra.mxu0 0.0
      %611 = vmatprep.subr.mxu0 0.0
      %612 = vmatpush2.msra.mxu0 0.0
      %613 = vmatprep.subr.mxu0 0.0
      %614 = vmatpush2.msra.mxu0 0.0
      %615 = vmatprep.subr.mxu0 0.0
      %616 = vmatpush2.msra.mxu0 0.0
      %617 = vmatprep.subr.mxu0 0.0
      %618 = vmatpush2.msra.mxu0 0.0
      %619 = vmatprep.subr.mxu0 0.0
      %620 = vmatpush2.msra.mxu0 0.0
      %621 = vmatprep.subr.mxu0 0.0
      %622 = vmatpush2.msra.mxu0 0.0
      %623 = vmatprep.subr.mxu0 0.0
      %624 = vmatpush2.msra.mxu0 0.0
      %625 = vmatprep.subr.mxu0 0.0
      %626 = vmatpush2.msra.mxu0 0.0
      %627 = vmatprep.subr.mxu0 0.0
      %628 = vmatpush2.msra.mxu0 0.0
      %629 = vmatprep.subr.mxu0 0.0
      %630 = vmatpush2.msra.mxu0 0.0
      %631 = vmatprep.mubr.f32.mxu0 0.0
      %632 = vmatmul.mubr.f32.gmra.mxu0 %v531
      %v633 = vpop.f32.mrf.mxu0
      %v634 = vadd.f32 %v527, %v633
      %v635 = vpop.f32.mrf.mxu0
      %636 = vmatprep.mubr.f32.mxu0 0.0
      %637 = vmatmul.mubr.f32.gmra.mxu0 %v534
      %v638 = vpop.f32.mrf.mxu0
      %v639 = vadd.f32 %v527, %v638
      %v640 = vpop.f32.mrf.mxu0
      %641 = vmatprep.mubr.f32.mxu0 0.0
      %642 = vmatmul.mubr.f32.gmra.mxu0 %v537
      %v643 = vpop.f32.mrf.mxu0
      %v644 = vadd.f32 %v527, %v643
      %v645 = vpop.f32.mrf.mxu0
      %646 = vmatprep.mubr.f32.mxu0 0.0
      %647 = vmatmul.mubr.f32.gmra.mxu0 %v540
      %v648 = vpop.f32.mrf.mxu0
      %v649 = vadd.f32 %v527, %v648
      %v650 = vpop.f32.mrf.mxu0
      %651 = vmatprep.mubr.f32.mxu0 0.0
      %652 = vmatmul.mubr.f32.gmra.mxu0 %v543
      %v653 = vpop.f32.mrf.mxu0
      %v654 = vadd.f32 %v527, %v653
      %v655 = vpop.f32.mrf.mxu0
      %656 = vmatprep.mubr.f32.mxu0 0.0
      %657 = vmatmul.mubr.f32.gmra.mxu0 %v546
      %v658 = vpop.f32.mrf.mxu0
      %v659 = vadd.f32 %v527, %v658
      %v660 = vpop.f32.mrf.mxu0
      %661 = vmatprep.mubr.f32.mxu0 0.0
      %662 = vmatmul.mubr.f32.gmra.mxu0 %v549
      %v663 = vpop.f32.mrf.mxu0
      %v664 = vadd.f32 %v527, %v663
      %v665 = vpop.f32.mrf.mxu0
      %666 = vmatprep.mubr.f32.mxu0 0.0
      %667 = vmatmul.mubr.f32.gmra.mxu0 %v552
      %v668 = vpop.f32.mrf.mxu0
      %v669 = vadd.f32 %v527, %v668
      %v670 = vpop.f32.mrf.mxu0
      %671 = vmatprep.mubr.f32.mxu0 0.0
      %672 = vmatmul.mubr.f32.gmra.mxu0 %v555
      %v673 = vpop.f32.mrf.mxu0
      %v674 = vadd.f32 %v527, %v673
      %v675 = vpop.f32.mrf.mxu0
      %676 = vmatprep.mubr.f32.mxu0 0.0
      %677 = vmatmul.mubr.f32.gmra.mxu0 %v558
      %v678 = vpop.f32.mrf.mxu0
      %v679 = vadd.f32 %v527, %v678
      %v680 = vpop.f32.mrf.mxu0
      %681 = vmatprep.mubr.f32.mxu0 0.0
      %682 = vmatmul.mubr.f32.gmra.mxu0 %v561
      %v683 = vpop.f32.mrf.mxu0
      %v684 = vadd.f32 %v527, %v683
      %v685 = vpop.f32.mrf.mxu0
      %686 = vdwg.mxu0
      %v687 = vmax.f32 %v634, 0.0
      %v688 = vmax.f32 %v639, 0.0
      %v689 = vmax.f32 %v644, 0.0
      %v690 = vmax.f32 %v649, 0.0
      %v691 = vmax.f32 %v654, 0.0
      %v692 = vmax.f32 %v659, 0.0
      %v693 = vmax.f32 %v664, 0.0
      %v694 = vmax.f32 %v669, 0.0
      %v695 = vmax.f32 %v674, 0.0
      %v696 = vmax.f32 %v679, 0.0
      %v697 = vmax.f32 %v684, 0.0
      %v698 = vld [vmem:[%s4] sm:$0xff]
      %v699 = vld [vmem:[%s4 + $0x8] sm:$0xff]
      %v700 = vld [vmem:[%s4 + $0x10] sm:$0xff]
      %v701 = vld [vmem:[%s4 + $0x18] sm:$0xff]
      %v702 = vld [vmem:[%s4 + $0x20] sm:$0xff]
      %v703 = vld [vmem:[%s4 + $0x28] sm:$0xff]
      %v704 = vld [vmem:[%s4 + $0x30] sm:$0xff]
      %v705 = vld [vmem:[%s4 + $0x38] sm:$0xff]
      %v706 = vld [vmem:[%s4 + $0x40] sm:$0xff]
      %v707 = vld [vmem:[%s4 + $0x48] sm:$0xff]
      %v708 = vld [vmem:[%s4 + $0x50] sm:$0xff]
      %710 = vset.pattern.permute.xlu0 0
      %711 = vperm.xlu0 %710, %v698
      %v712 = vpop.permute.xlu0 %711
      %715 = vset.pattern.permute.xlu0 0
      %716 = vperm.xlu0 %715, %v699
      %v717 = vpop.permute.xlu0 %716
      %720 = vset.pattern.permute.xlu0 0
      %721 = vperm.xlu0 %720, %v700
      %v722 = vpop.permute.xlu0 %721
      %725 = vset.pattern.permute.xlu0 0
      %726 = vperm.xlu0 %725, %v701
      %v727 = vpop.permute.xlu0 %726
      %730 = vset.pattern.permute.xlu0 0
      %731 = vperm.xlu0 %730, %v702
      %v732 = vpop.permute.xlu0 %731
      %735 = vset.pattern.permute.xlu0 0
      %736 = vperm.xlu0 %735, %v703
      %v737 = vpop.permute.xlu0 %736
      %740 = vset.pattern.permute.xlu0 0
      %741 = vperm.xlu0 %740, %v704
      %v742 = vpop.permute.xlu0 %741
      %745 = vset.pattern.permute.xlu0 0
      %746 = vperm.xlu0 %745, %v705
      %v747 = vpop.permute.xlu0 %746
      %750 = vset.pattern.permute.xlu0 0
      %751 = vperm.xlu0 %750, %v706
      %v752 = vpop.permute.xlu0 %751
      %755 = vset.pattern.permute.xlu0 0
      %756 = vperm.xlu0 %755, %v707
      %v757 = vpop.permute.xlu0 %756
      %760 = vset.pattern.permute.xlu0 0
      %761 = vperm.xlu0 %760, %v708
      %v762 = vpop.permute.xlu0 %761
      %v764 = vmul.f32 %v687, %v712
      %v765 = vmul.f32 %v688, %v717
      %v766 = vmul.f32 %v689, %v722
      %v767 = vmul.f32 %v690, %v727
      %v768 = vmul.f32 %v691, %v732
      %v769 = vmul.f32 %v692, %v737
      %v770 = vmul.f32 %v693, %v742
      %v771 = vmul.f32 %v694, %v747
      %v772 = vmul.f32 %v695, %v752
      %v773 = vmul.f32 %v696, %v757
      %v774 = vmul.f32 %v697, %v762
      %vm775 = vcmask 15360
      %776 = vst.msk [vmem:[#allocation2] sm:$0xff] %vm775, %v764
      %777 = vst.msk [vmem:[#allocation2 + $0x8] sm:$0xff] %vm775, %v765
      %778 = vst.msk [vmem:[#allocation2 + $0x10] sm:$0xff] %vm775, %v766
      %779 = vst.msk [vmem:[#allocation2 + $0x18] sm:$0xff] %vm775, %v767
      %780 = vst.msk [vmem:[#allocation2 + $0x20] sm:$0xff] %vm775, %v768
      %781 = vst.msk [vmem:[#allocation2 + $0x28] sm:$0xff] %vm775, %v769
      %782 = vst.msk [vmem:[#allocation2 + $0x30] sm:$0xff] %vm775, %v770
      %783 = vst.msk [vmem:[#allocation2 + $0x38] sm:$0xff] %vm775, %v771
      %784 = vst.msk [vmem:[#allocation2 + $0x40] sm:$0xff] %vm775, %v772
      %785 = vst.msk [vmem:[#allocation2 + $0x48] sm:$0xff] %vm775, %v773
      %786 = vst.msk [vmem:[#allocation2 + $0x50] sm:$0xff] %vm775, %v774
      %v787 = vld [vmem:[%s490] sm:$0xff]
      %v788 = vld [vmem:[%s490 + $0x8] sm:$0xff]
      %v789 = vld [vmem:[%s490 + $0x10] sm:$0xff]
      %v790 = vld [vmem:[%s490 + $0x18] sm:$0xff]
      %v791 = vld [vmem:[%s490 + $0x20] sm:$0xff]
      %v792 = vld [vmem:[%s490 + $0x28] sm:$0xff]
      %v793 = vld [vmem:[%s490 + $0x30] sm:$0xff]
      %v794 = vld [vmem:[%s490 + $0x38] sm:$0xff]
      %v795 = vld [vmem:[%s490 + $0x40] sm:$0xff]
      %v796 = vld [vmem:[%s490 + $0x48] sm:$0xff]
      %v797 = vld [vmem:[%s490 + $0x50] sm:$0xff]
      %v799 = vsel %vm529, %v787, 0
      %v802 = vsel %vm529, %v788, 0
      %v805 = vsel %vm529, %v789, 0
      %v808 = vsel %vm529, %v790, 0
      %v811 = vsel %vm529, %v791, 0
      %v814 = vsel %vm529, %v792, 0
      %v817 = vsel %vm529, %v793, 0
      %v820 = vsel %vm529, %v794, 0
      %v823 = vsel %vm529, %v795, 0
      %v826 = vsel %vm529, %v796, 0
      %v829 = vsel %vm529, %v797, 0
      %831 = vmatprep.subr.mxu0 0.0
      %832 = vmatpush1.msra.mxu0 0.0
      %833 = vmatprep.subr.mxu0 0.0
      %834 = vmatpush1.msra.mxu0 0.0
      %835 = vmatprep.subr.mxu0 0.0
      %836 = vmatpush1.msra.mxu0 0.0
      %837 = vmatprep.subr.mxu0 0.0
      %838 = vmatpush1.msra.mxu0 0.0
      %839 = vmatprep.subr.mxu0 0.0
      %840 = vmatpush1.msra.mxu0 0.0
      %841 = vmatprep.subr.mxu0 0.0
      %842 = vmatpush1.msra.mxu0 0.0
      %843 = vmatprep.subr.mxu0 0.0
      %844 = vmatpush1.msra.mxu0 0.0
      %845 = vmatprep.subr.mxu0 0.0
      %846 = vmatpush1.msra.mxu0 0.0
      %847 = vmatprep.subr.mxu0 0.0
      %848 = vmatpush1.msra.mxu0 0.0
      %849 = vmatprep.subr.mxu0 0.0
      %850 = vmatpush1.msra.mxu0 0.0
      %851 = vmatprep.subr.mxu0 0.0
      %852 = vmatpush1.msra.mxu0 0.0
      %853 = vmatprep.subr.mxu0 0.0
      %854 = vmatpush1.msra.mxu0 0.0
      %855 = vmatprep.subr.mxu0 0.0
      %856 = vmatpush1.msra.mxu0 0.0
      %857 = vmatprep.subr.mxu0 0.0
      %858 = vmatpush1.msra.mxu0 0.0
      %859 = vmatprep.subr.mxu0 0.0
      %860 = vmatpush1.msra.mxu0 0.0
      %861 = vmatprep.subr.mxu0 0.0
      %862 = vmatpush1.msra.mxu0 %v565
      %863 = vmatprep.subr.mxu0 0.0
      %864 = vmatpush2.msra.mxu0 0.0
      %865 = vmatprep.subr.mxu0 0.0
      %866 = vmatpush2.msra.mxu0 0.0
      %867 = vmatprep.subr.mxu0 0.0
      %868 = vmatpush2.msra.mxu0 0.0
      %869 = vmatprep.subr.mxu0 0.0
      %870 = vmatpush2.msra.mxu0 0.0
      %871 = vmatprep.subr.mxu0 0.0
      %872 = vmatpush2.msra.mxu0 0.0
      %873 = vmatprep.subr.mxu0 0.0
      %874 = vmatpush2.msra.mxu0 0.0
      %875 = vmatprep.subr.mxu0 0.0
      %876 = vmatpush2.msra.mxu0 0.0
      %877 = vmatprep.subr.mxu0 0.0
      %878 = vmatpush2.msra.mxu0 0.0
      %879 = vmatprep.subr.mxu0 0.0
      %880 = vmatpush2.msra.mxu0 0.0
      %881 = vmatprep.subr.mxu0 0.0
      %882 = vmatpush2.msra.mxu0 0.0
      %883 = vmatprep.subr.mxu0 0.0
      %884 = vmatpush2.msra.mxu0 0.0
      %885 = vmatprep.subr.mxu0 0.0
      %886 = vmatpush2.msra.mxu0 0.0
      %887 = vmatprep.subr.mxu0 0.0
      %888 = vmatpush2.msra.mxu0 0.0
      %889 = vmatprep.subr.mxu0 0.0
      %890 = vmatpush2.msra.mxu0 0.0
      %891 = vmatprep.subr.mxu0 0.0
      %892 = vmatpush2.msra.mxu0 0.0
      %893 = vmatprep.subr.mxu0 0.0
      %894 = vmatpush2.msra.mxu0 0.0
      %895 = vmatprep.mubr.f32.mxu0 0.0
      %896 = vmatmul.mubr.f32.gmra.mxu0 %v799
      %v897 = vpop.f32.mrf.mxu0
      %v898 = vadd.f32 %v527, %v897
      %v899 = vpop.f32.mrf.mxu0
      %900 = vmatprep.mubr.f32.mxu0 0.0
      %901 = vmatmul.mubr.f32.gmra.mxu0 %v802
      %v902 = vpop.f32.mrf.mxu0
      %v903 = vadd.f32 %v527, %v902
      %v904 = vpop.f32.mrf.mxu0
      %905 = vmatprep.mubr.f32.mxu0 0.0
      %906 = vmatmul.mubr.f32.gmra.mxu0 %v805
      %v907 = vpop.f32.mrf.mxu0
      %v908 = vadd.f32 %v527, %v907
      %v909 = vpop.f32.mrf.mxu0
      %910 = vmatprep.mubr.f32.mxu0 0.0
      %911 = vmatmul.mubr.f32.gmra.mxu0 %v808
      %v912 = vpop.f32.mrf.mxu0
      %v913 = vadd.f32 %v527, %v912
      %v914 = vpop.f32.mrf.mxu0
      %915 = vmatprep.mubr.f32.mxu0 0.0
      %916 = vmatmul.mubr.f32.gmra.mxu0 %v811
      %v917 = vpop.f32.mrf.mxu0
      %v918 = vadd.f32 %v527, %v917
      %v919 = vpop.f32.mrf.mxu0
      %920 = vmatprep.mubr.f32.mxu0 0.0
      %921 = vmatmul.mubr.f32.gmra.mxu0 %v814
      %v922 = vpop.f32.mrf.mxu0
      %v923 = vadd.f32 %v527, %v922
      %v924 = vpop.f32.mrf.mxu0
      %925 = vmatprep.mubr.f32.mxu0 0.0
      %926 = vmatmul.mubr.f32.gmra.mxu0 %v817
      %v927 = vpop.f32.mrf.mxu0
      %v928 = vadd.f32 %v527, %v927
      %v929 = vpop.f32.mrf.mxu0
      %930 = vmatprep.mubr.f32.mxu0 0.0
      %931 = vmatmul.mubr.f32.gmra.mxu0 %v820
      %v932 = vpop.f32.mrf.mxu0
      %v933 = vadd.f32 %v527, %v932
      %v934 = vpop.f32.mrf.mxu0
      %935 = vmatprep.mubr.f32.mxu0 0.0
      %936 = vmatmul.mubr.f32.gmra.mxu0 %v823
      %v937 = vpop.f32.mrf.mxu0
      %v938 = vadd.f32 %v527, %v937
      %v939 = vpop.f32.mrf.mxu0
      %940 = vmatprep.mubr.f32.mxu0 0.0
      %941 = vmatmul.mubr.f32.gmra.mxu0 %v826
      %v942 = vpop.f32.mrf.mxu0
      %v943 = vadd.f32 %v527, %v942
      %v944 = vpop.f32.mrf.mxu0
      %945 = vmatprep.mubr.f32.mxu0 0.0
      %946 = vmatmul.mubr.f32.gmra.mxu0 %v829
      %v947 = vpop.f32.mrf.mxu0
      %v948 = vadd.f32 %v527, %v947
      %v949 = vpop.f32.mrf.mxu0
      %950 = vdwg.mxu0
      %v951 = vmax.f32 %v898, 0.0
      %v952 = vmax.f32 %v903, 0.0
      %v953 = vmax.f32 %v908, 0.0
      %v954 = vmax.f32 %v913, 0.0
      %v955 = vmax.f32 %v918, 0.0
      %v956 = vmax.f32 %v923, 0.0
      %v957 = vmax.f32 %v928, 0.0
      %v958 = vmax.f32 %v933, 0.0
      %v959 = vmax.f32 %v938, 0.0
      %v960 = vmax.f32 %v943, 0.0
      %v961 = vmax.f32 %v948, 0.0
      %v962 = vld [vmem:[%s4 + $0x58] sm:$0xff]
      %v963 = vld [vmem:[%s4 + $0x60] sm:$0xff]
      %v964 = vld [vmem:[%s4 + $0x68] sm:$0xff]
      %v965 = vld [vmem:[%s4 + $0x70] sm:$0xff]
      %v966 = vld [vmem:[%s4 + $0x78] sm:$0xff]
      %v967 = vld [vmem:[%s4 + $0x80] sm:$0xff]
      %v968 = vld [vmem:[%s4 + $0x88] sm:$0xff]
      %v969 = vld [vmem:[%s4 + $0x90] sm:$0xff]
      %v970 = vld [vmem:[%s4 + $0x98] sm:$0xff]
      %v971 = vld [vmem:[%s4 + $0xa0] sm:$0xff]
      %v972 = vld [vmem:[%s4 + $0xa8] sm:$0xff]
      %974 = vset.pattern.permute.xlu0 0
      %975 = vperm.xlu0 %974, %v962
      %v976 = vpop.permute.xlu0 %975
      %979 = vset.pattern.permute.xlu0 0
      %980 = vperm.xlu0 %979, %v963
      %v981 = vpop.permute.xlu0 %980
      %984 = vset.pattern.permute.xlu0 0
      %985 = vperm.xlu0 %984, %v964
      %v986 = vpop.permute.xlu0 %985
      %989 = vset.pattern.permute.xlu0 0
      %990 = vperm.xlu0 %989, %v965
      %v991 = vpop.permute.xlu0 %990
      %994 = vset.pattern.permute.xlu0 0
      %995 = vperm.xlu0 %994, %v966
      %v996 = vpop.permute.xlu0 %995
      %999 = vset.pattern.permute.xlu0 0
      %1000 = vperm.xlu0 %999, %v967
      %v1001 = vpop.permute.xlu0 %1000
      %1004 = vset.pattern.permute.xlu0 0
      %1005 = vperm.xlu0 %1004, %v968
      %v1006 = vpop.permute.xlu0 %1005
      %1009 = vset.pattern.permute.xlu0 0
      %1010 = vperm.xlu0 %1009, %v969
      %v1011 = vpop.permute.xlu0 %1010
      %1014 = vset.pattern.permute.xlu0 0
      %1015 = vperm.xlu0 %1014, %v970
      %v1016 = vpop.permute.xlu0 %1015
      %1019 = vset.pattern.permute.xlu0 0
      %1020 = vperm.xlu0 %1019, %v971
      %v1021 = vpop.permute.xlu0 %1020
      %1024 = vset.pattern.permute.xlu0 0
      %1025 = vperm.xlu0 %1024, %v972
      %v1026 = vpop.permute.xlu0 %1025
      %v1028 = vmul.f32 %v951, %v976
      %v1029 = vmul.f32 %v952, %v981
      %v1030 = vmul.f32 %v953, %v986
      %v1031 = vmul.f32 %v954, %v991
      %v1032 = vmul.f32 %v955, %v996
      %v1033 = vmul.f32 %v956, %v1001
      %v1034 = vmul.f32 %v957, %v1006
      %v1035 = vmul.f32 %v958, %v1011
      %v1036 = vmul.f32 %v959, %v1016
      %v1037 = vmul.f32 %v960, %v1021
      %v1038 = vmul.f32 %v961, %v1026
      %1039 = vst.msk [vmem:[#allocation2 + $0x58] sm:$0xff] %vm775, %v1028
      %1040 = vst.msk [vmem:[#allocation2 + $0x60] sm:$0xff] %vm775, %v1029
      %1041 = vst.msk [vmem:[#allocation2 + $0x68] sm:$0xff] %vm775, %v1030
      %1042 = vst.msk [vmem:[#allocation2 + $0x70] sm:$0xff] %vm775, %v1031
      %1043 = vst.msk [vmem:[#allocation2 + $0x78] sm:$0xff] %vm775, %v1032
      %1044 = vst.msk [vmem:[#allocation2 + $0x80] sm:$0xff] %vm775, %v1033
      %1045 = vst.msk [vmem:[#allocation2 + $0x88] sm:$0xff] %vm775, %v1034
      %1046 = vst.msk [vmem:[#allocation2 + $0x90] sm:$0xff] %vm775, %v1035
      %1047 = vst.msk [vmem:[#allocation2 + $0x98] sm:$0xff] %vm775, %v1036
      %1048 = vst.msk [vmem:[#allocation2 + $0xa0] sm:$0xff] %vm775, %v1037
      %1049 = vst.msk [vmem:[#allocation2 + $0xa8] sm:$0xff] %vm775, %v1038
      %v1050 = vld [vmem:[%s496] sm:$0xff]
      %v1051 = vld [vmem:[%s496 + $0x8] sm:$0xff]
      %v1052 = vld [vmem:[%s496 + $0x10] sm:$0xff]
      %v1053 = vld [vmem:[%s496 + $0x18] sm:$0xff]
      %v1054 = vld [vmem:[%s496 + $0x20] sm:$0xff]
      %v1055 = vld [vmem:[%s496 + $0x28] sm:$0xff]
      %v1056 = vld [vmem:[%s496 + $0x30] sm:$0xff]
      %v1057 = vld [vmem:[%s496 + $0x38] sm:$0xff]
      %v1058 = vld [vmem:[%s496 + $0x40] sm:$0xff]
      %v1059 = vld [vmem:[%s496 + $0x48] sm:$0xff]
      %v1060 = vld [vmem:[%s496 + $0x50] sm:$0xff]
      %v1062 = vsel %vm529, %v1050, 0
      %v1065 = vsel %vm529, %v1051, 0
      %v1068 = vsel %vm529, %v1052, 0
      %v1071 = vsel %vm529, %v1053, 0
      %v1074 = vsel %vm529, %v1054, 0
      %v1077 = vsel %vm529, %v1055, 0
      %v1080 = vsel %vm529, %v1056, 0
      %v1083 = vsel %vm529, %v1057, 0
      %v1086 = vsel %vm529, %v1058, 0
      %v1089 = vsel %vm529, %v1059, 0
      %v1092 = vsel %vm529, %v1060, 0
      %1094 = vmatprep.subr.mxu0 0.0
      %1095 = vmatpush1.msra.mxu0 0.0
      %1096 = vmatprep.subr.mxu0 0.0
      %1097 = vmatpush1.msra.mxu0 0.0
      %1098 = vmatprep.subr.mxu0 0.0
      %1099 = vmatpush1.msra.mxu0 0.0
      %1100 = vmatprep.subr.mxu0 0.0
      %1101 = vmatpush1.msra.mxu0 0.0
      %1102 = vmatprep.subr.mxu0 0.0
      %1103 = vmatpush1.msra.mxu0 0.0
      %1104 = vmatprep.subr.mxu0 0.0
      %1105 = vmatpush1.msra.mxu0 0.0
      %1106 = vmatprep.subr.mxu0 0.0
      %1107 = vmatpush1.msra.mxu0 0.0
      %1108 = vmatprep.subr.mxu0 0.0
      %1109 = vmatpush1.msra.mxu0 0.0
      %1110 = vmatprep.subr.mxu0 0.0
      %1111 = vmatpush1.msra.mxu0 0.0
      %1112 = vmatprep.subr.mxu0 0.0
      %1113 = vmatpush1.msra.mxu0 0.0
      %1114 = vmatprep.subr.mxu0 0.0
      %1115 = vmatpush1.msra.mxu0 0.0
      %1116 = vmatprep.subr.mxu0 0.0
      %1117 = vmatpush1.msra.mxu0 0.0
      %1118 = vmatprep.subr.mxu0 0.0
      %1119 = vmatpush1.msra.mxu0 0.0
      %1120 = vmatprep.subr.mxu0 0.0
      %1121 = vmatpush1.msra.mxu0 0.0
      %1122 = vmatprep.subr.mxu0 0.0
      %1123 = vmatpush1.msra.mxu0 0.0
      %1124 = vmatprep.subr.mxu0 0.0
      %1125 = vmatpush1.msra.mxu0 %v565
      %1126 = vmatprep.subr.mxu0 0.0
      %1127 = vmatpush2.msra.mxu0 0.0
      %1128 = vmatprep.subr.mxu0 0.0
      %1129 = vmatpush2.msra.mxu0 0.0
      %1130 = vmatprep.subr.mxu0 0.0
      %1131 = vmatpush2.msra.mxu0 0.0
      %1132 = vmatprep.subr.mxu0 0.0
      %1133 = vmatpush2.msra.mxu0 0.0
      %1134 = vmatprep.subr.mxu0 0.0
      %1135 = vmatpush2.msra.mxu0 0.0
      %1136 = vmatprep.subr.mxu0 0.0
      %1137 = vmatpush2.msra.mxu0 0.0
      %1138 = vmatprep.subr.mxu0 0.0
      %1139 = vmatpush2.msra.mxu0 0.0
      %1140 = vmatprep.subr.mxu0 0.0
      %1141 = vmatpush2.msra.mxu0 0.0
      %1142 = vmatprep.subr.mxu0 0.0
      %1143 = vmatpush2.msra.mxu0 0.0
      %1144 = vmatprep.subr.mxu0 0.0
      %1145 = vmatpush2.msra.mxu0 0.0
      %1146 = vmatprep.subr.mxu0 0.0
      %1147 = vmatpush2.msra.mxu0 0.0
      %1148 = vmatprep.subr.mxu0 0.0
      %1149 = vmatpush2.msra.mxu0 0.0
      %1150 = vmatprep.subr.mxu0 0.0
      %1151 = vmatpush2.msra.mxu0 0.0
      %1152 = vmatprep.subr.mxu0 0.0
      %1153 = vmatpush2.msra.mxu0 0.0
      %1154 = vmatprep.subr.mxu0 0.0
      %1155 = vmatpush2.msra.mxu0 0.0
      %1156 = vmatprep.subr.mxu0 0.0
      %1157 = vmatpush2.msra.mxu0 0.0
      %1158 = vmatprep.mubr.f32.mxu0 0.0
      %1159 = vmatmul.mubr.f32.gmra.mxu0 %v1062
      %v1160 = vpop.f32.mrf.mxu0
      %v1161 = vadd.f32 %v527, %v1160
      %v1162 = vpop.f32.mrf.mxu0
      %1163 = vmatprep.mubr.f32.mxu0 0.0
      %1164 = vmatmul.mubr.f32.gmra.mxu0 %v1065
      %v1165 = vpop.f32.mrf.mxu0
      %v1166 = vadd.f32 %v527, %v1165
      %v1167 = vpop.f32.mrf.mxu0
      %1168 = vmatprep.mubr.f32.mxu0 0.0
      %1169 = vmatmul.mubr.f32.gmra.mxu0 %v1068
      %v1170 = vpop.f32.mrf.mxu0
      %v1171 = vadd.f32 %v527, %v1170
      %v1172 = vpop.f32.mrf.mxu0
      %1173 = vmatprep.mubr.f32.mxu0 0.0
      %1174 = vmatmul.mubr.f32.gmra.mxu0 %v1071
      %v1175 = vpop.f32.mrf.mxu0
      %v1176 = vadd.f32 %v527, %v1175
      %v1177 = vpop.f32.mrf.mxu0
      %1178 = vmatprep.mubr.f32.mxu0 0.0
      %1179 = vmatmul.mubr.f32.gmra.mxu0 %v1074
      %v1180 = vpop.f32.mrf.mxu0
      %v1181 = vadd.f32 %v527, %v1180
      %v1182 = vpop.f32.mrf.mxu0
      %1183 = vmatprep.mubr.f32.mxu0 0.0
      %1184 = vmatmul.mubr.f32.gmra.mxu0 %v1077
      %v1185 = vpop.f32.mrf.mxu0
      %v1186 = vadd.f32 %v527, %v1185
      %v1187 = vpop.f32.mrf.mxu0
      %1188 = vmatprep.mubr.f32.mxu0 0.0
      %1189 = vmatmul.mubr.f32.gmra.mxu0 %v1080
      %v1190 = vpop.f32.mrf.mxu0
      %v1191 = vadd.f32 %v527, %v1190
      %v1192 = vpop.f32.mrf.mxu0
      %1193 = vmatprep.mubr.f32.mxu0 0.0
      %1194 = vmatmul.mubr.f32.gmra.mxu0 %v1083
      %v1195 = vpop.f32.mrf.mxu0
      %v1196 = vadd.f32 %v527, %v1195
      %v1197 = vpop.f32.mrf.mxu0
      %1198 = vmatprep.mubr.f32.mxu0 0.0
      %1199 = vmatmul.mubr.f32.gmra.mxu0 %v1086
      %v1200 = vpop.f32.mrf.mxu0
      %v1201 = vadd.f32 %v527, %v1200
      %v1202 = vpop.f32.mrf.mxu0
      %1203 = vmatprep.mubr.f32.mxu0 0.0
      %1204 = vmatmul.mubr.f32.gmra.mxu0 %v1089
      %v1205 = vpop.f32.mrf.mxu0
      %v1206 = vadd.f32 %v527, %v1205
      %v1207 = vpop.f32.mrf.mxu0
      %1208 = vmatprep.mubr.f32.mxu0 0.0
      %1209 = vmatmul.mubr.f32.gmra.mxu0 %v1092
      %v1210 = vpop.f32.mrf.mxu0
      %v1211 = vadd.f32 %v527, %v1210
      %v1212 = vpop.f32.mrf.mxu0
      %1213 = vdwg.mxu0
      %v1214 = vmax.f32 %v1161, 0.0
      %v1215 = vmax.f32 %v1166, 0.0
      %v1216 = vmax.f32 %v1171, 0.0
      %v1217 = vmax.f32 %v1176, 0.0
      %v1218 = vmax.f32 %v1181, 0.0
      %v1219 = vmax.f32 %v1186, 0.0
      %v1220 = vmax.f32 %v1191, 0.0
      %v1221 = vmax.f32 %v1196, 0.0
      %v1222 = vmax.f32 %v1201, 0.0
      %v1223 = vmax.f32 %v1206, 0.0
      %v1224 = vmax.f32 %v1211, 0.0
      %v1225 = vld [vmem:[%s4 + $0xb0] sm:$0xff]
      %v1226 = vld [vmem:[%s4 + $0xb8] sm:$0xff]
      %v1227 = vld [vmem:[%s4 + $0xc0] sm:$0xff]
      %v1228 = vld [vmem:[%s4 + $0xc8] sm:$0xff]
      %v1229 = vld [vmem:[%s4 + $0xd0] sm:$0xff]
      %v1230 = vld [vmem:[%s4 + $0xd8] sm:$0xff]
      %v1231 = vld [vmem:[%s4 + $0xe0] sm:$0xff]
      %v1232 = vld [vmem:[%s4 + $0xe8] sm:$0xff]
      %v1233 = vld [vmem:[%s4 + $0xf0] sm:$0xff]
      %v1234 = vld [vmem:[%s4 + $0xf8] sm:$0xff]
      %v1235 = vld [vmem:[%s4 + $0x100] sm:$0xff]
      %1237 = vset.pattern.permute.xlu0 0
      %1238 = vperm.xlu0 %1237, %v1225
      %v1239 = vpop.permute.xlu0 %1238
      %1242 = vset.pattern.permute.xlu0 0
      %1243 = vperm.xlu0 %1242, %v1226
      %v1244 = vpop.permute.xlu0 %1243
      %1247 = vset.pattern.permute.xlu0 0
      %1248 = vperm.xlu0 %1247, %v1227
      %v1249 = vpop.permute.xlu0 %1248
      %1252 = vset.pattern.permute.xlu0 0
      %1253 = vperm.xlu0 %1252, %v1228
      %v1254 = vpop.permute.xlu0 %1253
      %1257 = vset.pattern.permute.xlu0 0
      %1258 = vperm.xlu0 %1257, %v1229
      %v1259 = vpop.permute.xlu0 %1258
      %1262 = vset.pattern.permute.xlu0 0
      %1263 = vperm.xlu0 %1262, %v1230
      %v1264 = vpop.permute.xlu0 %1263
      %1267 = vset.pattern.permute.xlu0 0
      %1268 = vperm.xlu0 %1267, %v1231
      %v1269 = vpop.permute.xlu0 %1268
      %1272 = vset.pattern.permute.xlu0 0
      %1273 = vperm.xlu0 %1272, %v1232
      %v1274 = vpop.permute.xlu0 %1273
      %1277 = vset.pattern.permute.xlu0 0
      %1278 = vperm.xlu0 %1277, %v1233
      %v1279 = vpop.permute.xlu0 %1278
      %1282 = vset.pattern.permute.xlu0 0
      %1283 = vperm.xlu0 %1282, %v1234
      %v1284 = vpop.permute.xlu0 %1283
      %1287 = vset.pattern.permute.xlu0 0
      %1288 = vperm.xlu0 %1287, %v1235
      %v1289 = vpop.permute.xlu0 %1288
      %v1291 = vmul.f32 %v1214, %v1239
      %v1292 = vmul.f32 %v1215, %v1244
      %v1293 = vmul.f32 %v1216, %v1249
      %v1294 = vmul.f32 %v1217, %v1254
      %v1295 = vmul.f32 %v1218, %v1259
      %v1296 = vmul.f32 %v1219, %v1264
      %v1297 = vmul.f32 %v1220, %v1269
      %v1298 = vmul.f32 %v1221, %v1274
      %v1299 = vmul.f32 %v1222, %v1279
      %v1300 = vmul.f32 %v1223, %v1284
      %v1301 = vmul.f32 %v1224, %v1289
      %1302 = vst.msk [vmem:[#allocation2 + $0xb0] sm:$0xff] %vm775, %v1291
      %1303 = vst.msk [vmem:[#allocation2 + $0xb8] sm:$0xff] %vm775, %v1292
      %1304 = vst.msk [vmem:[#allocation2 + $0xc0] sm:$0xff] %vm775, %v1293
      %1305 = vst.msk [vmem:[#allocation2 + $0xc8] sm:$0xff] %vm775, %v1294
      %1306 = vst.msk [vmem:[#allocation2 + $0xd0] sm:$0xff] %vm775, %v1295
      %1307 = vst.msk [vmem:[#allocation2 + $0xd8] sm:$0xff] %vm775, %v1296
      %1308 = vst.msk [vmem:[#allocation2 + $0xe0] sm:$0xff] %vm775, %v1297
      %1309 = vst.msk [vmem:[#allocation2 + $0xe8] sm:$0xff] %vm775, %v1298
      %1310 = vst.msk [vmem:[#allocation2 + $0xf0] sm:$0xff] %vm775, %v1299
      %1311 = vst.msk [vmem:[#allocation2 + $0xf8] sm:$0xff] %vm775, %v1300
      %1312 = vst.msk [vmem:[#allocation2 + $0x100] sm:$0xff] %vm775, %v1301
      %v1313 = vld [vmem:[%s502] sm:$0xff]
      %v1314 = vld [vmem:[%s502 + $0x8] sm:$0xff]
      %v1315 = vld [vmem:[%s502 + $0x10] sm:$0xff]
      %v1316 = vld [vmem:[%s502 + $0x18] sm:$0xff]
      %v1317 = vld [vmem:[%s502 + $0x20] sm:$0xff]
      %v1318 = vld [vmem:[%s502 + $0x28] sm:$0xff]
      %v1319 = vld [vmem:[%s502 + $0x30] sm:$0xff]
      %v1320 = vld [vmem:[%s502 + $0x38] sm:$0xff]
      %v1321 = vld [vmem:[%s502 + $0x40] sm:$0xff]
      %v1322 = vld [vmem:[%s502 + $0x48] sm:$0xff]
      %v1323 = vld [vmem:[%s502 + $0x50] sm:$0xff]
      %v1325 = vsel %vm529, %v1313, 0
      %v1328 = vsel %vm529, %v1314, 0
      %v1331 = vsel %vm529, %v1315, 0
      %v1334 = vsel %vm529, %v1316, 0
      %v1337 = vsel %vm529, %v1317, 0
      %v1340 = vsel %vm529, %v1318, 0
      %v1343 = vsel %vm529, %v1319, 0
      %v1346 = vsel %vm529, %v1320, 0
      %v1349 = vsel %vm529, %v1321, 0
      %v1352 = vsel %vm529, %v1322, 0
      %v1355 = vsel %vm529, %v1323, 0
      %1357 = vmatprep.subr.mxu0 0.0
      %1358 = vmatpush1.msra.mxu0 0.0
      %1359 = vmatprep.subr.mxu0 0.0
      %1360 = vmatpush1.msra.mxu0 0.0
      %1361 = vmatprep.subr.mxu0 0.0
      %1362 = vmatpush1.msra.mxu0 0.0
      %1363 = vmatprep.subr.mxu0 0.0
      %1364 = vmatpush1.msra.mxu0 0.0
      %1365 = vmatprep.subr.mxu0 0.0
      %1366 = vmatpush1.msra.mxu0 0.0
      %1367 = vmatprep.subr.mxu0 0.0
      %1368 = vmatpush1.msra.mxu0 0.0
      %1369 = vmatprep.subr.mxu0 0.0
      %1370 = vmatpush1.msra.mxu0 0.0
      %1371 = vmatprep.subr.mxu0 0.0
      %1372 = vmatpush1.msra.mxu0 0.0
      %1373 = vmatprep.subr.mxu0 0.0
      %1374 = vmatpush1.msra.mxu0 0.0
      %1375 = vmatprep.subr.mxu0 0.0
      %1376 = vmatpush1.msra.mxu0 0.0
      %1377 = vmatprep.subr.mxu0 0.0
      %1378 = vmatpush1.msra.mxu0 0.0
      %1379 = vmatprep.subr.mxu0 0.0
      %1380 = vmatpush1.msra.mxu0 0.0
      %1381 = vmatprep.subr.mxu0 0.0
      %1382 = vmatpush1.msra.mxu0 0.0
      %1383 = vmatprep.subr.mxu0 0.0
      %1384 = vmatpush1.msra.mxu0 0.0
      %1385 = vmatprep.subr.mxu0 0.0
      %1386 = vmatpush1.msra.mxu0 0.0
      %1387 = vmatprep.subr.mxu0 0.0
      %1388 = vmatpush1.msra.mxu0 %v565
      %1389 = vmatprep.subr.mxu0 0.0
      %1390 = vmatpush2.msra.mxu0 0.0
      %1391 = vmatprep.subr.mxu0 0.0
      %1392 = vmatpush2.msra.mxu0 0.0
      %1393 = vmatprep.subr.mxu0 0.0
      %1394 = vmatpush2.msra.mxu0 0.0
      %1395 = vmatprep.subr.mxu0 0.0
      %1396 = vmatpush2.msra.mxu0 0.0
      %1397 = vmatprep.subr.mxu0 0.0
      %1398 = vmatpush2.msra.mxu0 0.0
      %1399 = vmatprep.subr.mxu0 0.0
      %1400 = vmatpush2.msra.mxu0 0.0
      %1401 = vmatprep.subr.mxu0 0.0
      %1402 = vmatpush2.msra.mxu0 0.0
      %1403 = vmatprep.subr.mxu0 0.0
      %1404 = vmatpush2.msra.mxu0 0.0
      %1405 = vmatprep.subr.mxu0 0.0
      %1406 = vmatpush2.msra.mxu0 0.0
      %1407 = vmatprep.subr.mxu0 0.0
      %1408 = vmatpush2.msra.mxu0 0.0
      %1409 = vmatprep.subr.mxu0 0.0
      %1410 = vmatpush2.msra.mxu0 0.0
      %1411 = vmatprep.subr.mxu0 0.0
      %1412 = vmatpush2.msra.mxu0 0.0
      %1413 = vmatprep.subr.mxu0 0.0
      %1414 = vmatpush2.msra.mxu0 0.0
      %1415 = vmatprep.subr.mxu0 0.0
      %1416 = vmatpush2.msra.mxu0 0.0
      %1417 = vmatprep.subr.mxu0 0.0
      %1418 = vmatpush2.msra.mxu0 0.0
      %1419 = vmatprep.subr.mxu0 0.0
      %1420 = vmatpush2.msra.mxu0 0.0
      %1421 = vmatprep.mubr.f32.mxu0 0.0
      %1422 = vmatmul.mubr.f32.gmra.mxu0 %v1325
      %v1423 = vpop.f32.mrf.mxu0
      %v1424 = vadd.f32 %v527, %v1423
      %v1425 = vpop.f32.mrf.mxu0
      %1426 = vmatprep.mubr.f32.mxu0 0.0
      %1427 = vmatmul.mubr.f32.gmra.mxu0 %v1328
      %v1428 = vpop.f32.mrf.mxu0
      %v1429 = vadd.f32 %v527, %v1428
      %v1430 = vpop.f32.mrf.mxu0
      %1431 = vmatprep.mubr.f32.mxu0 0.0
      %1432 = vmatmul.mubr.f32.gmra.mxu0 %v1331
      %v1433 = vpop.f32.mrf.mxu0
      %v1434 = vadd.f32 %v527, %v1433
      %v1435 = vpop.f32.mrf.mxu0
      %1436 = vmatprep.mubr.f32.mxu0 0.0
      %1437 = vmatmul.mubr.f32.gmra.mxu0 %v1334
      %v1438 = vpop.f32.mrf.mxu0
      %v1439 = vadd.f32 %v527, %v1438
      %v1440 = vpop.f32.mrf.mxu0
      %1441 = vmatprep.mubr.f32.mxu0 0.0
      %1442 = vmatmul.mubr.f32.gmra.mxu0 %v1337
      %v1443 = vpop.f32.mrf.mxu0
      %v1444 = vadd.f32 %v527, %v1443
      %v1445 = vpop.f32.mrf.mxu0
      %1446 = vmatprep.mubr.f32.mxu0 0.0
      %1447 = vmatmul.mubr.f32.gmra.mxu0 %v1340
      %v1448 = vpop.f32.mrf.mxu0
      %v1449 = vadd.f32 %v527, %v1448
      %v1450 = vpop.f32.mrf.mxu0
      %1451 = vmatprep.mubr.f32.mxu0 0.0
      %1452 = vmatmul.mubr.f32.gmra.mxu0 %v1343
      %v1453 = vpop.f32.mrf.mxu0
      %v1454 = vadd.f32 %v527, %v1453
      %v1455 = vpop.f32.mrf.mxu0
      %1456 = vmatprep.mubr.f32.mxu0 0.0
      %1457 = vmatmul.mubr.f32.gmra.mxu0 %v1346
      %v1458 = vpop.f32.mrf.mxu0
      %v1459 = vadd.f32 %v527, %v1458
      %v1460 = vpop.f32.mrf.mxu0
      %1461 = vmatprep.mubr.f32.mxu0 0.0
      %1462 = vmatmul.mubr.f32.gmra.mxu0 %v1349
      %v1463 = vpop.f32.mrf.mxu0
      %v1464 = vadd.f32 %v527, %v1463
      %v1465 = vpop.f32.mrf.mxu0
      %1466 = vmatprep.mubr.f32.mxu0 0.0
      %1467 = vmatmul.mubr.f32.gmra.mxu0 %v1352
      %v1468 = vpop.f32.mrf.mxu0
      %v1469 = vadd.f32 %v527, %v1468
      %v1470 = vpop.f32.mrf.mxu0
      %1471 = vmatprep.mubr.f32.mxu0 0.0
      %1472 = vmatmul.mubr.f32.gmra.mxu0 %v1355
      %v1473 = vpop.f32.mrf.mxu0
      %v1474 = vadd.f32 %v527, %v1473
      %v1475 = vpop.f32.mrf.mxu0
      %1476 = vdwg.mxu0
      %v1477 = vmax.f32 %v1424, 0.0
      %v1478 = vmax.f32 %v1429, 0.0
      %v1479 = vmax.f32 %v1434, 0.0
      %v1480 = vmax.f32 %v1439, 0.0
      %v1481 = vmax.f32 %v1444, 0.0
      %v1482 = vmax.f32 %v1449, 0.0
      %v1483 = vmax.f32 %v1454, 0.0
      %v1484 = vmax.f32 %v1459, 0.0
      %v1485 = vmax.f32 %v1464, 0.0
      %v1486 = vmax.f32 %v1469, 0.0
      %v1487 = vmax.f32 %v1474, 0.0
      %v1488 = vld [vmem:[%s4 + $0x108] sm:$0xff]
      %v1489 = vld [vmem:[%s4 + $0x110] sm:$0xff]
      %v1490 = vld [vmem:[%s4 + $0x118] sm:$0xff]
      %v1491 = vld [vmem:[%s4 + $0x120] sm:$0xff]
      %v1492 = vld [vmem:[%s4 + $0x128] sm:$0xff]
      %v1493 = vld [vmem:[%s4 + $0x130] sm:$0xff]
      %v1494 = vld [vmem:[%s4 + $0x138] sm:$0xff]
      %v1495 = vld [vmem:[%s4 + $0x140] sm:$0xff]
      %v1496 = vld [vmem:[%s4 + $0x148] sm:$0xff]
      %v1497 = vld [vmem:[%s4 + $0x150] sm:$0xff]
      %v1498 = vld [vmem:[%s4 + $0x158] sm:$0xff]
      %1500 = vset.pattern.permute.xlu0 0
      %1501 = vperm.xlu0 %1500, %v1488
      %v1502 = vpop.permute.xlu0 %1501
      %1505 = vset.pattern.permute.xlu0 0
      %1506 = vperm.xlu0 %1505, %v1489
      %v1507 = vpop.permute.xlu0 %1506
      %1510 = vset.pattern.permute.xlu0 0
      %1511 = vperm.xlu0 %1510, %v1490
      %v1512 = vpop.permute.xlu0 %1511
      %1515 = vset.pattern.permute.xlu0 0
      %1516 = vperm.xlu0 %1515, %v1491
      %v1517 = vpop.permute.xlu0 %1516
      %1520 = vset.pattern.permute.xlu0 0
      %1521 = vperm.xlu0 %1520, %v1492
      %v1522 = vpop.permute.xlu0 %1521
      %1525 = vset.pattern.permute.xlu0 0
      %1526 = vperm.xlu0 %1525, %v1493
      %v1527 = vpop.permute.xlu0 %1526
      %1530 = vset.pattern.permute.xlu0 0
      %1531 = vperm.xlu0 %1530, %v1494
      %v1532 = vpop.permute.xlu0 %1531
      %1535 = vset.pattern.permute.xlu0 0
      %1536 = vperm.xlu0 %1535, %v1495
      %v1537 = vpop.permute.xlu0 %1536
      %1540 = vset.pattern.permute.xlu0 0
      %1541 = vperm.xlu0 %1540, %v1496
      %v1542 = vpop.permute.xlu0 %1541
      %1545 = vset.pattern.permute.xlu0 0
      %1546 = vperm.xlu0 %1545, %v1497
      %v1547 = vpop.permute.xlu0 %1546
      %1550 = vset.pattern.permute.xlu0 0
      %1551 = vperm.xlu0 %1550, %v1498
      %v1552 = vpop.permute.xlu0 %1551
      %v1554 = vmul.f32 %v1477, %v1502
      %v1555 = vmul.f32 %v1478, %v1507
      %v1556 = vmul.f32 %v1479, %v1512
      %v1557 = vmul.f32 %v1480, %v1517
      %v1558 = vmul.f32 %v1481, %v1522
      %v1559 = vmul.f32 %v1482, %v1527
      %v1560 = vmul.f32 %v1483, %v1532
      %v1561 = vmul.f32 %v1484, %v1537
      %v1562 = vmul.f32 %v1485, %v1542
      %v1563 = vmul.f32 %v1486, %v1547
      %v1564 = vmul.f32 %v1487, %v1552
      %1565 = vst.msk [vmem:[#allocation2 + $0x108] sm:$0xff] %vm775, %v1554
      %1566 = vst.msk [vmem:[#allocation2 + $0x110] sm:$0xff] %vm775, %v1555
      %1567 = vst.msk [vmem:[#allocation2 + $0x118] sm:$0xff] %vm775, %v1556
      %1568 = vst.msk [vmem:[#allocation2 + $0x120] sm:$0xff] %vm775, %v1557
      %1569 = vst.msk [vmem:[#allocation2 + $0x128] sm:$0xff] %vm775, %v1558
      %1570 = vst.msk [vmem:[#allocation2 + $0x130] sm:$0xff] %vm775, %v1559
      %1571 = vst.msk [vmem:[#allocation2 + $0x138] sm:$0xff] %vm775, %v1560
      %1572 = vst.msk [vmem:[#allocation2 + $0x140] sm:$0xff] %vm775, %v1561
      %1573 = vst.msk [vmem:[#allocation2 + $0x148] sm:$0xff] %vm775, %v1562
      %1574 = vst.msk [vmem:[#allocation2 + $0x150] sm:$0xff] %vm775, %v1563
      %1575 = vst.msk [vmem:[#allocation2 + $0x158] sm:$0xff] %vm775, %v1564
      %v1576 = vld [vmem:[#allocation2] sm:$0xff]
      %v1577 = vld [vmem:[#allocation2 + $0x8] sm:$0xff]
      %v1578 = vld [vmem:[#allocation2 + $0x10] sm:$0xff]
      %v1579 = vld [vmem:[#allocation2 + $0x18] sm:$0xff]
      %v1580 = vld [vmem:[#allocation2 + $0x20] sm:$0xff]
      %v1581 = vld [vmem:[#allocation2 + $0x28] sm:$0xff]
      %v1582 = vld [vmem:[#allocation2 + $0x30] sm:$0xff]
      %v1583 = vld [vmem:[#allocation2 + $0x38] sm:$0xff]
      %v1584 = vld [vmem:[#allocation2 + $0x40] sm:$0xff]
      %v1585 = vld [vmem:[%s7] sm:$0x3]
      %v1586 = vld [vmem:[#allocation2 + $0x58] sm:$0xff]
      %v1587 = vld [vmem:[#allocation2 + $0x60] sm:$0xff]
      %v1588 = vld [vmem:[#allocation2 + $0x68] sm:$0xff]
      %v1589 = vld [vmem:[#allocation2 + $0x70] sm:$0xff]
      %v1590 = vld [vmem:[#allocation2 + $0x78] sm:$0xff]
      %v1591 = vld [vmem:[#allocation2 + $0x80] sm:$0xff]
      %v1592 = vld [vmem:[#allocation2 + $0x88] sm:$0xff]
      %v1593 = vld [vmem:[#allocation2 + $0x90] sm:$0xff]
      %v1594 = vld [vmem:[#allocation2 + $0x98] sm:$0xff]
      %v1595 = vld [vmem:[%s7 + $0x2] sm:$0x3]
      %v1597 = vsel %vm775, %v1586, 0
      %v1600 = vsel %vm775, %v1587, 0
      %v1603 = vsel %vm775, %v1588, 0
      %v1606 = vsel %vm775, %v1589, 0
      %v1609 = vsel %vm775, %v1590, 0
      %v1612 = vsel %vm775, %v1591, 0
      %v1615 = vsel %vm775, %v1592, 0
      %v1618 = vsel %vm775, %v1593, 0
      %v1621 = vsel %vm775, %v1594, 0
      %vm1623 = vcmask 1041408
      %v1625 = vsel %vm1623, %v1595, 0
      %1627 = vmatprep.subr.mxu0 0.0
      %1628 = vmatpush1.msra.mxu0 0.0
      %1629 = vmatprep.subr.mxu0 0.0
      %1630 = vmatpush1.msra.mxu0 0.0
      %1631 = vmatprep.subr.mxu0 0.0
      %1632 = vmatpush1.msra.mxu0 0.0
      %1633 = vmatprep.subr.mxu0 0.0
      %1634 = vmatpush1.msra.mxu0 0.0
      %1635 = vmatprep.subr.mxu0 0.0
      %1636 = vmatpush1.msra.mxu0 0.0
      %1637 = vmatprep.subr.mxu0 0.0
      %1638 = vmatpush1.msra.mxu0 0.0
      %1639 = vmatprep.subr.mxu0 0.0
      %1640 = vmatpush1.msra.mxu0 0.0
      %1641 = vmatprep.subr.mxu0 0.0
      %1642 = vmatpush1.msra.mxu0 0.0
      %1643 = vmatprep.subr.mxu0 0.0
      %1644 = vmatpush1.msra.mxu0 0.0
      %1645 = vmatprep.subr.mxu0 0.0
      %1646 = vmatpush1.msra.mxu0 0.0
      %1647 = vmatprep.subr.mxu0 0.0
      %1648 = vmatpush1.msra.mxu0 0.0
      %1649 = vmatprep.subr.mxu0 0.0
      %1650 = vmatpush1.msra.mxu0 0.0
      %1651 = vmatprep.subr.mxu0 0.0
      %1652 = vmatpush1.msra.mxu0 0.0
      %1653 = vmatprep.subr.mxu0 0.0
      %1654 = vmatpush1.msra.mxu0 0.0
      %1655 = vmatprep.subr.mxu0 0.0
      %1656 = vmatpush1.msra.mxu0 0.0
      %1657 = vmatprep.subr.mxu0 0.0
      %1658 = vmatpush1.msra.mxu0 %v1625
      %1659 = vmatprep.subr.mxu0 0.0
      %1660 = vmatpush2.msra.mxu0 0.0
      %1661 = vmatprep.subr.mxu0 0.0
      %1662 = vmatpush2.msra.mxu0 0.0
      %1663 = vmatprep.subr.mxu0 0.0
      %1664 = vmatpush2.msra.mxu0 0.0
      %1665 = vmatprep.subr.mxu0 0.0
      %1666 = vmatpush2.msra.mxu0 0.0
      %1667 = vmatprep.subr.mxu0 0.0
      %1668 = vmatpush2.msra.mxu0 0.0
      %1669 = vmatprep.subr.mxu0 0.0
      %1670 = vmatpush2.msra.mxu0 0.0
      %1671 = vmatprep.subr.mxu0 0.0
      %1672 = vmatpush2.msra.mxu0 0.0
      %1673 = vmatprep.subr.mxu0 0.0
      %1674 = vmatpush2.msra.mxu0 0.0
      %1675 = vmatprep.subr.mxu0 0.0
      %1676 = vmatpush2.msra.mxu0 0.0
      %1677 = vmatprep.subr.mxu0 0.0
      %1678 = vmatpush2.msra.mxu0 0.0
      %1679 = vmatprep.subr.mxu0 0.0
      %1680 = vmatpush2.msra.mxu0 0.0
      %1681 = vmatprep.subr.mxu0 0.0
      %1682 = vmatpush2.msra.mxu0 0.0
      %1683 = vmatprep.subr.mxu0 0.0
      %1684 = vmatpush2.msra.mxu0 0.0
      %1685 = vmatprep.subr.mxu0 0.0
      %1686 = vmatpush2.msra.mxu0 0.0
      %1687 = vmatprep.subr.mxu0 0.0
      %1688 = vmatpush2.msra.mxu0 0.0
      %1689 = vmatprep.subr.mxu0 0.0
      %1690 = vmatpush2.msra.mxu0 0.0
      %1691 = vmatprep.mubr.f32.mxu0 0.0
      %1692 = vmatmul.mubr.f32.gmra.mxu0 %v1597
      %v1693 = vpop.f32.mrf.mxu0
      %v1694 = vadd.f32 0.0, %v1693
      %v1695 = vpop.f32.mrf.mxu0
      %1696 = vmatprep.mubr.f32.mxu0 0.0
      %1697 = vmatmul.mubr.f32.gmra.mxu0 %v1600
      %v1698 = vpop.f32.mrf.mxu0
      %v1699 = vadd.f32 0.0, %v1698
      %v1700 = vpop.f32.mrf.mxu0
      %1701 = vmatprep.mubr.f32.mxu0 0.0
      %1702 = vmatmul.mubr.f32.gmra.mxu0 %v1603
      %v1703 = vpop.f32.mrf.mxu0
      %v1704 = vadd.f32 0.0, %v1703
      %v1705 = vpop.f32.mrf.mxu0
      %1706 = vmatprep.mubr.f32.mxu0 0.0
      %1707 = vmatmul.mubr.f32.gmra.mxu0 %v1606
      %v1708 = vpop.f32.mrf.mxu0
      %v1709 = vadd.f32 0.0, %v1708
      %v1710 = vpop.f32.mrf.mxu0
      %1711 = vmatprep.mubr.f32.mxu0 0.0
      %1712 = vmatmul.mubr.f32.gmra.mxu0 %v1609
      %v1713 = vpop.f32.mrf.mxu0
      %v1714 = vadd.f32 0.0, %v1713
      %v1715 = vpop.f32.mrf.mxu0
      %1716 = vmatprep.mubr.f32.mxu0 0.0
      %1717 = vmatmul.mubr.f32.gmra.mxu0 %v1612
      %v1718 = vpop.f32.mrf.mxu0
      %v1719 = vadd.f32 0.0, %v1718
      %v1720 = vpop.f32.mrf.mxu0
      %1721 = vmatprep.mubr.f32.mxu0 0.0
      %1722 = vmatmul.mubr.f32.gmra.mxu0 %v1615
      %v1723 = vpop.f32.mrf.mxu0
      %v1724 = vadd.f32 0.0, %v1723
      %v1725 = vpop.f32.mrf.mxu0
      %1726 = vmatprep.mubr.f32.mxu0 0.0
      %1727 = vmatmul.mubr.f32.gmra.mxu0 %v1618
      %v1728 = vpop.f32.mrf.mxu0
      %v1729 = vadd.f32 0.0, %v1728
      %v1730 = vpop.f32.mrf.mxu0
      %1731 = vmatprep.mubr.f32.mxu0 0.0
      %1732 = vmatmul.mubr.f32.gmra.mxu0 %v1621
      %v1733 = vpop.f32.mrf.mxu0
      %v1734 = vadd.f32 0.0, %v1733
      %v1735 = vpop.f32.mrf.mxu0
      %1736 = vdwg.mxu0
      %v1738 = vsel %vm775, %v1576, 0
      %v1741 = vsel %vm775, %v1577, 0
      %v1744 = vsel %vm775, %v1578, 0
      %v1747 = vsel %vm775, %v1579, 0
      %v1750 = vsel %vm775, %v1580, 0
      %v1753 = vsel %vm775, %v1581, 0
      %v1756 = vsel %vm775, %v1582, 0
      %v1759 = vsel %vm775, %v1583, 0
      %v1762 = vsel %vm775, %v1584, 0
      %v1765 = vsel %vm1623, %v1585, 0
      %1767 = vmatprep.subr.mxu0 0.0
      %1768 = vmatpush1.msra.mxu0 0.0
      %1769 = vmatprep.subr.mxu0 0.0
      %1770 = vmatpush1.msra.mxu0 0.0
      %1771 = vmatprep.subr.mxu0 0.0
      %1772 = vmatpush1.msra.mxu0 0.0
      %1773 = vmatprep.subr.mxu0 0.0
      %1774 = vmatpush1.msra.mxu0 0.0
      %1775 = vmatprep.subr.mxu0 0.0
      %1776 = vmatpush1.msra.mxu0 0.0
      %1777 = vmatprep.subr.mxu0 0.0
      %1778 = vmatpush1.msra.mxu0 0.0
      %1779 = vmatprep.subr.mxu0 0.0
      %1780 = vmatpush1.msra.mxu0 0.0
      %1781 = vmatprep.subr.mxu0 0.0
      %1782 = vmatpush1.msra.mxu0 0.0
      %1783 = vmatprep.subr.mxu0 0.0
      %1784 = vmatpush1.msra.mxu0 0.0
      %1785 = vmatprep.subr.mxu0 0.0
      %1786 = vmatpush1.msra.mxu0 0.0
      %1787 = vmatprep.subr.mxu0 0.0
      %1788 = vmatpush1.msra.mxu0 0.0
      %1789 = vmatprep.subr.mxu0 0.0
      %1790 = vmatpush1.msra.mxu0 0.0
      %1791 = vmatprep.subr.mxu0 0.0
      %1792 = vmatpush1.msra.mxu0 0.0
      %1793 = vmatprep.subr.mxu0 0.0
      %1794 = vmatpush1.msra.mxu0 0.0
      %1795 = vmatprep.subr.mxu0 0.0
      %1796 = vmatpush1.msra.mxu0 0.0
      %1797 = vmatprep.subr.mxu0 0.0
      %1798 = vmatpush1.msra.mxu0 %v1765
      %1799 = vmatprep.subr.mxu0 0.0
      %1800 = vmatpush2.msra.mxu0 0.0
      %1801 = vmatprep.subr.mxu0 0.0
      %1802 = vmatpush2.msra.mxu0 0.0
      %1803 = vmatprep.subr.mxu0 0.0
      %1804 = vmatpush2.msra.mxu0 0.0
      %1805 = vmatprep.subr.mxu0 0.0
      %1806 = vmatpush2.msra.mxu0 0.0
      %1807 = vmatprep.subr.mxu0 0.0
      %1808 = vmatpush2.msra.mxu0 0.0
      %1809 = vmatprep.subr.mxu0 0.0
      %1810 = vmatpush2.msra.mxu0 0.0
      %1811 = vmatprep.subr.mxu0 0.0
      %1812 = vmatpush2.msra.mxu0 0.0
      %1813 = vmatprep.subr.mxu0 0.0
      %1814 = vmatpush2.msra.mxu0 0.0
      %1815 = vmatprep.subr.mxu0 0.0
      %1816 = vmatpush2.msra.mxu0 0.0
      %1817 = vmatprep.subr.mxu0 0.0
      %1818 = vmatpush2.msra.mxu0 0.0
      %1819 = vmatprep.subr.mxu0 0.0
      %1820 = vmatpush2.msra.mxu0 0.0
      %1821 = vmatprep.subr.mxu0 0.0
      %1822 = vmatpush2.msra.mxu0 0.0
      %1823 = vmatprep.subr.mxu0 0.0
      %1824 = vmatpush2.msra.mxu0 0.0
      %1825 = vmatprep.subr.mxu0 0.0
      %1826 = vmatpush2.msra.mxu0 0.0
      %1827 = vmatprep.subr.mxu0 0.0
      %1828 = vmatpush2.msra.mxu0 0.0
      %1829 = vmatprep.subr.mxu0 0.0
      %1830 = vmatpush2.msra.mxu0 0.0
      %1831 = vmatprep.mubr.f32.mxu0 0.0
      %1832 = vmatmul.mubr.f32.gmra.mxu0 %v1738
      %v1833 = vpop.f32.mrf.mxu0
      %v1834 = vadd.f32 %v1694, %v1833
      %v1835 = vpop.f32.mrf.mxu0
      %1836 = vmatprep.mubr.f32.mxu0 0.0
      %1837 = vmatmul.mubr.f32.gmra.mxu0 %v1741
      %v1838 = vpop.f32.mrf.mxu0
      %v1839 = vadd.f32 %v1699, %v1838
      %v1840 = vpop.f32.mrf.mxu0
      %1841 = vmatprep.mubr.f32.mxu0 0.0
      %1842 = vmatmul.mubr.f32.gmra.mxu0 %v1744
      %v1843 = vpop.f32.mrf.mxu0
      %v1844 = vadd.f32 %v1704, %v1843
      %v1845 = vpop.f32.mrf.mxu0
      %1846 = vmatprep.mubr.f32.mxu0 0.0
      %1847 = vmatmul.mubr.f32.gmra.mxu0 %v1747
      %v1848 = vpop.f32.mrf.mxu0
      %v1849 = vadd.f32 %v1709, %v1848
      %v1850 = vpop.f32.mrf.mxu0
      %1851 = vmatprep.mubr.f32.mxu0 0.0
      %1852 = vmatmul.mubr.f32.gmra.mxu0 %v1750
      %v1853 = vpop.f32.mrf.mxu0
      %v1854 = vadd.f32 %v1714, %v1853
      %v1855 = vpop.f32.mrf.mxu0
      %1856 = vmatprep.mubr.f32.mxu0 0.0
      %1857 = vmatmul.mubr.f32.gmra.mxu0 %v1753
      %v1858 = vpop.f32.mrf.mxu0
      %v1859 = vadd.f32 %v1719, %v1858
      %v1860 = vpop.f32.mrf.mxu0
      %1861 = vmatprep.mubr.f32.mxu0 0.0
      %1862 = vmatmul.mubr.f32.gmra.mxu0 %v1756
      %v1863 = vpop.f32.mrf.mxu0
      %v1864 = vadd.f32 %v1724, %v1863
      %v1865 = vpop.f32.mrf.mxu0
      %1866 = vmatprep.mubr.f32.mxu0 0.0
      %1867 = vmatmul.mubr.f32.gmra.mxu0 %v1759
      %v1868 = vpop.f32.mrf.mxu0
      %v1869 = vadd.f32 %v1729, %v1868
      %v1870 = vpop.f32.mrf.mxu0
      %1871 = vmatprep.mubr.f32.mxu0 0.0
      %1872 = vmatmul.mubr.f32.gmra.mxu0 %v1762
      %v1873 = vpop.f32.mrf.mxu0
      %v1874 = vadd.f32 %v1734, %v1873
      %v1875 = vpop.f32.mrf.mxu0
      %1876 = vdwg.mxu0
      %v1877 = vld [vmem:[#allocation2 + $0x1] sm:$0xff]
      %v1878 = vld [vmem:[#allocation2 + $0x9] sm:$0xff]
      %v1879 = vld [vmem:[#allocation2 + $0x11] sm:$0xff]
      %v1880 = vld [vmem:[#allocation2 + $0x19] sm:$0xff]
      %v1881 = vld [vmem:[#allocation2 + $0x21] sm:$0xff]
      %v1882 = vld [vmem:[#allocation2 + $0x29] sm:$0xff]
      %v1883 = vld [vmem:[#allocation2 + $0x31] sm:$0xff]
      %v1884 = vld [vmem:[#allocation2 + $0x39] sm:$0xff]
      %v1885 = vld [vmem:[#allocation2 + $0x41] sm:$0xff]
      %v1886 = vld [vmem:[%s7 + $0x4] sm:$0x3]
      %v1888 = vsel %vm775, %v1877, 0
      %v1891 = vsel %vm775, %v1878, 0
      %v1894 = vsel %vm775, %v1879, 0
      %v1897 = vsel %vm775, %v1880, 0
      %v1900 = vsel %vm775, %v1881, 0
      %v1903 = vsel %vm775, %v1882, 0
      %v1906 = vsel %vm775, %v1883, 0
      %v1909 = vsel %vm775, %v1884, 0
      %v1912 = vsel %vm775, %v1885, 0
      %v1915 = vsel %vm1623, %v1886, 0
      %1917 = vmatprep.subr.mxu0 0.0
      %1918 = vmatpush1.msra.mxu0 0.0
      %1919 = vmatprep.subr.mxu0 0.0
      %1920 = vmatpush1.msra.mxu0 0.0
      %1921 = vmatprep.subr.mxu0 0.0
      %1922 = vmatpush1.msra.mxu0 0.0
      %1923 = vmatprep.subr.mxu0 0.0
      %1924 = vmatpush1.msra.mxu0 0.0
      %1925 = vmatprep.subr.mxu0 0.0
      %1926 = vmatpush1.msra.mxu0 0.0
      %1927 = vmatprep.subr.mxu0 0.0
      %1928 = vmatpush1.msra.mxu0 0.0
      %1929 = vmatprep.subr.mxu0 0.0
      %1930 = vmatpush1.msra.mxu0 0.0
      %1931 = vmatprep.subr.mxu0 0.0
      %1932 = vmatpush1.msra.mxu0 0.0
      %1933 = vmatprep.subr.mxu0 0.0
      %1934 = vmatpush1.msra.mxu0 0.0
      %1935 = vmatprep.subr.mxu0 0.0
      %1936 = vmatpush1.msra.mxu0 0.0
      %1937 = vmatprep.subr.mxu0 0.0
      %1938 = vmatpush1.msra.mxu0 0.0
      %1939 = vmatprep.subr.mxu0 0.0
      %1940 = vmatpush1.msra.mxu0 0.0
      %1941 = vmatprep.subr.mxu0 0.0
      %1942 = vmatpush1.msra.mxu0 0.0
      %1943 = vmatprep.subr.mxu0 0.0
      %1944 = vmatpush1.msra.mxu0 0.0
      %1945 = vmatprep.subr.mxu0 0.0
      %1946 = vmatpush1.msra.mxu0 0.0
      %1947 = vmatprep.subr.mxu0 0.0
      %1948 = vmatpush1.msra.mxu0 %v1915
      %1949 = vmatprep.subr.mxu0 0.0
      %1950 = vmatpush2.msra.mxu0 0.0
      %1951 = vmatprep.subr.mxu0 0.0
      %1952 = vmatpush2.msra.mxu0 0.0
      %1953 = vmatprep.subr.mxu0 0.0
      %1954 = vmatpush2.msra.mxu0 0.0
      %1955 = vmatprep.subr.mxu0 0.0
      %1956 = vmatpush2.msra.mxu0 0.0
      %1957 = vmatprep.subr.mxu0 0.0
      %1958 = vmatpush2.msra.mxu0 0.0
      %1959 = vmatprep.subr.mxu0 0.0
      %1960 = vmatpush2.msra.mxu0 0.0
      %1961 = vmatprep.subr.mxu0 0.0
      %1962 = vmatpush2.msra.mxu0 0.0
      %1963 = vmatprep.subr.mxu0 0.0
      %1964 = vmatpush2.msra.mxu0 0.0
      %1965 = vmatprep.subr.mxu0 0.0
      %1966 = vmatpush2.msra.mxu0 0.0
      %1967 = vmatprep.subr.mxu0 0.0
      %1968 = vmatpush2.msra.mxu0 0.0
      %1969 = vmatprep.subr.mxu0 0.0
      %1970 = vmatpush2.msra.mxu0 0.0
      %1971 = vmatprep.subr.mxu0 0.0
      %1972 = vmatpush2.msra.mxu0 0.0
      %1973 = vmatprep.subr.mxu0 0.0
      %1974 = vmatpush2.msra.mxu0 0.0
      %1975 = vmatprep.subr.mxu0 0.0
      %1976 = vmatpush2.msra.mxu0 0.0
      %1977 = vmatprep.subr.mxu0 0.0
      %1978 = vmatpush2.msra.mxu0 0.0
      %1979 = vmatprep.subr.mxu0 0.0
      %1980 = vmatpush2.msra.mxu0 0.0
      %1981 = vmatprep.mubr.f32.mxu0 0.0
      %1982 = vmatmul.mubr.f32.gmra.mxu0 %v1888
      %v1983 = vpop.f32.mrf.mxu0
      %v1984 = vadd.f32 0.0, %v1983
      %v1985 = vpop.f32.mrf.mxu0
      %1986 = vmatprep.mubr.f32.mxu0 0.0
      %1987 = vmatmul.mubr.f32.gmra.mxu0 %v1891
      %v1988 = vpop.f32.mrf.mxu0
      %v1989 = vadd.f32 0.0, %v1988
      %v1990 = vpop.f32.mrf.mxu0
      %1991 = vmatprep.mubr.f32.mxu0 0.0
      %1992 = vmatmul.mubr.f32.gmra.mxu0 %v1894
      %v1993 = vpop.f32.mrf.mxu0
      %v1994 = vadd.f32 0.0, %v1993
      %v1995 = vpop.f32.mrf.mxu0
      %1996 = vmatprep.mubr.f32.mxu0 0.0
      %1997 = vmatmul.mubr.f32.gmra.mxu0 %v1897
      %v1998 = vpop.f32.mrf.mxu0
      %v1999 = vadd.f32 0.0, %v1998
      %v2000 = vpop.f32.mrf.mxu0
      %2001 = vmatprep.mubr.f32.mxu0 0.0
      %2002 = vmatmul.mubr.f32.gmra.mxu0 %v1900
      %v2003 = vpop.f32.mrf.mxu0
      %v2004 = vadd.f32 0.0, %v2003
      %v2005 = vpop.f32.mrf.mxu0
      %2006 = vmatprep.mubr.f32.mxu0 0.0
      %2007 = vmatmul.mubr.f32.gmra.mxu0 %v1903
      %v2008 = vpop.f32.mrf.mxu0
      %v2009 = vadd.f32 0.0, %v2008
      %v2010 = vpop.f32.mrf.mxu0
      %2011 = vmatprep.mubr.f32.mxu0 0.0
      %2012 = vmatmul.mubr.f32.gmra.mxu0 %v1906
      %v2013 = vpop.f32.mrf.mxu0
      %v2014 = vadd.f32 0.0, %v2013
      %v2015 = vpop.f32.mrf.mxu0
      %2016 = vmatprep.mubr.f32.mxu0 0.0
      %2017 = vmatmul.mubr.f32.gmra.mxu0 %v1909
      %v2018 = vpop.f32.mrf.mxu0
      %v2019 = vadd.f32 0.0, %v2018
      %v2020 = vpop.f32.mrf.mxu0
      %2021 = vmatprep.mubr.f32.mxu0 0.0
      %2022 = vmatmul.mubr.f32.gmra.mxu0 %v1912
      %v2023 = vpop.f32.mrf.mxu0
      %v2024 = vadd.f32 0.0, %v2023
      %v2025 = vpop.f32.mrf.mxu0
      %2026 = vdwg.mxu0
      %v2027 = vadd.f32 %v1834, %v1984
      %v2028 = vadd.f32 %v1839, %v1989
      %v2029 = vadd.f32 %v1844, %v1994
      %v2030 = vadd.f32 %v1849, %v1999
      %v2031 = vadd.f32 %v1854, %v2004
      %v2032 = vadd.f32 %v1859, %v2009
      %v2033 = vadd.f32 %v1864, %v2014
      %v2034 = vadd.f32 %v1869, %v2019
      %v2035 = vadd.f32 %v1874, %v2024
      %v2036 = vld [vmem:[#allocation2 + $0xb0] sm:$0xff]
      %v2037 = vld [vmem:[#allocation2 + $0xb8] sm:$0xff]
      %v2038 = vld [vmem:[#allocation2 + $0xc0] sm:$0xff]
      %v2039 = vld [vmem:[#allocation2 + $0xc8] sm:$0xff]
      %v2040 = vld [vmem:[#allocation2 + $0xd0] sm:$0xff]
      %v2041 = vld [vmem:[#allocation2 + $0xd8] sm:$0xff]
      %v2042 = vld [vmem:[#allocation2 + $0xe0] sm:$0xff]
      %v2043 = vld [vmem:[#allocation2 + $0xe8] sm:$0xff]
      %v2044 = vld [vmem:[#allocation2 + $0xf0] sm:$0xff]
      %v2045 = vld [vmem:[%s7 + $0x6] sm:$0x3]
      %v2047 = vsel %vm775, %v2036, 0
      %v2050 = vsel %vm775, %v2037, 0
      %v2053 = vsel %vm775, %v2038, 0
      %v2056 = vsel %vm775, %v2039, 0
      %v2059 = vsel %vm775, %v2040, 0
      %v2062 = vsel %vm775, %v2041, 0
      %v2065 = vsel %vm775, %v2042, 0
      %v2068 = vsel %vm775, %v2043, 0
      %v2071 = vsel %vm775, %v2044, 0
      %v2074 = vsel %vm1623, %v2045, 0
      %2076 = vmatprep.subr.mxu0 0.0
      %2077 = vmatpush1.msra.mxu0 0.0
      %2078 = vmatprep.subr.mxu0 0.0
      %2079 = vmatpush1.msra.mxu0 0.0
      %2080 = vmatprep.subr.mxu0 0.0
      %2081 = vmatpush1.msra.mxu0 0.0
      %2082 = vmatprep.subr.mxu0 0.0
      %2083 = vmatpush1.msra.mxu0 0.0
      %2084 = vmatprep.subr.mxu0 0.0
      %2085 = vmatpush1.msra.mxu0 0.0
      %2086 = vmatprep.subr.mxu0 0.0
      %2087 = vmatpush1.msra.mxu0 0.0
      %2088 = vmatprep.subr.mxu0 0.0
      %2089 = vmatpush1.msra.mxu0 0.0
      %2090 = vmatprep.subr.mxu0 0.0
      %2091 = vmatpush1.msra.mxu0 0.0
      %2092 = vmatprep.subr.mxu0 0.0
      %2093 = vmatpush1.msra.mxu0 0.0
      %2094 = vmatprep.subr.mxu0 0.0
      %2095 = vmatpush1.msra.mxu0 0.0
      %2096 = vmatprep.subr.mxu0 0.0
      %2097 = vmatpush1.msra.mxu0 0.0
      %2098 = vmatprep.subr.mxu0 0.0
      %2099 = vmatpush1.msra.mxu0 0.0
      %2100 = vmatprep.subr.mxu0 0.0
      %2101 = vmatpush1.msra.mxu0 0.0
      %2102 = vmatprep.subr.mxu0 0.0
      %2103 = vmatpush1.msra.mxu0 0.0
      %2104 = vmatprep.subr.mxu0 0.0
      %2105 = vmatpush1.msra.mxu0 0.0
      %2106 = vmatprep.subr.mxu0 0.0
      %2107 = vmatpush1.msra.mxu0 %v2074
      %2108 = vmatprep.subr.mxu0 0.0
      %2109 = vmatpush2.msra.mxu0 0.0
      %2110 = vmatprep.subr.mxu0 0.0
      %2111 = vmatpush2.msra.mxu0 0.0
      %2112 = vmatprep.subr.mxu0 0.0
      %2113 = vmatpush2.msra.mxu0 0.0
      %2114 = vmatprep.subr.mxu0 0.0
      %2115 = vmatpush2.msra.mxu0 0.0
      %2116 = vmatprep.subr.mxu0 0.0
      %2117 = vmatpush2.msra.mxu0 0.0
      %2118 = vmatprep.subr.mxu0 0.0
      %2119 = vmatpush2.msra.mxu0 0.0
      %2120 = vmatprep.subr.mxu0 0.0
      %2121 = vmatpush2.msra.mxu0 0.0
      %2122 = vmatprep.subr.mxu0 0.0
      %2123 = vmatpush2.msra.mxu0 0.0
      %2124 = vmatprep.subr.mxu0 0.0
      %2125 = vmatpush2.msra.mxu0 0.0
      %2126 = vmatprep.subr.mxu0 0.0
      %2127 = vmatpush2.msra.mxu0 0.0
      %2128 = vmatprep.subr.mxu0 0.0
      %2129 = vmatpush2.msra.mxu0 0.0
      %2130 = vmatprep.subr.mxu0 0.0
      %2131 = vmatpush2.msra.mxu0 0.0
      %2132 = vmatprep.subr.mxu0 0.0
      %2133 = vmatpush2.msra.mxu0 0.0
      %2134 = vmatprep.subr.mxu0 0.0
      %2135 = vmatpush2.msra.mxu0 0.0
      %2136 = vmatprep.subr.mxu0 0.0
      %2137 = vmatpush2.msra.mxu0 0.0
      %2138 = vmatprep.subr.mxu0 0.0
      %2139 = vmatpush2.msra.mxu0 0.0
      %2140 = vmatprep.mubr.f32.mxu0 0.0
      %2141 = vmatmul.mubr.f32.gmra.mxu0 %v2047
      %v2142 = vpop.f32.mrf.mxu0
      %v2143 = vadd.f32 0.0, %v2142
      %v2144 = vpop.f32.mrf.mxu0
      %2145 = vmatprep.mubr.f32.mxu0 0.0
      %2146 = vmatmul.mubr.f32.gmra.mxu0 %v2050
      %v2147 = vpop.f32.mrf.mxu0
      %v2148 = vadd.f32 0.0, %v2147
      %v2149 = vpop.f32.mrf.mxu0
      %2150 = vmatprep.mubr.f32.mxu0 0.0
      %2151 = vmatmul.mubr.f32.gmra.mxu0 %v2053
      %v2152 = vpop.f32.mrf.mxu0
      %v2153 = vadd.f32 0.0, %v2152
      %v2154 = vpop.f32.mrf.mxu0
      %2155 = vmatprep.mubr.f32.mxu0 0.0
      %2156 = vmatmul.mubr.f32.gmra.mxu0 %v2056
      %v2157 = vpop.f32.mrf.mxu0
      %v2158 = vadd.f32 0.0, %v2157
      %v2159 = vpop.f32.mrf.mxu0
      %2160 = vmatprep.mubr.f32.mxu0 0.0
      %2161 = vmatmul.mubr.f32.gmra.mxu0 %v2059
      %v2162 = vpop.f32.mrf.mxu0
      %v2163 = vadd.f32 0.0, %v2162
      %v2164 = vpop.f32.mrf.mxu0
      %2165 = vmatprep.mubr.f32.mxu0 0.0
      %2166 = vmatmul.mubr.f32.gmra.mxu0 %v2062
      %v2167 = vpop.f32.mrf.mxu0
      %v2168 = vadd.f32 0.0, %v2167
      %v2169 = vpop.f32.mrf.mxu0
      %2170 = vmatprep.mubr.f32.mxu0 0.0
      %2171 = vmatmul.mubr.f32.gmra.mxu0 %v2065
      %v2172 = vpop.f32.mrf.mxu0
      %v2173 = vadd.f32 0.0, %v2172
      %v2174 = vpop.f32.mrf.mxu0
      %2175 = vmatprep.mubr.f32.mxu0 0.0
      %2176 = vmatmul.mubr.f32.gmra.mxu0 %v2068
      %v2177 = vpop.f32.mrf.mxu0
      %v2178 = vadd.f32 0.0, %v2177
      %v2179 = vpop.f32.mrf.mxu0
      %2180 = vmatprep.mubr.f32.mxu0 0.0
      %2181 = vmatmul.mubr.f32.gmra.mxu0 %v2071
      %v2182 = vpop.f32.mrf.mxu0
      %v2183 = vadd.f32 0.0, %v2182
      %v2184 = vpop.f32.mrf.mxu0
      %2185 = vdwg.mxu0
      %v2186 = vadd.f32 %v2027, %v2143
      %v2187 = vadd.f32 %v2028, %v2148
      %v2188 = vadd.f32 %v2029, %v2153
      %v2189 = vadd.f32 %v2030, %v2158
      %v2190 = vadd.f32 %v2031, %v2163
      %v2191 = vadd.f32 %v2032, %v2168
      %v2192 = vadd.f32 %v2033, %v2173
      %v2193 = vadd.f32 %v2034, %v2178
      %v2194 = vadd.f32 %v2035, %v2183
      %v2195 = vld [vmem:[#allocation2 + $0x108] sm:$0xff]
      %v2196 = vld [vmem:[#allocation2 + $0x110] sm:$0xff]
      %v2197 = vld [vmem:[#allocation2 + $0x118] sm:$0xff]
      %v2198 = vld [vmem:[#allocation2 + $0x120] sm:$0xff]
      %v2199 = vld [vmem:[#allocation2 + $0x128] sm:$0xff]
      %v2200 = vld [vmem:[#allocation2 + $0x130] sm:$0xff]
      %v2201 = vld [vmem:[#allocation2 + $0x138] sm:$0xff]
      %v2202 = vld [vmem:[#allocation2 + $0x140] sm:$0xff]
      %v2203 = vld [vmem:[#allocation2 + $0x148] sm:$0xff]
      %v2204 = vld [vmem:[%s7 + $0x8] sm:$0x3]
      %v2206 = vsel %vm775, %v2195, 0
      %v2209 = vsel %vm775, %v2196, 0
      %v2212 = vsel %vm775, %v2197, 0
      %v2215 = vsel %vm775, %v2198, 0
      %v2218 = vsel %vm775, %v2199, 0
      %v2221 = vsel %vm775, %v2200, 0
      %v2224 = vsel %vm775, %v2201, 0
      %v2227 = vsel %vm775, %v2202, 0
      %v2230 = vsel %vm775, %v2203, 0
      %v2233 = vsel %vm1623, %v2204, 0
      %2235 = vmatprep.subr.mxu0 0.0
      %2236 = vmatpush1.msra.mxu0 0.0
      %2237 = vmatprep.subr.mxu0 0.0
      %2238 = vmatpush1.msra.mxu0 0.0
      %2239 = vmatprep.subr.mxu0 0.0
      %2240 = vmatpush1.msra.mxu0 0.0
      %2241 = vmatprep.subr.mxu0 0.0
      %2242 = vmatpush1.msra.mxu0 0.0
      %2243 = vmatprep.subr.mxu0 0.0
      %2244 = vmatpush1.msra.mxu0 0.0
      %2245 = vmatprep.subr.mxu0 0.0
      %2246 = vmatpush1.msra.mxu0 0.0
      %2247 = vmatprep.subr.mxu0 0.0
      %2248 = vmatpush1.msra.mxu0 0.0
      %2249 = vmatprep.subr.mxu0 0.0
      %2250 = vmatpush1.msra.mxu0 0.0
      %2251 = vmatprep.subr.mxu0 0.0
      %2252 = vmatpush1.msra.mxu0 0.0
      %2253 = vmatprep.subr.mxu0 0.0
      %2254 = vmatpush1.msra.mxu0 0.0
      %2255 = vmatprep.subr.mxu0 0.0
      %2256 = vmatpush1.msra.mxu0 0.0
      %2257 = vmatprep.subr.mxu0 0.0
      %2258 = vmatpush1.msra.mxu0 0.0
      %2259 = vmatprep.subr.mxu0 0.0
      %2260 = vmatpush1.msra.mxu0 0.0
      %2261 = vmatprep.subr.mxu0 0.0
      %2262 = vmatpush1.msra.mxu0 0.0
      %2263 = vmatprep.subr.mxu0 0.0
      %2264 = vmatpush1.msra.mxu0 0.0
      %2265 = vmatprep.subr.mxu0 0.0
      %2266 = vmatpush1.msra.mxu0 %v2233
      %2267 = vmatprep.subr.mxu0 0.0
      %2268 = vmatpush2.msra.mxu0 0.0
      %2269 = vmatprep.subr.mxu0 0.0
      %2270 = vmatpush2.msra.mxu0 0.0
      %2271 = vmatprep.subr.mxu0 0.0
      %2272 = vmatpush2.msra.mxu0 0.0
      %2273 = vmatprep.subr.mxu0 0.0
      %2274 = vmatpush2.msra.mxu0 0.0
      %2275 = vmatprep.subr.mxu0 0.0
      %2276 = vmatpush2.msra.mxu0 0.0
      %2277 = vmatprep.subr.mxu0 0.0
      %2278 = vmatpush2.msra.mxu0 0.0
      %2279 = vmatprep.subr.mxu0 0.0
      %2280 = vmatpush2.msra.mxu0 0.0
      %2281 = vmatprep.subr.mxu0 0.0
      %2282 = vmatpush2.msra.mxu0 0.0
      %2283 = vmatprep.subr.mxu0 0.0
      %2284 = vmatpush2.msra.mxu0 0.0
      %2285 = vmatprep.subr.mxu0 0.0
      %2286 = vmatpush2.msra.mxu0 0.0
      %2287 = vmatprep.subr.mxu0 0.0
      %2288 = vmatpush2.msra.mxu0 0.0
      %2289 = vmatprep.subr.mxu0 0.0
      %2290 = vmatpush2.msra.mxu0 0.0
      %2291 = vmatprep.subr.mxu0 0.0
      %2292 = vmatpush2.msra.mxu0 0.0
      %2293 = vmatprep.subr.mxu0 0.0
      %2294 = vmatpush2.msra.mxu0 0.0
      %2295 = vmatprep.subr.mxu0 0.0
      %2296 = vmatpush2.msra.mxu0 0.0
      %2297 = vmatprep.subr.mxu0 0.0
      %2298 = vmatpush2.msra.mxu0 0.0
      %2299 = vmatprep.mubr.f32.mxu0 0.0
      %2300 = vmatmul.mubr.f32.gmra.mxu0 %v2206
      %v2301 = vpop.f32.mrf.mxu0
      %v2302 = vadd.f32 0.0, %v2301
      %v2303 = vpop.f32.mrf.mxu0
      %2304 = vmatprep.mubr.f32.mxu0 0.0
      %2305 = vmatmul.mubr.f32.gmra.mxu0 %v2209
      %v2306 = vpop.f32.mrf.mxu0
      %v2307 = vadd.f32 0.0, %v2306
      %v2308 = vpop.f32.mrf.mxu0
      %2309 = vmatprep.mubr.f32.mxu0 0.0
      %2310 = vmatmul.mubr.f32.gmra.mxu0 %v2212
      %v2311 = vpop.f32.mrf.mxu0
      %v2312 = vadd.f32 0.0, %v2311
      %v2313 = vpop.f32.mrf.mxu0
      %2314 = vmatprep.mubr.f32.mxu0 0.0
      %2315 = vmatmul.mubr.f32.gmra.mxu0 %v2215
      %v2316 = vpop.f32.mrf.mxu0
      %v2317 = vadd.f32 0.0, %v2316
      %v2318 = vpop.f32.mrf.mxu0
      %2319 = vmatprep.mubr.f32.mxu0 0.0
      %2320 = vmatmul.mubr.f32.gmra.mxu0 %v2218
      %v2321 = vpop.f32.mrf.mxu0
      %v2322 = vadd.f32 0.0, %v2321
      %v2323 = vpop.f32.mrf.mxu0
      %2324 = vmatprep.mubr.f32.mxu0 0.0
      %2325 = vmatmul.mubr.f32.gmra.mxu0 %v2221
      %v2326 = vpop.f32.mrf.mxu0
      %v2327 = vadd.f32 0.0, %v2326
      %v2328 = vpop.f32.mrf.mxu0
      %2329 = vmatprep.mubr.f32.mxu0 0.0
      %2330 = vmatmul.mubr.f32.gmra.mxu0 %v2224
      %v2331 = vpop.f32.mrf.mxu0
      %v2332 = vadd.f32 0.0, %v2331
      %v2333 = vpop.f32.mrf.mxu0
      %2334 = vmatprep.mubr.f32.mxu0 0.0
      %2335 = vmatmul.mubr.f32.gmra.mxu0 %v2227
      %v2336 = vpop.f32.mrf.mxu0
      %v2337 = vadd.f32 0.0, %v2336
      %v2338 = vpop.f32.mrf.mxu0
      %2339 = vmatprep.mubr.f32.mxu0 0.0
      %2340 = vmatmul.mubr.f32.gmra.mxu0 %v2230
      %v2341 = vpop.f32.mrf.mxu0
      %v2342 = vadd.f32 0.0, %v2341
      %v2343 = vpop.f32.mrf.mxu0
      %2344 = vdwg.mxu0
      %v2345 = vadd.f32 %v2186, %v2302
      %v2346 = vadd.f32 %v2187, %v2307
      %v2347 = vadd.f32 %v2188, %v2312
      %v2348 = vadd.f32 %v2189, %v2317
      %v2349 = vadd.f32 %v2190, %v2322
      %v2350 = vadd.f32 %v2191, %v2327
      %v2351 = vadd.f32 %v2192, %v2332
      %v2352 = vadd.f32 %v2193, %v2337
      %v2353 = vadd.f32 %v2194, %v2342
      %v2354 = vld [vmem:[#allocation2 + $0xb1] sm:$0xff]
      %v2355 = vld [vmem:[#allocation2 + $0xb9] sm:$0xff]
      %v2356 = vld [vmem:[#allocation2 + $0xc1] sm:$0xff]
      %v2357 = vld [vmem:[#allocation2 + $0xc9] sm:$0xff]
      %v2358 = vld [vmem:[#allocation2 + $0xd1] sm:$0xff]
      %v2359 = vld [vmem:[#allocation2 + $0xd9] sm:$0xff]
      %v2360 = vld [vmem:[#allocation2 + $0xe1] sm:$0xff]
      %v2361 = vld [vmem:[#allocation2 + $0xe9] sm:$0xff]
      %v2362 = vld [vmem:[#allocation2 + $0xf1] sm:$0xff]
      %v2363 = vld [vmem:[%s7 + $0xa] sm:$0x3]
      %v2365 = vsel %vm775, %v2354, 0
      %v2368 = vsel %vm775, %v2355, 0
      %v2371 = vsel %vm775, %v2356, 0
      %v2374 = vsel %vm775, %v2357, 0
      %v2377 = vsel %vm775, %v2358, 0
      %v2380 = vsel %vm775, %v2359, 0
      %v2383 = vsel %vm775, %v2360, 0
      %v2386 = vsel %vm775, %v2361, 0
      %v2389 = vsel %vm775, %v2362, 0
      %v2392 = vsel %vm1623, %v2363, 0
      %2394 = vmatprep.subr.mxu0 0.0
      %2395 = vmatpush1.msra.mxu0 0.0
      %2396 = vmatprep.subr.mxu0 0.0
      %2397 = vmatpush1.msra.mxu0 0.0
      %2398 = vmatprep.subr.mxu0 0.0
      %2399 = vmatpush1.msra.mxu0 0.0
      %2400 = vmatprep.subr.mxu0 0.0
      %2401 = vmatpush1.msra.mxu0 0.0
      %2402 = vmatprep.subr.mxu0 0.0
      %2403 = vmatpush1.msra.mxu0 0.0
      %2404 = vmatprep.subr.mxu0 0.0
      %2405 = vmatpush1.msra.mxu0 0.0
      %2406 = vmatprep.subr.mxu0 0.0
      %2407 = vmatpush1.msra.mxu0 0.0
      %2408 = vmatprep.subr.mxu0 0.0
      %2409 = vmatpush1.msra.mxu0 0.0
      %2410 = vmatprep.subr.mxu0 0.0
      %2411 = vmatpush1.msra.mxu0 0.0
      %2412 = vmatprep.subr.mxu0 0.0
      %2413 = vmatpush1.msra.mxu0 0.0
      %2414 = vmatprep.subr.mxu0 0.0
      %2415 = vmatpush1.msra.mxu0 0.0
      %2416 = vmatprep.subr.mxu0 0.0
      %2417 = vmatpush1.msra.mxu0 0.0
      %2418 = vmatprep.subr.mxu0 0.0
      %2419 = vmatpush1.msra.mxu0 0.0
      %2420 = vmatprep.subr.mxu0 0.0
      %2421 = vmatpush1.msra.mxu0 0.0
      %2422 = vmatprep.subr.mxu0 0.0
      %2423 = vmatpush1.msra.mxu0 0.0
      %2424 = vmatprep.subr.mxu0 0.0
      %2425 = vmatpush1.msra.mxu0 %v2392
      %2426 = vmatprep.subr.mxu0 0.0
      %2427 = vmatpush2.msra.mxu0 0.0
      %2428 = vmatprep.subr.mxu0 0.0
      %2429 = vmatpush2.msra.mxu0 0.0
      %2430 = vmatprep.subr.mxu0 0.0
      %2431 = vmatpush2.msra.mxu0 0.0
      %2432 = vmatprep.subr.mxu0 0.0
      %2433 = vmatpush2.msra.mxu0 0.0
      %2434 = vmatprep.subr.mxu0 0.0
      %2435 = vmatpush2.msra.mxu0 0.0
      %2436 = vmatprep.subr.mxu0 0.0
      %2437 = vmatpush2.msra.mxu0 0.0
      %2438 = vmatprep.subr.mxu0 0.0
      %2439 = vmatpush2.msra.mxu0 0.0
      %2440 = vmatprep.subr.mxu0 0.0
      %2441 = vmatpush2.msra.mxu0 0.0
      %2442 = vmatprep.subr.mxu0 0.0
      %2443 = vmatpush2.msra.mxu0 0.0
      %2444 = vmatprep.subr.mxu0 0.0
      %2445 = vmatpush2.msra.mxu0 0.0
      %2446 = vmatprep.subr.mxu0 0.0
      %2447 = vmatpush2.msra.mxu0 0.0
      %2448 = vmatprep.subr.mxu0 0.0
      %2449 = vmatpush2.msra.mxu0 0.0
      %2450 = vmatprep.subr.mxu0 0.0
      %2451 = vmatpush2.msra.mxu0 0.0
      %2452 = vmatprep.subr.mxu0 0.0
      %2453 = vmatpush2.msra.mxu0 0.0
      %2454 = vmatprep.subr.mxu0 0.0
      %2455 = vmatpush2.msra.mxu0 0.0
      %2456 = vmatprep.subr.mxu0 0.0
      %2457 = vmatpush2.msra.mxu0 0.0
      %2458 = vmatprep.mubr.f32.mxu0 0.0
      %2459 = vmatmul.mubr.f32.gmra.mxu0 %v2365
      %v2460 = vpop.f32.mrf.mxu0
      %v2461 = vadd.f32 0.0, %v2460
      %v2462 = vpop.f32.mrf.mxu0
      %2463 = vmatprep.mubr.f32.mxu0 0.0
      %2464 = vmatmul.mubr.f32.gmra.mxu0 %v2368
      %v2465 = vpop.f32.mrf.mxu0
      %v2466 = vadd.f32 0.0, %v2465
      %v2467 = vpop.f32.mrf.mxu0
      %2468 = vmatprep.mubr.f32.mxu0 0.0
      %2469 = vmatmul.mubr.f32.gmra.mxu0 %v2371
      %v2470 = vpop.f32.mrf.mxu0
      %v2471 = vadd.f32 0.0, %v2470
      %v2472 = vpop.f32.mrf.mxu0
      %2473 = vmatprep.mubr.f32.mxu0 0.0
      %2474 = vmatmul.mubr.f32.gmra.mxu0 %v2374
      %v2475 = vpop.f32.mrf.mxu0
      %v2476 = vadd.f32 0.0, %v2475
      %v2477 = vpop.f32.mrf.mxu0
      %2478 = vmatprep.mubr.f32.mxu0 0.0
      %2479 = vmatmul.mubr.f32.gmra.mxu0 %v2377
      %v2480 = vpop.f32.mrf.mxu0
      %v2481 = vadd.f32 0.0, %v2480
      %v2482 = vpop.f32.mrf.mxu0
      %2483 = vmatprep.mubr.f32.mxu0 0.0
      %2484 = vmatmul.mubr.f32.gmra.mxu0 %v2380
      %v2485 = vpop.f32.mrf.mxu0
      %v2486 = vadd.f32 0.0, %v2485
      %v2487 = vpop.f32.mrf.mxu0
      %2488 = vmatprep.mubr.f32.mxu0 0.0
      %2489 = vmatmul.mubr.f32.gmra.mxu0 %v2383
      %v2490 = vpop.f32.mrf.mxu0
      %v2491 = vadd.f32 0.0, %v2490
      %v2492 = vpop.f32.mrf.mxu0
      %2493 = vmatprep.mubr.f32.mxu0 0.0
      %2494 = vmatmul.mubr.f32.gmra.mxu0 %v2386
      %v2495 = vpop.f32.mrf.mxu0
      %v2496 = vadd.f32 0.0, %v2495
      %v2497 = vpop.f32.mrf.mxu0
      %2498 = vmatprep.mubr.f32.mxu0 0.0
      %2499 = vmatmul.mubr.f32.gmra.mxu0 %v2389
      %v2500 = vpop.f32.mrf.mxu0
      %v2501 = vadd.f32 0.0, %v2500
      %v2502 = vpop.f32.mrf.mxu0
      %2503 = vdwg.mxu0
      %v2504 = vadd.f32 %v2345, %v2461
      %v2505 = vadd.f32 %v2346, %v2466
      %v2506 = vadd.f32 %v2347, %v2471
      %v2507 = vadd.f32 %v2348, %v2476
      %v2508 = vadd.f32 %v2349, %v2481
      %v2509 = vadd.f32 %v2350, %v2486
      %v2510 = vadd.f32 %v2351, %v2491
      %v2511 = vadd.f32 %v2352, %v2496
      %v2512 = vadd.f32 %v2353, %v2501
      %v2513 = vld [vmem:[#allocation2 + $0x9] sm:$0xff]
      %v2514 = vld [vmem:[#allocation2 + $0x11] sm:$0xff]
      %v2515 = vld [vmem:[#allocation2 + $0x19] sm:$0xff]
      %v2516 = vld [vmem:[#allocation2 + $0x21] sm:$0xff]
      %v2517 = vld [vmem:[#allocation2 + $0x29] sm:$0xff]
      %v2518 = vld [vmem:[#allocation2 + $0x31] sm:$0xff]
      %v2519 = vld [vmem:[#allocation2 + $0x39] sm:$0xff]
      %v2520 = vld [vmem:[#allocation2 + $0x41] sm:$0xff]
      %v2521 = vld [vmem:[#allocation2 + $0x49] sm:$0xff]
      %v2522 = vld [vmem:[%s7 + $0xc] sm:$0x3]
      %v2524 = vsel %vm775, %v2513, 0
      %v2527 = vsel %vm775, %v2514, 0
      %v2530 = vsel %vm775, %v2515, 0
      %v2533 = vsel %vm775, %v2516, 0
      %v2536 = vsel %vm775, %v2517, 0
      %v2539 = vsel %vm775, %v2518, 0
      %v2542 = vsel %vm775, %v2519, 0
      %v2545 = vsel %vm775, %v2520, 0
      %v2548 = vsel %vm775, %v2521, 0
      %v2551 = vsel %vm1623, %v2522, 0
      %2553 = vmatprep.subr.mxu0 0.0
      %2554 = vmatpush1.msra.mxu0 0.0
      %2555 = vmatprep.subr.mxu0 0.0
      %2556 = vmatpush1.msra.mxu0 0.0
      %2557 = vmatprep.subr.mxu0 0.0
      %2558 = vmatpush1.msra.mxu0 0.0
      %2559 = vmatprep.subr.mxu0 0.0
      %2560 = vmatpush1.msra.mxu0 0.0
      %2561 = vmatprep.subr.mxu0 0.0
      %2562 = vmatpush1.msra.mxu0 0.0
      %2563 = vmatprep.subr.mxu0 0.0
      %2564 = vmatpush1.msra.mxu0 0.0
      %2565 = vmatprep.subr.mxu0 0.0
      %2566 = vmatpush1.msra.mxu0 0.0
      %2567 = vmatprep.subr.mxu0 0.0
      %2568 = vmatpush1.msra.mxu0 0.0
      %2569 = vmatprep.subr.mxu0 0.0
      %2570 = vmatpush1.msra.mxu0 0.0
      %2571 = vmatprep.subr.mxu0 0.0
      %2572 = vmatpush1.msra.mxu0 0.0
      %2573 = vmatprep.subr.mxu0 0.0
      %2574 = vmatpush1.msra.mxu0 0.0
      %2575 = vmatprep.subr.mxu0 0.0
      %2576 = vmatpush1.msra.mxu0 0.0
      %2577 = vmatprep.subr.mxu0 0.0
      %2578 = vmatpush1.msra.mxu0 0.0
      %2579 = vmatprep.subr.mxu0 0.0
      %2580 = vmatpush1.msra.mxu0 0.0
      %2581 = vmatprep.subr.mxu0 0.0
      %2582 = vmatpush1.msra.mxu0 0.0
      %2583 = vmatprep.subr.mxu0 0.0
      %2584 = vmatpush1.msra.mxu0 %v2551
      %2585 = vmatprep.subr.mxu0 0.0
      %2586 = vmatpush2.msra.mxu0 0.0
      %2587 = vmatprep.subr.mxu0 0.0
      %2588 = vmatpush2.msra.mxu0 0.0
      %2589 = vmatprep.subr.mxu0 0.0
      %2590 = vmatpush2.msra.mxu0 0.0
      %2591 = vmatprep.subr.mxu0 0.0
      %2592 = vmatpush2.msra.mxu0 0.0
      %2593 = vmatprep.subr.mxu0 0.0
      %2594 = vmatpush2.msra.mxu0 0.0
      %2595 = vmatprep.subr.mxu0 0.0
      %2596 = vmatpush2.msra.mxu0 0.0
      %2597 = vmatprep.subr.mxu0 0.0
      %2598 = vmatpush2.msra.mxu0 0.0
      %2599 = vmatprep.subr.mxu0 0.0
      %2600 = vmatpush2.msra.mxu0 0.0
      %2601 = vmatprep.subr.mxu0 0.0
      %2602 = vmatpush2.msra.mxu0 0.0
      %2603 = vmatprep.subr.mxu0 0.0
      %2604 = vmatpush2.msra.mxu0 0.0
      %2605 = vmatprep.subr.mxu0 0.0
      %2606 = vmatpush2.msra.mxu0 0.0
      %2607 = vmatprep.subr.mxu0 0.0
      %2608 = vmatpush2.msra.mxu0 0.0
      %2609 = vmatprep.subr.mxu0 0.0
      %2610 = vmatpush2.msra.mxu0 0.0
      %2611 = vmatprep.subr.mxu0 0.0
      %2612 = vmatpush2.msra.mxu0 0.0
      %2613 = vmatprep.subr.mxu0 0.0
      %2614 = vmatpush2.msra.mxu0 0.0
      %2615 = vmatprep.subr.mxu0 0.0
      %2616 = vmatpush2.msra.mxu0 0.0
      %2617 = vmatprep.mubr.f32.mxu0 0.0
      %2618 = vmatmul.mubr.f32.gmra.mxu0 %v2524
      %v2619 = vpop.f32.mrf.mxu0
      %v2620 = vadd.f32 0.0, %v2619
      %v2621 = vpop.f32.mrf.mxu0
      %2622 = vmatprep.mubr.f32.mxu0 0.0
      %2623 = vmatmul.mubr.f32.gmra.mxu0 %v2527
      %v2624 = vpop.f32.mrf.mxu0
      %v2625 = vadd.f32 0.0, %v2624
      %v2626 = vpop.f32.mrf.mxu0
      %2627 = vmatprep.mubr.f32.mxu0 0.0
      %2628 = vmatmul.mubr.f32.gmra.mxu0 %v2530
      %v2629 = vpop.f32.mrf.mxu0
      %v2630 = vadd.f32 0.0, %v2629
      %v2631 = vpop.f32.mrf.mxu0
      %2632 = vmatprep.mubr.f32.mxu0 0.0
      %2633 = vmatmul.mubr.f32.gmra.mxu0 %v2533
      %v2634 = vpop.f32.mrf.mxu0
      %v2635 = vadd.f32 0.0, %v2634
      %v2636 = vpop.f32.mrf.mxu0
      %2637 = vmatprep.mubr.f32.mxu0 0.0
      %2638 = vmatmul.mubr.f32.gmra.mxu0 %v2536
      %v2639 = vpop.f32.mrf.mxu0
      %v2640 = vadd.f32 0.0, %v2639
      %v2641 = vpop.f32.mrf.mxu0
      %2642 = vmatprep.mubr.f32.mxu0 0.0
      %2643 = vmatmul.mubr.f32.gmra.mxu0 %v2539
      %v2644 = vpop.f32.mrf.mxu0
      %v2645 = vadd.f32 0.0, %v2644
      %v2646 = vpop.f32.mrf.mxu0
      %2647 = vmatprep.mubr.f32.mxu0 0.0
      %2648 = vmatmul.mubr.f32.gmra.mxu0 %v2542
      %v2649 = vpop.f32.mrf.mxu0
      %v2650 = vadd.f32 0.0, %v2649
      %v2651 = vpop.f32.mrf.mxu0
      %2652 = vmatprep.mubr.f32.mxu0 0.0
      %2653 = vmatmul.mubr.f32.gmra.mxu0 %v2545
      %v2654 = vpop.f32.mrf.mxu0
      %v2655 = vadd.f32 0.0, %v2654
      %v2656 = vpop.f32.mrf.mxu0
      %2657 = vmatprep.mubr.f32.mxu0 0.0
      %2658 = vmatmul.mubr.f32.gmra.mxu0 %v2548
      %v2659 = vpop.f32.mrf.mxu0
      %v2660 = vadd.f32 0.0, %v2659
      %v2661 = vpop.f32.mrf.mxu0
      %2662 = vdwg.mxu0
      %v2663 = vadd.f32 %v2504, %v2620
      %v2664 = vadd.f32 %v2505, %v2625
      %v2665 = vadd.f32 %v2506, %v2630
      %v2666 = vadd.f32 %v2507, %v2635
      %v2667 = vadd.f32 %v2508, %v2640
      %v2668 = vadd.f32 %v2509, %v2645
      %v2669 = vadd.f32 %v2510, %v2650
      %v2670 = vadd.f32 %v2511, %v2655
      %v2671 = vadd.f32 %v2512, %v2660
      %v2672 = vld [vmem:[#allocation2 + $0x61] sm:$0xff]
      %v2673 = vld [vmem:[#allocation2 + $0x69] sm:$0xff]
      %v2674 = vld [vmem:[#allocation2 + $0x71] sm:$0xff]
      %v2675 = vld [vmem:[#allocation2 + $0x79] sm:$0xff]
      %v2676 = vld [vmem:[#allocation2 + $0x81] sm:$0xff]
      %v2677 = vld [vmem:[#allocation2 + $0x89] sm:$0xff]
      %v2678 = vld [vmem:[#allocation2 + $0x91] sm:$0xff]
      %v2679 = vld [vmem:[#allocation2 + $0x99] sm:$0xff]
      %v2680 = vld [vmem:[#allocation2 + $0xa1] sm:$0xff]
      %v2681 = vld [vmem:[%s7 + $0xe] sm:$0x3]
      %v2683 = vsel %vm775, %v2672, 0
      %v2686 = vsel %vm775, %v2673, 0
      %v2689 = vsel %vm775, %v2674, 0
      %v2692 = vsel %vm775, %v2675, 0
      %v2695 = vsel %vm775, %v2676, 0
      %v2698 = vsel %vm775, %v2677, 0
      %v2701 = vsel %vm775, %v2678, 0
      %v2704 = vsel %vm775, %v2679, 0
      %v2707 = vsel %vm775, %v2680, 0
      %v2710 = vsel %vm1623, %v2681, 0
      %2712 = vmatprep.subr.mxu0 0.0
      %2713 = vmatpush1.msra.mxu0 0.0
      %2714 = vmatprep.subr.mxu0 0.0
      %2715 = vmatpush1.msra.mxu0 0.0
      %2716 = vmatprep.subr.mxu0 0.0
      %2717 = vmatpush1.msra.mxu0 0.0
      %2718 = vmatprep.subr.mxu0 0.0
      %2719 = vmatpush1.msra.mxu0 0.0
      %2720 = vmatprep.subr.mxu0 0.0
      %2721 = vmatpush1.msra.mxu0 0.0
      %2722 = vmatprep.subr.mxu0 0.0
      %2723 = vmatpush1.msra.mxu0 0.0
      %2724 = vmatprep.subr.mxu0 0.0
      %2725 = vmatpush1.msra.mxu0 0.0
      %2726 = vmatprep.subr.mxu0 0.0
      %2727 = vmatpush1.msra.mxu0 0.0
      %2728 = vmatprep.subr.mxu0 0.0
      %2729 = vmatpush1.msra.mxu0 0.0
      %2730 = vmatprep.subr.mxu0 0.0
      %2731 = vmatpush1.msra.mxu0 0.0
      %2732 = vmatprep.subr.mxu0 0.0
      %2733 = vmatpush1.msra.mxu0 0.0
      %2734 = vmatprep.subr.mxu0 0.0
      %2735 = vmatpush1.msra.mxu0 0.0
      %2736 = vmatprep.subr.mxu0 0.0
      %2737 = vmatpush1.msra.mxu0 0.0
      %2738 = vmatprep.subr.mxu0 0.0
      %2739 = vmatpush1.msra.mxu0 0.0
      %2740 = vmatprep.subr.mxu0 0.0
      %2741 = vmatpush1.msra.mxu0 0.0
      %2742 = vmatprep.subr.mxu0 0.0
      %2743 = vmatpush1.msra.mxu0 %v2710
      %2744 = vmatprep.subr.mxu0 0.0
      %2745 = vmatpush2.msra.mxu0 0.0
      %2746 = vmatprep.subr.mxu0 0.0
      %2747 = vmatpush2.msra.mxu0 0.0
      %2748 = vmatprep.subr.mxu0 0.0
      %2749 = vmatpush2.msra.mxu0 0.0
      %2750 = vmatprep.subr.mxu0 0.0
      %2751 = vmatpush2.msra.mxu0 0.0
      %2752 = vmatprep.subr.mxu0 0.0
      %2753 = vmatpush2.msra.mxu0 0.0
      %2754 = vmatprep.subr.mxu0 0.0
      %2755 = vmatpush2.msra.mxu0 0.0
      %2756 = vmatprep.subr.mxu0 0.0
      %2757 = vmatpush2.msra.mxu0 0.0
      %2758 = vmatprep.subr.mxu0 0.0
      %2759 = vmatpush2.msra.mxu0 0.0
      %2760 = vmatprep.subr.mxu0 0.0
      %2761 = vmatpush2.msra.mxu0 0.0
      %2762 = vmatprep.subr.mxu0 0.0
      %2763 = vmatpush2.msra.mxu0 0.0
      %2764 = vmatprep.subr.mxu0 0.0
      %2765 = vmatpush2.msra.mxu0 0.0
      %2766 = vmatprep.subr.mxu0 0.0
      %2767 = vmatpush2.msra.mxu0 0.0
      %2768 = vmatprep.subr.mxu0 0.0
      %2769 = vmatpush2.msra.mxu0 0.0
      %2770 = vmatprep.subr.mxu0 0.0
      %2771 = vmatpush2.msra.mxu0 0.0
      %2772 = vmatprep.subr.mxu0 0.0
      %2773 = vmatpush2.msra.mxu0 0.0
      %2774 = vmatprep.subr.mxu0 0.0
      %2775 = vmatpush2.msra.mxu0 0.0
      %2776 = vmatprep.mubr.f32.mxu0 0.0
      %2777 = vmatmul.mubr.f32.gmra.mxu0 %v2683
      %v2778 = vpop.f32.mrf.mxu0
      %v2779 = vadd.f32 0.0, %v2778
      %v2780 = vpop.f32.mrf.mxu0
      %2781 = vmatprep.mubr.f32.mxu0 0.0
      %2782 = vmatmul.mubr.f32.gmra.mxu0 %v2686
      %v2783 = vpop.f32.mrf.mxu0
      %v2784 = vadd.f32 0.0, %v2783
      %v2785 = vpop.f32.mrf.mxu0
      %2786 = vmatprep.mubr.f32.mxu0 0.0
      %2787 = vmatmul.mubr.f32.gmra.mxu0 %v2689
      %v2788 = vpop.f32.mrf.mxu0
      %v2789 = vadd.f32 0.0, %v2788
      %v2790 = vpop.f32.mrf.mxu0
      %2791 = vmatprep.mubr.f32.mxu0 0.0
      %2792 = vmatmul.mubr.f32.gmra.mxu0 %v2692
      %v2793 = vpop.f32.mrf.mxu0
      %v2794 = vadd.f32 0.0, %v2793
      %v2795 = vpop.f32.mrf.mxu0
      %2796 = vmatprep.mubr.f32.mxu0 0.0
      %2797 = vmatmul.mubr.f32.gmra.mxu0 %v2695
      %v2798 = vpop.f32.mrf.mxu0
      %v2799 = vadd.f32 0.0, %v2798
      %v2800 = vpop.f32.mrf.mxu0
      %2801 = vmatprep.mubr.f32.mxu0 0.0
      %2802 = vmatmul.mubr.f32.gmra.mxu0 %v2698
      %v2803 = vpop.f32.mrf.mxu0
      %v2804 = vadd.f32 0.0, %v2803
      %v2805 = vpop.f32.mrf.mxu0
      %2806 = vmatprep.mubr.f32.mxu0 0.0
      %2807 = vmatmul.mubr.f32.gmra.mxu0 %v2701
      %v2808 = vpop.f32.mrf.mxu0
      %v2809 = vadd.f32 0.0, %v2808
      %v2810 = vpop.f32.mrf.mxu0
      %2811 = vmatprep.mubr.f32.mxu0 0.0
      %2812 = vmatmul.mubr.f32.gmra.mxu0 %v2704
      %v2813 = vpop.f32.mrf.mxu0
      %v2814 = vadd.f32 0.0, %v2813
      %v2815 = vpop.f32.mrf.mxu0
      %2816 = vmatprep.mubr.f32.mxu0 0.0
      %2817 = vmatmul.mubr.f32.gmra.mxu0 %v2707
      %v2818 = vpop.f32.mrf.mxu0
      %v2819 = vadd.f32 0.0, %v2818
      %v2820 = vpop.f32.mrf.mxu0
      %2821 = vdwg.mxu0
      %v2822 = vadd.f32 %v2663, %v2779
      %v2823 = vadd.f32 %v2664, %v2784
      %v2824 = vadd.f32 %v2665, %v2789
      %v2825 = vadd.f32 %v2666, %v2794
      %v2826 = vadd.f32 %v2667, %v2799
      %v2827 = vadd.f32 %v2668, %v2804
      %v2828 = vadd.f32 %v2669, %v2809
      %v2829 = vadd.f32 %v2670, %v2814
      %v2830 = vadd.f32 %v2671, %v2819
      %v2831 = vld [vmem:[#allocation2 + $0xa] sm:$0xff]
      %v2832 = vld [vmem:[#allocation2 + $0x12] sm:$0xff]
      %v2833 = vld [vmem:[#allocation2 + $0x1a] sm:$0xff]
      %v2834 = vld [vmem:[#allocation2 + $0x22] sm:$0xff]
      %v2835 = vld [vmem:[#allocation2 + $0x2a] sm:$0xff]
      %v2836 = vld [vmem:[#allocation2 + $0x32] sm:$0xff]
      %v2837 = vld [vmem:[#allocation2 + $0x3a] sm:$0xff]
      %v2838 = vld [vmem:[#allocation2 + $0x42] sm:$0xff]
      %v2839 = vld [vmem:[#allocation2 + $0x4a] sm:$0xff]
      %v2840 = vld [vmem:[%s7 + $0x10] sm:$0x3]
      %v2842 = vsel %vm775, %v2831, 0
      %v2845 = vsel %vm775, %v2832, 0
      %v2848 = vsel %vm775, %v2833, 0
      %v2851 = vsel %vm775, %v2834, 0
      %v2854 = vsel %vm775, %v2835, 0
      %v2857 = vsel %vm775, %v2836, 0
      %v2860 = vsel %vm775, %v2837, 0
      %v2863 = vsel %vm775, %v2838, 0
      %v2866 = vsel %vm775, %v2839, 0
      %v2869 = vsel %vm1623, %v2840, 0
      %2871 = vmatprep.subr.mxu0 0.0
      %2872 = vmatpush1.msra.mxu0 0.0
      %2873 = vmatprep.subr.mxu0 0.0
      %2874 = vmatpush1.msra.mxu0 0.0
      %2875 = vmatprep.subr.mxu0 0.0
      %2876 = vmatpush1.msra.mxu0 0.0
      %2877 = vmatprep.subr.mxu0 0.0
      %2878 = vmatpush1.msra.mxu0 0.0
      %2879 = vmatprep.subr.mxu0 0.0
      %2880 = vmatpush1.msra.mxu0 0.0
      %2881 = vmatprep.subr.mxu0 0.0
      %2882 = vmatpush1.msra.mxu0 0.0
      %2883 = vmatprep.subr.mxu0 0.0
      %2884 = vmatpush1.msra.mxu0 0.0
      %2885 = vmatprep.subr.mxu0 0.0
      %2886 = vmatpush1.msra.mxu0 0.0
      %2887 = vmatprep.subr.mxu0 0.0
      %2888 = vmatpush1.msra.mxu0 0.0
      %2889 = vmatprep.subr.mxu0 0.0
      %2890 = vmatpush1.msra.mxu0 0.0
      %2891 = vmatprep.subr.mxu0 0.0
      %2892 = vmatpush1.msra.mxu0 0.0
      %2893 = vmatprep.subr.mxu0 0.0
      %2894 = vmatpush1.msra.mxu0 0.0
      %2895 = vmatprep.subr.mxu0 0.0
      %2896 = vmatpush1.msra.mxu0 0.0
      %2897 = vmatprep.subr.mxu0 0.0
      %2898 = vmatpush1.msra.mxu0 0.0
      %2899 = vmatprep.subr.mxu0 0.0
      %2900 = vmatpush1.msra.mxu0 0.0
      %2901 = vmatprep.subr.mxu0 0.0
      %2902 = vmatpush1.msra.mxu0 %v2869
      %2903 = vmatprep.subr.mxu0 0.0
      %2904 = vmatpush2.msra.mxu0 0.0
      %2905 = vmatprep.subr.mxu0 0.0
      %2906 = vmatpush2.msra.mxu0 0.0
      %2907 = vmatprep.subr.mxu0 0.0
      %2908 = vmatpush2.msra.mxu0 0.0
      %2909 = vmatprep.subr.mxu0 0.0
      %2910 = vmatpush2.msra.mxu0 0.0
      %2911 = vmatprep.subr.mxu0 0.0
      %2912 = vmatpush2.msra.mxu0 0.0
      %2913 = vmatprep.subr.mxu0 0.0
      %2914 = vmatpush2.msra.mxu0 0.0
      %2915 = vmatprep.subr.mxu0 0.0
      %2916 = vmatpush2.msra.mxu0 0.0
      %2917 = vmatprep.subr.mxu0 0.0
      %2918 = vmatpush2.msra.mxu0 0.0
      %2919 = vmatprep.subr.mxu0 0.0
      %2920 = vmatpush2.msra.mxu0 0.0
      %2921 = vmatprep.subr.mxu0 0.0
      %2922 = vmatpush2.msra.mxu0 0.0
      %2923 = vmatprep.subr.mxu0 0.0
      %2924 = vmatpush2.msra.mxu0 0.0
      %2925 = vmatprep.subr.mxu0 0.0
      %2926 = vmatpush2.msra.mxu0 0.0
      %2927 = vmatprep.subr.mxu0 0.0
      %2928 = vmatpush2.msra.mxu0 0.0
      %2929 = vmatprep.subr.mxu0 0.0
      %2930 = vmatpush2.msra.mxu0 0.0
      %2931 = vmatprep.subr.mxu0 0.0
      %2932 = vmatpush2.msra.mxu0 0.0
      %2933 = vmatprep.subr.mxu0 0.0
      %2934 = vmatpush2.msra.mxu0 0.0
      %2935 = vmatprep.mubr.f32.mxu0 0.0
      %2936 = vmatmul.mubr.f32.gmra.mxu0 %v2842
      %v2937 = vpop.f32.mrf.mxu0
      %v2938 = vadd.f32 0.0, %v2937
      %v2939 = vpop.f32.mrf.mxu0
      %2940 = vmatprep.mubr.f32.mxu0 0.0
      %2941 = vmatmul.mubr.f32.gmra.mxu0 %v2845
      %v2942 = vpop.f32.mrf.mxu0
      %v2943 = vadd.f32 0.0, %v2942
      %v2944 = vpop.f32.mrf.mxu0
      %2945 = vmatprep.mubr.f32.mxu0 0.0
      %2946 = vmatmul.mubr.f32.gmra.mxu0 %v2848
      %v2947 = vpop.f32.mrf.mxu0
      %v2948 = vadd.f32 0.0, %v2947
      %v2949 = vpop.f32.mrf.mxu0
      %2950 = vmatprep.mubr.f32.mxu0 0.0
      %2951 = vmatmul.mubr.f32.gmra.mxu0 %v2851
      %v2952 = vpop.f32.mrf.mxu0
      %v2953 = vadd.f32 0.0, %v2952
      %v2954 = vpop.f32.mrf.mxu0
      %2955 = vmatprep.mubr.f32.mxu0 0.0
      %2956 = vmatmul.mubr.f32.gmra.mxu0 %v2854
      %v2957 = vpop.f32.mrf.mxu0
      %v2958 = vadd.f32 0.0, %v2957
      %v2959 = vpop.f32.mrf.mxu0
      %2960 = vmatprep.mubr.f32.mxu0 0.0
      %2961 = vmatmul.mubr.f32.gmra.mxu0 %v2857
      %v2962 = vpop.f32.mrf.mxu0
      %v2963 = vadd.f32 0.0, %v2962
      %v2964 = vpop.f32.mrf.mxu0
      %2965 = vmatprep.mubr.f32.mxu0 0.0
      %2966 = vmatmul.mubr.f32.gmra.mxu0 %v2860
      %v2967 = vpop.f32.mrf.mxu0
      %v2968 = vadd.f32 0.0, %v2967
      %v2969 = vpop.f32.mrf.mxu0
      %2970 = vmatprep.mubr.f32.mxu0 0.0
      %2971 = vmatmul.mubr.f32.gmra.mxu0 %v2863
      %v2972 = vpop.f32.mrf.mxu0
      %v2973 = vadd.f32 0.0, %v2972
      %v2974 = vpop.f32.mrf.mxu0
      %2975 = vmatprep.mubr.f32.mxu0 0.0
      %2976 = vmatmul.mubr.f32.gmra.mxu0 %v2866
      %v2977 = vpop.f32.mrf.mxu0
      %v2978 = vadd.f32 0.0, %v2977
      %v2979 = vpop.f32.mrf.mxu0
      %2980 = vdwg.mxu0
      %v2981 = vadd.f32 %v2822, %v2938
      %v2982 = vadd.f32 %v2823, %v2943
      %v2983 = vadd.f32 %v2824, %v2948
      %v2984 = vadd.f32 %v2825, %v2953
      %v2985 = vadd.f32 %v2826, %v2958
      %v2986 = vadd.f32 %v2827, %v2963
      %v2987 = vadd.f32 %v2828, %v2968
      %v2988 = vadd.f32 %v2829, %v2973
      %v2989 = vadd.f32 %v2830, %v2978
      %v2990 = vld [vmem:[%s8] sm:$0x1]
      %v2992 = vlaneseq
      %v2993 = vshrl.u32 %v2992, 7
      %v2994 = vsub.s32 0, %v2993
      %v2995 = vrot.slane %v2990, %v2994
      %v2997 = vadd.f32 %v2981, %v2995
      %v2998 = vadd.f32 %v2982, %v2995
      %v2999 = vadd.f32 %v2983, %v2995
      %v3000 = vadd.f32 %v2984, %v2995
      %v3001 = vadd.f32 %v2985, %v2995
      %v3002 = vadd.f32 %v2986, %v2995
      %v3003 = vadd.f32 %v2987, %v2995
      %v3004 = vadd.f32 %v2988, %v2995
      %v3005 = vadd.f32 %v2989, %v2995
      %v3006 = vmax.f32 %v2997, 0.0
      %v3007 = vmax.f32 %v2998, 0.0
      %v3008 = vmax.f32 %v2999, 0.0
      %v3009 = vmax.f32 %v3000, 0.0
      %v3010 = vmax.f32 %v3001, 0.0
      %v3011 = vmax.f32 %v3002, 0.0
      %v3012 = vmax.f32 %v3003, 0.0
      %v3013 = vmax.f32 %v3004, 0.0
      %v3014 = vmax.f32 %v3005, 0.0
      %v3015 = vld [vmem:[%s9] sm:$0x3]
      %v3016 = vld [vmem:[%s10] sm:$0x1]
      %v3018 = vlaneseq
      %v3019 = vshrl.u32 %v3018, 7
      %v3020 = vsub.s32 0, %v3019
      %v3021 = vrot.slane %v3016, %v3020
      %v3024 = vsel %vm775, %v3006, 0
      %v3027 = vsel %vm775, %v3007, 0
      %v3030 = vsel %vm775, %v3008, 0
      %v3033 = vsel %vm775, %v3009, 0
      %v3036 = vsel %vm775, %v3010, 0
      %v3039 = vsel %vm775, %v3011, 0
      %v3042 = vsel %vm775, %v3012, 0
      %v3045 = vsel %vm775, %v3013, 0
      %v3048 = vsel %vm775, %v3014, 0
      %v3051 = vsel %vm1623, %v3015, 0
      %3053 = vmatprep.subr.mxu0 0.0
      %3054 = vmatpush1.msra.mxu0 0.0
      %3055 = vmatprep.subr.mxu0 0.0
      %3056 = vmatpush1.msra.mxu0 0.0
      %3057 = vmatprep.subr.mxu0 0.0
      %3058 = vmatpush1.msra.mxu0 0.0
      %3059 = vmatprep.subr.mxu0 0.0
      %3060 = vmatpush1.msra.mxu0 0.0
      %3061 = vmatprep.subr.mxu0 0.0
      %3062 = vmatpush1.msra.mxu0 0.0
      %3063 = vmatprep.subr.mxu0 0.0
      %3064 = vmatpush1.msra.mxu0 0.0
      %3065 = vmatprep.subr.mxu0 0.0
      %3066 = vmatpush1.msra.mxu0 0.0
      %3067 = vmatprep.subr.mxu0 0.0
      %3068 = vmatpush1.msra.mxu0 0.0
      %3069 = vmatprep.subr.mxu0 0.0
      %3070 = vmatpush1.msra.mxu0 0.0
      %3071 = vmatprep.subr.mxu0 0.0
      %3072 = vmatpush1.msra.mxu0 0.0
      %3073 = vmatprep.subr.mxu0 0.0
      %3074 = vmatpush1.msra.mxu0 0.0
      %3075 = vmatprep.subr.mxu0 0.0
      %3076 = vmatpush1.msra.mxu0 0.0
      %3077 = vmatprep.subr.mxu0 0.0
      %3078 = vmatpush1.msra.mxu0 0.0
      %3079 = vmatprep.subr.mxu0 0.0
      %3080 = vmatpush1.msra.mxu0 0.0
      %3081 = vmatprep.subr.mxu0 0.0
      %3082 = vmatpush1.msra.mxu0 0.0
      %3083 = vmatprep.subr.mxu0 0.0
      %3084 = vmatpush1.msra.mxu0 %v3051
      %3085 = vmatprep.subr.mxu0 0.0
      %3086 = vmatpush2.msra.mxu0 0.0
      %3087 = vmatprep.subr.mxu0 0.0
      %3088 = vmatpush2.msra.mxu0 0.0
      %3089 = vmatprep.subr.mxu0 0.0
      %3090 = vmatpush2.msra.mxu0 0.0
      %3091 = vmatprep.subr.mxu0 0.0
      %3092 = vmatpush2.msra.mxu0 0.0
      %3093 = vmatprep.subr.mxu0 0.0
      %3094 = vmatpush2.msra.mxu0 0.0
      %3095 = vmatprep.subr.mxu0 0.0
      %3096 = vmatpush2.msra.mxu0 0.0
      %3097 = vmatprep.subr.mxu0 0.0
      %3098 = vmatpush2.msra.mxu0 0.0
      %3099 = vmatprep.subr.mxu0 0.0
      %3100 = vmatpush2.msra.mxu0 0.0
      %3101 = vmatprep.subr.mxu0 0.0
      %3102 = vmatpush2.msra.mxu0 0.0
      %3103 = vmatprep.subr.mxu0 0.0
      %3104 = vmatpush2.msra.mxu0 0.0
      %3105 = vmatprep.subr.mxu0 0.0
      %3106 = vmatpush2.msra.mxu0 0.0
      %3107 = vmatprep.subr.mxu0 0.0
      %3108 = vmatpush2.msra.mxu0 0.0
      %3109 = vmatprep.subr.mxu0 0.0
      %3110 = vmatpush2.msra.mxu0 0.0
      %3111 = vmatprep.subr.mxu0 0.0
      %3112 = vmatpush2.msra.mxu0 0.0
      %3113 = vmatprep.subr.mxu0 0.0
      %3114 = vmatpush2.msra.mxu0 0.0
      %3115 = vmatprep.subr.mxu0 0.0
      %3116 = vmatpush2.msra.mxu0 0.0
      %3117 = vmatprep.mubr.f32.mxu0 0.0
      %3118 = vmatmul.mubr.f32.gmra.mxu0 %v3024
      %v3119 = vpop.f32.mrf.mxu0
      %v3120 = vadd.f32 %v3021, %v3119
      %v3121 = vpop.f32.mrf.mxu0
      %3122 = vmatprep.mubr.f32.mxu0 0.0
      %3123 = vmatmul.mubr.f32.gmra.mxu0 %v3027
      %v3124 = vpop.f32.mrf.mxu0
      %v3125 = vadd.f32 %v3021, %v3124
      %v3126 = vpop.f32.mrf.mxu0
      %3127 = vmatprep.mubr.f32.mxu0 0.0
      %3128 = vmatmul.mubr.f32.gmra.mxu0 %v3030
      %v3129 = vpop.f32.mrf.mxu0
      %v3130 = vadd.f32 %v3021, %v3129
      %v3131 = vpop.f32.mrf.mxu0
      %3132 = vmatprep.mubr.f32.mxu0 0.0
      %3133 = vmatmul.mubr.f32.gmra.mxu0 %v3033
      %v3134 = vpop.f32.mrf.mxu0
      %v3135 = vadd.f32 %v3021, %v3134
      %v3136 = vpop.f32.mrf.mxu0
      %3137 = vmatprep.mubr.f32.mxu0 0.0
      %3138 = vmatmul.mubr.f32.gmra.mxu0 %v3036
      %v3139 = vpop.f32.mrf.mxu0
      %v3140 = vadd.f32 %v3021, %v3139
      %v3141 = vpop.f32.mrf.mxu0
      %3142 = vmatprep.mubr.f32.mxu0 0.0
      %3143 = vmatmul.mubr.f32.gmra.mxu0 %v3039
      %v3144 = vpop.f32.mrf.mxu0
      %v3145 = vadd.f32 %v3021, %v3144
      %v3146 = vpop.f32.mrf.mxu0
      %3147 = vmatprep.mubr.f32.mxu0 0.0
      %3148 = vmatmul.mubr.f32.gmra.mxu0 %v3042
      %v3149 = vpop.f32.mrf.mxu0
      %v3150 = vadd.f32 %v3021, %v3149
      %v3151 = vpop.f32.mrf.mxu0
      %3152 = vmatprep.mubr.f32.mxu0 0.0
      %3153 = vmatmul.mubr.f32.gmra.mxu0 %v3045
      %v3154 = vpop.f32.mrf.mxu0
      %v3155 = vadd.f32 %v3021, %v3154
      %v3156 = vpop.f32.mrf.mxu0
      %3157 = vmatprep.mubr.f32.mxu0 0.0
      %3158 = vmatmul.mubr.f32.gmra.mxu0 %v3048
      %v3159 = vpop.f32.mrf.mxu0
      %v3160 = vadd.f32 %v3021, %v3159
      %v3161 = vpop.f32.mrf.mxu0
      %3162 = vdwg.mxu0
      %v3163 = vmax.f32 %v3120, 0.0
      %v3164 = vmax.f32 %v3125, 0.0
      %v3165 = vmax.f32 %v3130, 0.0
      %v3166 = vmax.f32 %v3135, 0.0
      %v3167 = vmax.f32 %v3140, 0.0
      %v3168 = vmax.f32 %v3145, 0.0
      %v3169 = vmax.f32 %v3150, 0.0
      %v3170 = vmax.f32 %v3155, 0.0
      %v3171 = vmax.f32 %v3160, 0.0
      %v3172 = vld [vmem:[%s502] sm:$0xff]
      %v3173 = vld [vmem:[%s502 + $0x8] sm:$0xff]
      %v3174 = vld [vmem:[%s502 + $0x10] sm:$0xff]
      %v3175 = vld [vmem:[%s502 + $0x18] sm:$0xff]
      %v3176 = vld [vmem:[%s502 + $0x20] sm:$0xff]
      %v3177 = vld [vmem:[%s502 + $0x28] sm:$0xff]
      %v3178 = vld [vmem:[%s502 + $0x30] sm:$0xff]
      %v3179 = vld [vmem:[%s502 + $0x38] sm:$0xff]
      %v3180 = vld [vmem:[%s502 + $0x40] sm:$0xff]
      %v3181 = vld [vmem:[%s11] sm:$0xf]
      %v3182 = vld [vmem:[%s12] sm:$0x1]
      %v3184 = vlaneseq
      %v3185 = vshrl.u32 %v3184, 7
      %v3186 = vsub.s32 0, %v3185
      %v3187 = vrot.slane %v3182, %v3186
      %v3190 = vsel %vm529, %v3172, 0
      %v3193 = vsel %vm529, %v3173, 0
      %v3196 = vsel %vm529, %v3174, 0
      %v3199 = vsel %vm529, %v3175, 0
      %v3202 = vsel %vm529, %v3176, 0
      %v3205 = vsel %vm529, %v3177, 0
      %v3208 = vsel %vm529, %v3178, 0
      %v3211 = vsel %vm529, %v3179, 0
      %v3214 = vsel %vm529, %v3180, 0
      %v3217 = vsel %vm563, %v3181, 0
      %3219 = vmatprep.subr.mxu0 0.0
      %3220 = vmatpush1.msra.mxu0 0.0
      %3221 = vmatprep.subr.mxu0 0.0
      %3222 = vmatpush1.msra.mxu0 0.0
      %3223 = vmatprep.subr.mxu0 0.0
      %3224 = vmatpush1.msra.mxu0 0.0
      %3225 = vmatprep.subr.mxu0 0.0
      %3226 = vmatpush1.msra.mxu0 0.0
      %3227 = vmatprep.subr.mxu0 0.0
      %3228 = vmatpush1.msra.mxu0 0.0
      %3229 = vmatprep.subr.mxu0 0.0
      %3230 = vmatpush1.msra.mxu0 0.0
      %3231 = vmatprep.subr.mxu0 0.0
      %3232 = vmatpush1.msra.mxu0 0.0
      %3233 = vmatprep.subr.mxu0 0.0
      %3234 = vmatpush1.msra.mxu0 0.0
      %3235 = vmatprep.subr.mxu0 0.0
      %3236 = vmatpush1.msra.mxu0 0.0
      %3237 = vmatprep.subr.mxu0 0.0
      %3238 = vmatpush1.msra.mxu0 0.0
      %3239 = vmatprep.subr.mxu0 0.0
      %3240 = vmatpush1.msra.mxu0 0.0
      %3241 = vmatprep.subr.mxu0 0.0
      %3242 = vmatpush1.msra.mxu0 0.0
      %3243 = vmatprep.subr.mxu0 0.0
      %3244 = vmatpush1.msra.mxu0 0.0
      %3245 = vmatprep.subr.mxu0 0.0
      %3246 = vmatpush1.msra.mxu0 0.0
      %3247 = vmatprep.subr.mxu0 0.0
      %3248 = vmatpush1.msra.mxu0 0.0
      %3249 = vmatprep.subr.mxu0 0.0
      %3250 = vmatpush1.msra.mxu0 %v3217
      %3251 = vmatprep.subr.mxu0 0.0
      %3252 = vmatpush2.msra.mxu0 0.0
      %3253 = vmatprep.subr.mxu0 0.0
      %3254 = vmatpush2.msra.mxu0 0.0
      %3255 = vmatprep.subr.mxu0 0.0
      %3256 = vmatpush2.msra.mxu0 0.0
      %3257 = vmatprep.subr.mxu0 0.0
      %3258 = vmatpush2.msra.mxu0 0.0
      %3259 = vmatprep.subr.mxu0 0.0
      %3260 = vmatpush2.msra.mxu0 0.0
      %3261 = vmatprep.subr.mxu0 0.0
      %3262 = vmatpush2.msra.mxu0 0.0
      %3263 = vmatprep.subr.mxu0 0.0
      %3264 = vmatpush2.msra.mxu0 0.0
      %3265 = vmatprep.subr.mxu0 0.0
      %3266 = vmatpush2.msra.mxu0 0.0
      %3267 = vmatprep.subr.mxu0 0.0
      %3268 = vmatpush2.msra.mxu0 0.0
      %3269 = vmatprep.subr.mxu0 0.0
      %3270 = vmatpush2.msra.mxu0 0.0
      %3271 = vmatprep.subr.mxu0 0.0
      %3272 = vmatpush2.msra.mxu0 0.0
      %3273 = vmatprep.subr.mxu0 0.0
      %3274 = vmatpush2.msra.mxu0 0.0
      %3275 = vmatprep.subr.mxu0 0.0
      %3276 = vmatpush2.msra.mxu0 0.0
      %3277 = vmatprep.subr.mxu0 0.0
      %3278 = vmatpush2.msra.mxu0 0.0
      %3279 = vmatprep.subr.mxu0 0.0
      %3280 = vmatpush2.msra.mxu0 0.0
      %3281 = vmatprep.subr.mxu0 0.0
      %3282 = vmatpush2.msra.mxu0 0.0
      %3283 = vmatprep.mubr.f32.mxu0 0.0
      %3284 = vmatmul.mubr.f32.gmra.mxu0 %v3190
      %v3285 = vpop.f32.mrf.mxu0
      %v3286 = vadd.f32 %v3187, %v3285
      %v3287 = vpop.f32.mrf.mxu0
      %3288 = vmatprep.mubr.f32.mxu0 0.0
      %3289 = vmatmul.mubr.f32.gmra.mxu0 %v3193
      %v3290 = vpop.f32.mrf.mxu0
      %v3291 = vadd.f32 %v3187, %v3290
      %v3292 = vpop.f32.mrf.mxu0
      %3293 = vmatprep.mubr.f32.mxu0 0.0
      %3294 = vmatmul.mubr.f32.gmra.mxu0 %v3196
      %v3295 = vpop.f32.mrf.mxu0
      %v3296 = vadd.f32 %v3187, %v3295
      %v3297 = vpop.f32.mrf.mxu0
      %3298 = vmatprep.mubr.f32.mxu0 0.0
      %3299 = vmatmul.mubr.f32.gmra.mxu0 %v3199
      %v3300 = vpop.f32.mrf.mxu0
      %v3301 = vadd.f32 %v3187, %v3300
      %v3302 = vpop.f32.mrf.mxu0
      %3303 = vmatprep.mubr.f32.mxu0 0.0
      %3304 = vmatmul.mubr.f32.gmra.mxu0 %v3202
      %v3305 = vpop.f32.mrf.mxu0
      %v3306 = vadd.f32 %v3187, %v3305
      %v3307 = vpop.f32.mrf.mxu0
      %3308 = vmatprep.mubr.f32.mxu0 0.0
      %3309 = vmatmul.mubr.f32.gmra.mxu0 %v3205
      %v3310 = vpop.f32.mrf.mxu0
      %v3311 = vadd.f32 %v3187, %v3310
      %v3312 = vpop.f32.mrf.mxu0
      %3313 = vmatprep.mubr.f32.mxu0 0.0
      %3314 = vmatmul.mubr.f32.gmra.mxu0 %v3208
      %v3315 = vpop.f32.mrf.mxu0
      %v3316 = vadd.f32 %v3187, %v3315
      %v3317 = vpop.f32.mrf.mxu0
      %3318 = vmatprep.mubr.f32.mxu0 0.0
      %3319 = vmatmul.mubr.f32.gmra.mxu0 %v3211
      %v3320 = vpop.f32.mrf.mxu0
      %v3321 = vadd.f32 %v3187, %v3320
      %v3322 = vpop.f32.mrf.mxu0
      %3323 = vmatprep.mubr.f32.mxu0 0.0
      %3324 = vmatmul.mubr.f32.gmra.mxu0 %v3214
      %v3325 = vpop.f32.mrf.mxu0
      %v3326 = vadd.f32 %v3187, %v3325
      %v3327 = vpop.f32.mrf.mxu0
      %3328 = vdwg.mxu0
      %v3329 = vadd.f32 %v3163, %v3286
      %v3330 = vadd.f32 %v3164, %v3291
      %v3331 = vadd.f32 %v3165, %v3296
      %v3332 = vadd.f32 %v3166, %v3301
      %v3333 = vadd.f32 %v3167, %v3306
      %v3334 = vadd.f32 %v3168, %v3311
      %v3335 = vadd.f32 %v3169, %v3316
      %v3336 = vadd.f32 %v3170, %v3321
      %v3337 = vadd.f32 %v3171, %v3326
      %v3338 = vmax.f32 %v3329, 0.0
      %v3339 = vmax.f32 %v3330, 0.0
      %v3340 = vmax.f32 %v3331, 0.0
      %v3341 = vmax.f32 %v3332, 0.0
      %v3342 = vmax.f32 %v3333, 0.0
      %v3343 = vmax.f32 %v3334, 0.0
      %v3344 = vmax.f32 %v3335, 0.0
      %v3345 = vmax.f32 %v3336, 0.0
      %v3346 = vmax.f32 %v3337, 0.0
      %vm3347 = vcmask 64512
      %3348 = vst.msk [vmem:[%s508] sm:$0xff] %vm3347, %v3338
      %3349 = vst.msk [vmem:[%s508 + $0x8] sm:$0xff] %vm3347, %v3339
      %3350 = vst.msk [vmem:[%s508 + $0x10] sm:$0xff] %vm3347, %v3340
      %3351 = vst.msk [vmem:[%s508 + $0x18] sm:$0xff] %vm3347, %v3341
      %3352 = vst.msk [vmem:[%s508 + $0x20] sm:$0xff] %vm3347, %v3342
      %3353 = vst.msk [vmem:[%s508 + $0x28] sm:$0xff] %vm3347, %v3343
      %3354 = vst.msk [vmem:[%s508 + $0x30] sm:$0xff] %vm3347, %v3344
      %3355 = vst.msk [vmem:[%s508 + $0x38] sm:$0xff] %vm3347, %v3345
      %3356 = vst.msk [vmem:[%s508 + $0x40] sm:$0xff] %vm3347, %v3346
      %s3357 = smul.u32 9, %s24
      %p3358 = scmp.lt.s32.totalorder %s3357, 17
      %s3359 = scalar_select %p3358, %s3357, 17
      %s3360 = smul.addr %s3359, 8
      %s3361 = scalar_lea.vmem %s13, %s3360
      // Predicated region
      $region73: #{tpu_custom_call.1} parent=71 // pred_check
        %p3362 = pneg %p335
      $region74: #{tpu_custom_call.1} parent=71 // pred_check_branch
        %3364 = sbr.rel (%p3362) target = $region76
      $region75: #{tpu_custom_call.1} parent=71 // pred_region
        %s3365 = smul.u32 9, %s24
      $region76: #{tpu_custom_call.1} parent=71 // pred_fallthru
        _
    $region72: #{tpu_custom_call.1} parent=5 // pred_fallthru
      _
    %p3366 = scmp.le.s32.totalorder 2, %s19
    // Predicated region
    $region77: #{tpu_custom_call.1} parent=5 // pred_check
      %p3367 = pneg %p3366
    $region78: #{tpu_custom_call.1} parent=5 // pred_check_branch
      %3369 = sbr.rel (%p3367) target = $region80
    $region79: #{tpu_custom_call.1} parent=5 // pred_region
      %s3370 = ssub.s32 %s19, 2
      // Predicated region
      $region81: #{tpu_custom_call.1} parent=79 // pred_check
        %p3371 = pneg %p341
      $region82: #{tpu_custom_call.1} parent=79 // pred_check_branch
        %3373 = sbr.rel (%p3371) target = $region84
      $region83: #{tpu_custom_call.1} parent=79 // pred_region
        %s3374 = smul.u32 9, %s25
        %p3375 = scmp.lt.s32.totalorder %s3374, 17
        %s3376 = scalar_select %p3375, %s3374, 17
        %s3377 = smul.addr %s3376, 8
        %s3378 = scalar_lea.vmem %s13, %s3377
      $region84: #{tpu_custom_call.1} parent=79 // pred_fallthru
        _
    $region80: #{tpu_custom_call.1} parent=5 // pred_fallthru
      _
  $region6: #{tpu_custom_call.1} parent=0 // loop_footer
    %s23 = sadd.s32 1, %s19
  $region7: #{tpu_custom_call.1} parent=0 // loop_footer_branch
    %18 = sbr.rel target = $region3
  $region8: #{tpu_custom_call.1} parent=0 // loop_exit
    _

</llo_original>
